<compile_context>
chip_gen: v7x
topology: tpu7x:2x2x1
jax: 0.10.0
libtpu: 0.0.40
codegen_flags: <defaults>
</compile_context>

<pallas_src>
import functools

import jax
import jax.numpy as jnp
import numpy as np
from jax.experimental import pallas as pl
from jax.experimental.pallas import tpu as pltpu

# Synthetic small stand-in for the repo-level constant (128 in the original code).
out_channel_mv = 8


# ----------------------------------------------------------------------------------
# Fused kernel: conv1(3x3,s1,p1)+lrelu -> conv2(5x5,s2,p2)+lrelu -> conv3(5x5,s2,p2)
# ----------------------------------------------------------------------------------
def _fused_kernel(x_ref, a1_ref, b1_ref, a2_ref, b2_ref, a3_ref, b3_ref,
                  o_ref, s2_ref, s3_ref, *, C, H, W, neg_slope):
    """One batch element per grid step.

    x_ref  : (1, 4, H//4+1, W*C)   bf16.  H-padded input rows (padded row r holds
                                   input row r-1; rows 0 and H+1 are the conv1 zero
                                   halo), phase-split: padded row r -> x_ref[0, r%4, r//4].
    aX_ref : (K, Win*C, Wout*C)    bf16 Toeplitz-over-W weight slabs (one per kh),
                                   W zero-padding folded in -> no pad columns.
    bX_ref : (1, Wout*C)           f32 bias tiled over output width.
    o_ref  : (1, H//4, (W//4)*C)   f32 conv3 output rows (row-flattened NHWC).
    s2_ref : (4, H//4+1, W*C)      f32 scratch, conv1 out = conv2 in; padded row r
                                   (H halo only) lives at [r%4, r//4].
    s3_ref : (2, H//4+2, (W//2)*C) f32 scratch, conv2 out = conv3 in; padded row r
                                   lives at [r%2, r//2].
    """
    H4 = H // 4
    WC = W * C
    W2C = (W // 2) * C
    f32 = jnp.float32
    bf16 = jnp.bfloat16

    # ---- zero ONLY the H-halo rows of the scratches (a handful of row stores,
    # not full-activation stores).  Correct for any grid order: the interiors are
    # always fully rewritten below before they are read. -------------------------
    for (q, i) in ((0, 0), (1, 0),
                   ((H + 2) % 4, (H + 2) // 4), ((H + 3) % 4, (H + 3) // 4)):
        s2_ref[q, i:i + 1, :] = jnp.zeros((1, WC), f32)
    for (q, i) in ((0, 0), (1, 0), (0, H4 + 1), (1, H4 + 1)):
        s3_ref[q, i:i + 1, :] = jnp.zeros((1, W2C), f32)

    # ---- layer 1: 3x3 stride 1, pad 1, LeakyReLU -------------------------------
    # Output row i1 = 4*m + c1 needs padded input rows r = i1 + kh, i.e. the block
    # x_ref[0, (c1+kh)%4, (c1+kh)//4 + m, :].  For each tap kh the SAME RHS slab is
    # reused by 4 consecutive dots (one per output phase c1); accumulation stays
    # a chain of adds into per-phase f32 accumulators.
    acc1 = [jnp.zeros((H4, WC), f32) for _ in range(4)]
    for kh in range(3):
        rhs = a1_ref[kh]                                     # (W*C, W*C) bf16
        for c1 in range(4):
            q, off = (c1 + kh) % 4, (c1 + kh) // 4
            acc1[c1] = acc1[c1] + jnp.dot(
                x_ref[0, q, off:off + H4, :], rhs, preferred_element_type=f32)
    # bias + LeakyReLU, scatter into conv2 scratch (output row i1 -> padded row i1+2).
    for c1 in range(4):
        y = acc1[c1] + b1_ref[...]
        y = jnp.where(y > 0, y, neg_slope * y)
        q, off = (c1 + 2) % 4, (c1 + 2) // 4
        s2_ref[q, off:off + H4, :] = y

    # ---- layer 2: 5x5 stride 2, pad 2, LeakyReLU --------------------------------
    # Output row i2 = 2*m + c2 needs padded rows r = 4*m + 2*c2 + kh.
    acc2 = [jnp.zeros((H4, W2C), f32) for _ in range(2)]
    for kh in range(5):
        rhs = a2_ref[kh]                                     # (W*C, (W//2)*C) bf16
        for c2 in range(2):
            q, off = (2 * c2 + kh) % 4, (2 * c2 + kh) // 4
            acc2[c2] = acc2[c2] + jnp.dot(
                s2_ref[q, off:off + H4, :].astype(bf16), rhs,
                preferred_element_type=f32)
    for c2 in range(2):
        y = acc2[c2] + b2_ref[...]
        y = jnp.where(y > 0, y, neg_slope * y)
        s3_ref[c2, 1:1 + H4, :] = y                          # row i2 -> padded row i2+2

    # ---- layer 3: 5x5 stride 2, pad 2 (no activation) ----------------------------
    # Output row i3 needs padded rows r = 2*i3 + kh -> s3[kh%2, kh//2 + i3].
    acc3 = jnp.zeros((H4, (W // 4) * C), f32)
    for kh in range(5):
        acc3 = acc3 + jnp.dot(
            s3_ref[kh % 2, kh // 2:kh // 2 + H4, :].astype(bf16), a3_ref[kh],
            preferred_element_type=f32)
    # TODO(synk): at production C=128 the output last dim is a multiple of 128 and
    # lane-dense; at the toy shape (64 lanes) this store is masked -- acceptable here.
    o_ref[0] = (acc3 + b3_ref[...]).astype(o_ref.dtype)


# ----------------------------------------------------------------------------------
# One-time parameter packing (hoisted out of the per-forward path).
# ----------------------------------------------------------------------------------
def _toeplitz_w(w, Win, stride, pad, dtype):
    """w: (Cout, Cin, K, K) -> (K, Win*Cin, Wout*Cout) Toeplitz-over-W slabs.

    The W-direction zero padding is folded in (pad columns dropped):
        A[kh, u*Cin + c, j*Cout + o] = w[o, c, kh, kw],  kw = u - (stride*j - pad),
    kept only for 0 <= kw < K and 0 <= u < Win (everything else hits zero padding).
    The kw taps, the Cin contraction and the W stride thus collapse into one dense
    matmul per kh with an exactly (Win*Cin)-deep contraction.
    """
    w = np.asarray(w, np.float32)
    Cout, Cin, K, _ = w.shape
    Wout = (Win + 2 * pad - K) // stride + 1
    wt = np.transpose(w, (2, 3, 1, 0))                       # (kh, kw, Cin, Cout)
    A = np.zeros((K, Win * Cin, Wout * Cout), np.float32)
    for j in range(Wout):
        for kw in range(K):
            u = stride * j - pad + kw
            if 0 <= u < Win:
                A[:, u * Cin:(u + 1) * Cin, j * Cout:(j + 1) * Cout] = wt[:, kw]
    return jnp.asarray(A, dtype)


def prepare_params(params, W, act_dtype=jnp.bfloat16):
    """Pack PyTorch-layout conv weights into kernel-ready slabs (done once)."""
    def tiled_bias(b, Wo):
        return jnp.asarray(np.tile(np.asarray(b, np.float32), Wo))[None, :]

    return dict(
        a1=_toeplitz_w(params["w1"], W, 1, 1, act_dtype),
        b1=tiled_bias(params["b1"], W),
        a2=_toeplitz_w(params["w2"], W, 2, 2, act_dtype),
        b2=tiled_bias(params["b2"], W // 2),
        a3=_toeplitz_w(params["w3"], W // 2, 2, 2, act_dtype),
        b3=tiled_bias(params["b3"], W // 4),
    )


# ----------------------------------------------------------------------------------
# Forward wrapper: NCHW in, NCHW out (matches ResPriorEncodeNet.forward).
# ----------------------------------------------------------------------------------
def res_prior_encode_net(x_nchw, prep, *, act_dtype=jnp.bfloat16):
    N, C, H, W = x_nchw.shape
    assert H % 4 == 0 and W % 4 == 0, "H and W must be multiples of 4"
    H4 = H // 4
    WC, W2C, W4C = W * C, (W // 2) * C, (W // 4) * C

    # Layout glue (one fused HBM copy under XLA): NCHW -> NHWC row-flatten -> pad H
    # by (1 top, 3 bottom; row H+1 is the conv1 zero halo, rows H+2/H+3 are
    # never-read filler so the phase reshape divides) -> split rows by
    # (padded row mod 4) so every in-kernel tap read is a static contiguous slice.
    # TODO(synk): make this phase-split layout the external contract (or fuse it
    # into the producer) to remove this HBM->HBM copy from the per-forward path.
    x = jnp.transpose(x_nchw, (0, 2, 3, 1)).reshape(N, H, WC)
    xp = jnp.pad(x, ((0, 0), (1, 3), (0, 0)))
    x4 = xp.reshape(N, H4 + 1, 4, WC).transpose(0, 2, 1, 3).astype(act_dtype)

    kernel = functools.partial(_fused_kernel, C=C, H=H, W=W, neg_slope=0.2)

    flops = 2 * N * H4 * (3 * 4 * WC * WC + 5 * 2 * WC * W2C + 5 * W2C * W4C)
    bytes_accessed = (
        x4.size * x4.dtype.itemsize
        + sum(prep[k].size * prep[k].dtype.itemsize
              for k in ("a1", "b1", "a2", "b2", "a3", "b3"))
        + N * H4 * W4C * 4)

    out = pl.pallas_call(
        kernel,
        out_shape=jax.ShapeDtypeStruct((N, H4, W4C), jnp.float32),
        grid=(N,),
        in_specs=[
            pl.BlockSpec((1, 4, H4 + 1, WC), lambda n: (n, 0, 0, 0)),
            pl.BlockSpec(prep["a1"].shape, lambda n: (0, 0, 0)),
            pl.BlockSpec(prep["b1"].shape, lambda n: (0, 0)),
            pl.BlockSpec(prep["a2"].shape, lambda n: (0, 0, 0)),
            pl.BlockSpec(prep["b2"].shape, lambda n: (0, 0)),
            pl.BlockSpec(prep["a3"].shape, lambda n: (0, 0, 0)),
            pl.BlockSpec(prep["b3"].shape, lambda n: (0, 0)),
        ],
        out_specs=pl.BlockSpec((1, H4, W4C), lambda n: (n, 0, 0)),
        scratch_shapes=[
            pltpu.VMEM((4, H4 + 1, WC), jnp.float32),    # conv1 out / conv2 in (+H halo)
            pltpu.VMEM((2, H4 + 2, W2C), jnp.float32),   # conv2 out / conv3 in (+H halo)
        ],
        compiler_params=pltpu.CompilerParams(
            dimension_semantics=("parallel",),
            vmem_limit_bytes=32 * 1024 * 1024,
        ),
        cost_estimate=pl.CostEstimate(
            flops=int(flops), transcendentals=0,
            bytes_accessed=int(bytes_accessed)),
    )(x4, prep["a1"], prep["b1"], prep["a2"], prep["b2"], prep["a3"], prep["b3"])

    # (N, H/4, (W/4)*C) -> NHWC -> NCHW
    out = out.reshape(N, H4, W // 4, C)
    return jnp.transpose(out, (0, 3, 1, 2))


# ----------------------------------------------------------------------------------
# Init + pure-JAX reference.
# ----------------------------------------------------------------------------------
def init_params(key, c):
    """Deterministic init mimicking PyTorch Conv2d defaults (U(-1/sqrt(fan_in), ..))."""
    def conv_init(k, cout, cin, ksz):
        kw_, kb_ = jax.random.split(k)
        fan_in = cin * ksz * ksz
        bound = 1.0 / float(np.sqrt(fan_in))
        w = jax.random.uniform(kw_, (cout, cin, ksz, ksz), jnp.float32, -bound, bound)
        b = jax.random.uniform(kb_, (cout,), jnp.float32, -bound, bound)
        return w, b

    k1, k2, k3 = jax.random.split(key, 3)
    w1, b1 = conv_init(k1, c, c, 3)
    w2, b2 = conv_init(k2, c, c, 5)
    w3, b3 = conv_init(k3, c, c, 5)
    return dict(w1=w1, b1=b1, w2=w2, b2=b2, w3=w3, b3=b3)


def _reference(x_nchw, params):
    """Pure-JAX reference (XLA convs, f32) for the correctness check."""
    def conv(x, w, b, stride, pad):
        y = jax.lax.conv_general_dilated(
            x, w, window_strides=(stride, stride), padding=[(pad, pad), (pad, pad)],
            dimension_numbers=("NCHW", "OIHW", "NCHW"))
        return y + b[None, :, None, None]

    lrelu = lambda v: jnp.where(v > 0, v, 0.2 * v)
    x = lrelu(conv(x_nchw, params["w1"], params["b1"], 1, 1))
    x = lrelu(conv(x, params["w2"], params["b2"], 2, 2))
    return conv(x, params["w3"], params["b3"], 2, 2)


if __name__ == "__main__":
    key = jax.random.PRNGKey(0)
    kx, kp = jax.random.split(key)

    B, C, H, W = 2, out_channel_mv, 32, 32
    x = jax.random.normal(kx, (B, C, H, W), jnp.float32)
    params = init_params(kp, C)

    prep = prepare_params(params, W)             # one-time weight packing (bf16 slabs)

    fwd = jax.jit(res_prior_encode_net)
    out = jax.block_until_ready(fwd(x, prep))
    assert out.shape == (B, C, H // 4, W // 4), out.shape

    ref = jax.block_until_ready(_reference(x, params))
    # bf16 MXU inputs with f32 accumulation/bias/activations -> looser tolerance vs f32 ref.
    np.testing.assert_allclose(np.asarray(out), np.asarray(ref), atol=2e-2, rtol=2e-2)

    print("KERNEL_OK")
</pallas_src>

<mosaic_0001>
module attributes {stable_mosaic.version = 11 : i64} {
  func.func @_fused_kernel(%arg0: i32, %arg1: memref<1x4x9x256xbf16, #tpu.memory_space<vmem>>, %arg2: memref<3x256x256xbf16, #tpu.memory_space<vmem>>, %arg3: memref<1x256xf32, #tpu.memory_space<vmem>>, %arg4: memref<5x256x128xbf16, #tpu.memory_space<vmem>>, %arg5: memref<1x128xf32, #tpu.memory_space<vmem>>, %arg6: memref<5x128x64xbf16, #tpu.memory_space<vmem>>, %arg7: memref<1x64xf32, #tpu.memory_space<vmem>>, %arg8: memref<1x8x64xf32, #tpu.memory_space<vmem>>, %arg9: memref<4x9x256xf32, #tpu.memory_space<vmem>>, %arg10: memref<2x10x128xf32, #tpu.memory_space<vmem>>) attributes {dimension_semantics = [#tpu.dimension_semantics<parallel>], iteration_bounds = array<i64: 2>, scalar_prefetch = 0 : i64, scratch_operands = 2 : i64, tpu.core_type = #tpu.core_type<tc>, window_params = [{transform_indices = @transform_0, window_bounds = array<i64: 1, 4, 9, 256>}, {pipeline_mode = #tpu.pipeline_mode<synchronous>, transform_indices = @transform_1, window_bounds = array<i64: 3, 256, 256>}, {pipeline_mode = #tpu.pipeline_mode<synchronous>, transform_indices = @transform_2, window_bounds = array<i64: 1, 256>}, {pipeline_mode = #tpu.pipeline_mode<synchronous>, transform_indices = @transform_3, window_bounds = array<i64: 5, 256, 128>}, {pipeline_mode = #tpu.pipeline_mode<synchronous>, transform_indices = @transform_4, window_bounds = array<i64: 1, 128>}, {pipeline_mode = #tpu.pipeline_mode<synchronous>, transform_indices = @transform_5, window_bounds = array<i64: 5, 128, 64>}, {pipeline_mode = #tpu.pipeline_mode<synchronous>, transform_indices = @transform_6, window_bounds = array<i64: 1, 64>}, {transform_indices = @transform_7, window_bounds = array<i64: 1, 8, 64>}]} {
    %cst = arith.constant 0.000000e+00 : f32
    %0 = vector.broadcast %cst : f32 to vector<1x256xf32>
    %c0 = arith.constant 0 : index
    %c0_0 = arith.constant 0 : index
    %c0_1 = arith.constant 0 : index
    %1 = vector.load %arg9[%c0, %c0_0, %c0_1] : memref<4x9x256xf32, #tpu.memory_space<vmem>>, vector<1x1x256xf32>
    %2 = vector.shape_cast %1 : vector<1x1x256xf32> to vector<1x256xf32>
    %3 = vector.shape_cast %0 : vector<1x256xf32> to vector<1x1x256xf32>
    tpu.vector_store %arg9[%c0, %c0_0, %c0_1], %3 {strides = array<i32>} : memref<4x9x256xf32, #tpu.memory_space<vmem>>, vector<1x1x256xf32>,
    %cst_2 = arith.constant 0.000000e+00 : f32
    %4 = vector.broadcast %cst_2 : f32 to vector<1x256xf32>
    %c1 = arith.constant 1 : index
    %c0_3 = arith.constant 0 : index
    %c0_4 = arith.constant 0 : index
    %5 = vector.load %arg9[%c1, %c0_3, %c0_4] : memref<4x9x256xf32, #tpu.memory_space<vmem>>, vector<1x1x256xf32>
    %6 = vector.shape_cast %5 : vector<1x1x256xf32> to vector<1x256xf32>
    %7 = vector.shape_cast %4 : vector<1x256xf32> to vector<1x1x256xf32>
    tpu.vector_store %arg9[%c1, %c0_3, %c0_4], %7 {strides = array<i32>} : memref<4x9x256xf32, #tpu.memory_space<vmem>>, vector<1x1x256xf32>,
    %cst_5 = arith.constant 0.000000e+00 : f32
    %8 = vector.broadcast %cst_5 : f32 to vector<1x256xf32>
    %c2 = arith.constant 2 : index
    %c8 = arith.constant 8 : index
    %c0_6 = arith.constant 0 : index
    %9 = vector.load %arg9[%c2, %c8, %c0_6] : memref<4x9x256xf32, #tpu.memory_space<vmem>>, vector<1x1x256xf32>
    %10 = vector.shape_cast %9 : vector<1x1x256xf32> to vector<1x256xf32>
    %11 = vector.shape_cast %8 : vector<1x256xf32> to vector<1x1x256xf32>
    tpu.vector_store %arg9[%c2, %c8, %c0_6], %11 {strides = array<i32>} : memref<4x9x256xf32, #tpu.memory_space<vmem>>, vector<1x1x256xf32>,
    %cst_7 = arith.constant 0.000000e+00 : f32
    %12 = vector.broadcast %cst_7 : f32 to vector<1x256xf32>
    %c3 = arith.constant 3 : index
    %c8_8 = arith.constant 8 : index
    %c0_9 = arith.constant 0 : index
    %13 = vector.load %arg9[%c3, %c8_8, %c0_9] : memref<4x9x256xf32, #tpu.memory_space<vmem>>, vector<1x1x256xf32>
    %14 = vector.shape_cast %13 : vector<1x1x256xf32> to vector<1x256xf32>
    %15 = vector.shape_cast %12 : vector<1x256xf32> to vector<1x1x256xf32>
    tpu.vector_store %arg9[%c3, %c8_8, %c0_9], %15 {strides = array<i32>} : memref<4x9x256xf32, #tpu.memory_space<vmem>>, vector<1x1x256xf32>,
    %cst_10 = arith.constant 0.000000e+00 : f32
    %16 = vector.broadcast %cst_10 : f32 to vector<1x128xf32>
    %c0_11 = arith.constant 0 : index
    %c0_12 = arith.constant 0 : index
    %c0_13 = arith.constant 0 : index
    %17 = vector.load %arg10[%c0_11, %c0_12, %c0_13] : memref<2x10x128xf32, #tpu.memory_space<vmem>>, vector<1x1x128xf32>
    %18 = vector.shape_cast %17 : vector<1x1x128xf32> to vector<1x128xf32>
    %19 = vector.shape_cast %16 : vector<1x128xf32> to vector<1x1x128xf32>
    tpu.vector_store %arg10[%c0_11, %c0_12, %c0_13], %19 {strides = array<i32>} : memref<2x10x128xf32, #tpu.memory_space<vmem>>, vector<1x1x128xf32>,
    %cst_14 = arith.constant 0.000000e+00 : f32
    %20 = vector.broadcast %cst_14 : f32 to vector<1x128xf32>
    %c1_15 = arith.constant 1 : index
    %c0_16 = arith.constant 0 : index
    %c0_17 = arith.constant 0 : index
    %21 = vector.load %arg10[%c1_15, %c0_16, %c0_17] : memref<2x10x128xf32, #tpu.memory_space<vmem>>, vector<1x1x128xf32>
    %22 = vector.shape_cast %21 : vector<1x1x128xf32> to vector<1x128xf32>
    %23 = vector.shape_cast %20 : vector<1x128xf32> to vector<1x1x128xf32>
    tpu.vector_store %arg10[%c1_15, %c0_16, %c0_17], %23 {strides = array<i32>} : memref<2x10x128xf32, #tpu.memory_space<vmem>>, vector<1x1x128xf32>,
    %cst_18 = arith.constant 0.000000e+00 : f32
    %24 = vector.broadcast %cst_18 : f32 to vector<1x128xf32>
    %c0_19 = arith.constant 0 : index
    %c9 = arith.constant 9 : index
    %c0_20 = arith.constant 0 : index
    %25 = vector.load %arg10[%c0_19, %c9, %c0_20] : memref<2x10x128xf32, #tpu.memory_space<vmem>>, vector<1x1x128xf32>
    %26 = vector.shape_cast %25 : vector<1x1x128xf32> to vector<1x128xf32>
    %27 = vector.shape_cast %24 : vector<1x128xf32> to vector<1x1x128xf32>
    tpu.vector_store %arg10[%c0_19, %c9, %c0_20], %27 {strides = array<i32>} : memref<2x10x128xf32, #tpu.memory_space<vmem>>, vector<1x1x128xf32>,
    %cst_21 = arith.constant 0.000000e+00 : f32
    %28 = vector.broadcast %cst_21 : f32 to vector<1x128xf32>
    %c1_22 = arith.constant 1 : index
    %c9_23 = arith.constant 9 : index
    %c0_24 = arith.constant 0 : index
    %29 = vector.load %arg10[%c1_22, %c9_23, %c0_24] : memref<2x10x128xf32, #tpu.memory_space<vmem>>, vector<1x1x128xf32>
    %30 = vector.shape_cast %29 : vector<1x1x128xf32> to vector<1x128xf32>
    %31 = vector.shape_cast %28 : vector<1x128xf32> to vector<1x1x128xf32>
    tpu.vector_store %arg10[%c1_22, %c9_23, %c0_24], %31 {strides = array<i32>} : memref<2x10x128xf32, #tpu.memory_space<vmem>>, vector<1x1x128xf32>,
    %cst_25 = arith.constant 0.000000e+00 : f32
    %32 = vector.broadcast %cst_25 : f32 to vector<8x256xf32>
    %cst_26 = arith.constant 0.000000e+00 : f32
    %33 = vector.broadcast %cst_26 : f32 to vector<8x256xf32>
    %cst_27 = arith.constant 0.000000e+00 : f32
    %34 = vector.broadcast %cst_27 : f32 to vector<8x256xf32>
    %cst_28 = arith.constant 0.000000e+00 : f32
    %35 = vector.broadcast %cst_28 : f32 to vector<8x256xf32>
    %c0_29 = arith.constant 0 : index
    %c0_30 = arith.constant 0 : index
    %c0_31 = arith.constant 0 : index
    %36 = vector.load %arg2[%c0_29, %c0_30, %c0_31] : memref<3x256x256xbf16, #tpu.memory_space<vmem>>, vector<1x256x256xbf16>
    %37 = vector.shape_cast %36 : vector<1x256x256xbf16> to vector<256x256xbf16>
    %c0_32 = arith.constant 0 : index
    %c0_33 = arith.constant 0 : index
    %c0_34 = arith.constant 0 : index
    %c0_35 = arith.constant 0 : index
    %38 = vector.load %arg1[%c0_32, %c0_33, %c0_34, %c0_35] : memref<1x4x9x256xbf16, #tpu.memory_space<vmem>>, vector<1x1x8x256xbf16>
    %39 = vector.shape_cast %38 : vector<1x1x8x256xbf16> to vector<8x256xbf16>
    %cst_36 = arith.constant dense<0.000000e+00> : vector<8x256xf32>
    %40 = tpu.matmul %39, %37, %cst_36 {dimension_numbers = #tpu.dot_dimension_numbers<[1], [0], [0], [1], [0, 0, 1, 1], [], []>} : vector<8x256xbf16>, vector<256x256xbf16>, vector<8x256xf32> -> vector<8x256xf32>
    %41 = arith.addf %32, %40 : vector<8x256xf32>
    %c0_37 = arith.constant 0 : index
    %c1_38 = arith.constant 1 : index
    %c0_39 = arith.constant 0 : index
    %c0_40 = arith.constant 0 : index
    %42 = vector.load %arg1[%c0_37, %c1_38, %c0_39, %c0_40] : memref<1x4x9x256xbf16, #tpu.memory_space<vmem>>, vector<1x1x8x256xbf16>
    %43 = vector.shape_cast %42 : vector<1x1x8x256xbf16> to vector<8x256xbf16>
    %cst_41 = arith.constant dense<0.000000e+00> : vector<8x256xf32>
    %44 = tpu.matmul %43, %37, %cst_41 {dimension_numbers = #tpu.dot_dimension_numbers<[1], [0], [0], [1], [0, 0, 1, 1], [], []>} : vector<8x256xbf16>, vector<256x256xbf16>, vector<8x256xf32> -> vector<8x256xf32>
    %45 = arith.addf %33, %44 : vector<8x256xf32>
    %c0_42 = arith.constant 0 : index
    %c2_43 = arith.constant 2 : index
    %c0_44 = arith.constant 0 : index
    %c0_45 = arith.constant 0 : index
    %46 = vector.load %arg1[%c0_42, %c2_43, %c0_44, %c0_45] : memref<1x4x9x256xbf16, #tpu.memory_space<vmem>>, vector<1x1x8x256xbf16>
    %47 = vector.shape_cast %46 : vector<1x1x8x256xbf16> to vector<8x256xbf16>
    %cst_46 = arith.constant dense<0.000000e+00> : vector<8x256xf32>
    %48 = tpu.matmul %47, %37, %cst_46 {dimension_numbers = #tpu.dot_dimension_numbers<[1], [0], [0], [1], [0, 0, 1, 1], [], []>} : vector<8x256xbf16>, vector<256x256xbf16>, vector<8x256xf32> -> vector<8x256xf32>
    %49 = arith.addf %34, %48 : vector<8x256xf32>
    %c0_47 = arith.constant 0 : index
    %c3_48 = arith.constant 3 : index
    %c0_49 = arith.constant 0 : index
    %c0_50 = arith.constant 0 : index
    %50 = vector.load %arg1[%c0_47, %c3_48, %c0_49, %c0_50] : memref<1x4x9x256xbf16, #tpu.memory_space<vmem>>, vector<1x1x8x256xbf16>
    %51 = vector.shape_cast %50 : vector<1x1x8x256xbf16> to vector<8x256xbf16>
    %cst_51 = arith.constant dense<0.000000e+00> : vector<8x256xf32>
    %52 = tpu.matmul %51, %37, %cst_51 {dimension_numbers = #tpu.dot_dimension_numbers<[1], [0], [0], [1], [0, 0, 1, 1], [], []>} : vector<8x256xbf16>, vector<256x256xbf16>, vector<8x256xf32> -> vector<8x256xf32>
    %53 = arith.addf %35, %52 : vector<8x256xf32>
    %c1_52 = arith.constant 1 : index
    %c0_53 = arith.constant 0 : index
    %c0_54 = arith.constant 0 : index
    %54 = vector.load %arg2[%c1_52, %c0_53, %c0_54] : memref<3x256x256xbf16, #tpu.memory_space<vmem>>, vector<1x256x256xbf16>
    %55 = vector.shape_cast %54 : vector<1x256x256xbf16> to vector<256x256xbf16>
    %c0_55 = arith.constant 0 : index
    %c1_56 = arith.constant 1 : index
    %c0_57 = arith.constant 0 : index
    %c0_58 = arith.constant 0 : index
    %56 = vector.load %arg1[%c0_55, %c1_56, %c0_57, %c0_58] : memref<1x4x9x256xbf16, #tpu.memory_space<vmem>>, vector<1x1x8x256xbf16>
    %57 = vector.shape_cast %56 : vector<1x1x8x256xbf16> to vector<8x256xbf16>
    %cst_59 = arith.constant dense<0.000000e+00> : vector<8x256xf32>
    %58 = tpu.matmul %57, %55, %cst_59 {dimension_numbers = #tpu.dot_dimension_numbers<[1], [0], [0], [1], [0, 0, 1, 1], [], []>} : vector<8x256xbf16>, vector<256x256xbf16>, vector<8x256xf32> -> vector<8x256xf32>
    %59 = arith.addf %41, %58 : vector<8x256xf32>
    %c0_60 = arith.constant 0 : index
    %c2_61 = arith.constant 2 : index
    %c0_62 = arith.constant 0 : index
    %c0_63 = arith.constant 0 : index
    %60 = vector.load %arg1[%c0_60, %c2_61, %c0_62, %c0_63] : memref<1x4x9x256xbf16, #tpu.memory_space<vmem>>, vector<1x1x8x256xbf16>
    %61 = vector.shape_cast %60 : vector<1x1x8x256xbf16> to vector<8x256xbf16>
    %cst_64 = arith.constant dense<0.000000e+00> : vector<8x256xf32>
    %62 = tpu.matmul %61, %55, %cst_64 {dimension_numbers = #tpu.dot_dimension_numbers<[1], [0], [0], [1], [0, 0, 1, 1], [], []>} : vector<8x256xbf16>, vector<256x256xbf16>, vector<8x256xf32> -> vector<8x256xf32>
    %63 = arith.addf %45, %62 : vector<8x256xf32>
    %c0_65 = arith.constant 0 : index
    %c3_66 = arith.constant 3 : index
    %c0_67 = arith.constant 0 : index
    %c0_68 = arith.constant 0 : index
    %64 = vector.load %arg1[%c0_65, %c3_66, %c0_67, %c0_68] : memref<1x4x9x256xbf16, #tpu.memory_space<vmem>>, vector<1x1x8x256xbf16>
    %65 = vector.shape_cast %64 : vector<1x1x8x256xbf16> to vector<8x256xbf16>
    %cst_69 = arith.constant dense<0.000000e+00> : vector<8x256xf32>
    %66 = tpu.matmul %65, %55, %cst_69 {dimension_numbers = #tpu.dot_dimension_numbers<[1], [0], [0], [1], [0, 0, 1, 1], [], []>} : vector<8x256xbf16>, vector<256x256xbf16>, vector<8x256xf32> -> vector<8x256xf32>
    %67 = arith.addf %49, %66 : vector<8x256xf32>
    %c0_70 = arith.constant 0 : index
    %c0_71 = arith.constant 0 : index
    %c1_72 = arith.constant 1 : index
    %c0_73 = arith.constant 0 : index
    %68 = vector.load %arg1[%c0_70, %c0_71, %c1_72, %c0_73] : memref<1x4x9x256xbf16, #tpu.memory_space<vmem>>, vector<1x1x8x256xbf16>
    %69 = vector.shape_cast %68 : vector<1x1x8x256xbf16> to vector<8x256xbf16>
    %cst_74 = arith.constant dense<0.000000e+00> : vector<8x256xf32>
    %70 = tpu.matmul %69, %55, %cst_74 {dimension_numbers = #tpu.dot_dimension_numbers<[1], [0], [0], [1], [0, 0, 1, 1], [], []>} : vector<8x256xbf16>, vector<256x256xbf16>, vector<8x256xf32> -> vector<8x256xf32>
    %71 = arith.addf %53, %70 : vector<8x256xf32>
    %c2_75 = arith.constant 2 : index
    %c0_76 = arith.constant 0 : index
    %c0_77 = arith.constant 0 : index
    %72 = vector.load %arg2[%c2_75, %c0_76, %c0_77] : memref<3x256x256xbf16, #tpu.memory_space<vmem>>, vector<1x256x256xbf16>
    %73 = vector.shape_cast %72 : vector<1x256x256xbf16> to vector<256x256xbf16>
    %c0_78 = arith.constant 0 : index
    %c2_79 = arith.constant 2 : index
    %c0_80 = arith.constant 0 : index
    %c0_81 = arith.constant 0 : index
    %74 = vector.load %arg1[%c0_78, %c2_79, %c0_80, %c0_81] : memref<1x4x9x256xbf16, #tpu.memory_space<vmem>>, vector<1x1x8x256xbf16>
    %75 = vector.shape_cast %74 : vector<1x1x8x256xbf16> to vector<8x256xbf16>
    %cst_82 = arith.constant dense<0.000000e+00> : vector<8x256xf32>
    %76 = tpu.matmul %75, %73, %cst_82 {dimension_numbers = #tpu.dot_dimension_numbers<[1], [0], [0], [1], [0, 0, 1, 1], [], []>} : vector<8x256xbf16>, vector<256x256xbf16>, vector<8x256xf32> -> vector<8x256xf32>
    %77 = arith.addf %59, %76 : vector<8x256xf32>
    %c0_83 = arith.constant 0 : index
    %c3_84 = arith.constant 3 : index
    %c0_85 = arith.constant 0 : index
    %c0_86 = arith.constant 0 : index
    %78 = vector.load %arg1[%c0_83, %c3_84, %c0_85, %c0_86] : memref<1x4x9x256xbf16, #tpu.memory_space<vmem>>, vector<1x1x8x256xbf16>
    %79 = vector.shape_cast %78 : vector<1x1x8x256xbf16> to vector<8x256xbf16>
    %cst_87 = arith.constant dense<0.000000e+00> : vector<8x256xf32>
    %80 = tpu.matmul %79, %73, %cst_87 {dimension_numbers = #tpu.dot_dimension_numbers<[1], [0], [0], [1], [0, 0, 1, 1], [], []>} : vector<8x256xbf16>, vector<256x256xbf16>, vector<8x256xf32> -> vector<8x256xf32>
    %81 = arith.addf %63, %80 : vector<8x256xf32>
    %c0_88 = arith.constant 0 : index
    %c0_89 = arith.constant 0 : index
    %c1_90 = arith.constant 1 : index
    %c0_91 = arith.constant 0 : index
    %82 = vector.load %arg1[%c0_88, %c0_89, %c1_90, %c0_91] : memref<1x4x9x256xbf16, #tpu.memory_space<vmem>>, vector<1x1x8x256xbf16>
    %83 = vector.shape_cast %82 : vector<1x1x8x256xbf16> to vector<8x256xbf16>
    %cst_92 = arith.constant dense<0.000000e+00> : vector<8x256xf32>
    %84 = tpu.matmul %83, %73, %cst_92 {dimension_numbers = #tpu.dot_dimension_numbers<[1], [0], [0], [1], [0, 0, 1, 1], [], []>} : vector<8x256xbf16>, vector<256x256xbf16>, vector<8x256xf32> -> vector<8x256xf32>
    %85 = arith.addf %67, %84 : vector<8x256xf32>
    %c0_93 = arith.constant 0 : index
    %c1_94 = arith.constant 1 : index
    %c1_95 = arith.constant 1 : index
    %c0_96 = arith.constant 0 : index
    %86 = vector.load %arg1[%c0_93, %c1_94, %c1_95, %c0_96] : memref<1x4x9x256xbf16, #tpu.memory_space<vmem>>, vector<1x1x8x256xbf16>
    %87 = vector.shape_cast %86 : vector<1x1x8x256xbf16> to vector<8x256xbf16>
    %cst_97 = arith.constant dense<0.000000e+00> : vector<8x256xf32>
    %88 = tpu.matmul %87, %73, %cst_97 {dimension_numbers = #tpu.dot_dimension_numbers<[1], [0], [0], [1], [0, 0, 1, 1], [], []>} : vector<8x256xbf16>, vector<256x256xbf16>, vector<8x256xf32> -> vector<8x256xf32>
    %89 = arith.addf %71, %88 : vector<8x256xf32>
    %c0_98 = arith.constant 0 : index
    %c0_99 = arith.constant 0 : index
    %90 = vector.load %arg3[%c0_98, %c0_99] : memref<1x256xf32, #tpu.memory_space<vmem>>, vector<1x256xf32>
    %91 = vector.broadcast %90 : vector<1x256xf32> to vector<8x256xf32>
    %92 = arith.addf %77, %91 : vector<8x256xf32>
    %cst_100 = arith.constant 0.000000e+00 : f32
    %93 = vector.broadcast %cst_100 : f32 to vector<8x256xf32>
    %94 = arith.cmpf ogt, %92, %93 : vector<8x256xf32>
    %cst_101 = arith.constant 2.000000e-01 : f32
    %95 = vector.broadcast %cst_101 : f32 to vector<8x256xf32>
    %96 = arith.mulf %95, %92 : vector<8x256xf32>
    %97 = arith.select %94, %92, %96 : vector<8x256xi1>, vector<8x256xf32>
    %c2_102 = arith.constant 2 : index
    %c0_103 = arith.constant 0 : index
    %c0_104 = arith.constant 0 : index
    %98 = vector.load %arg9[%c2_102, %c0_103, %c0_104] : memref<4x9x256xf32, #tpu.memory_space<vmem>>, vector<1x8x256xf32>
    %99 = vector.shape_cast %98 : vector<1x8x256xf32> to vector<8x256xf32>
    %100 = vector.shape_cast %97 : vector<8x256xf32> to vector<1x8x256xf32>
    tpu.vector_store %arg9[%c2_102, %c0_103, %c0_104], %100 {strides = array<i32>} : memref<4x9x256xf32, #tpu.memory_space<vmem>>, vector<1x8x256xf32>,
    %c0_105 = arith.constant 0 : index
    %c0_106 = arith.constant 0 : index
    %101 = vector.load %arg3[%c0_105, %c0_106] : memref<1x256xf32, #tpu.memory_space<vmem>>, vector<1x256xf32>
    %102 = vector.broadcast %101 : vector<1x256xf32> to vector<8x256xf32>
    %103 = arith.addf %81, %102 : vector<8x256xf32>
    %cst_107 = arith.constant 0.000000e+00 : f32
    %104 = vector.broadcast %cst_107 : f32 to vector<8x256xf32>
    %105 = arith.cmpf ogt, %103, %104 : vector<8x256xf32>
    %cst_108 = arith.constant 2.000000e-01 : f32
    %106 = vector.broadcast %cst_108 : f32 to vector<8x256xf32>
    %107 = arith.mulf %106, %103 : vector<8x256xf32>
    %108 = arith.select %105, %103, %107 : vector<8x256xi1>, vector<8x256xf32>
    %c3_109 = arith.constant 3 : index
    %c0_110 = arith.constant 0 : index
    %c0_111 = arith.constant 0 : index
    %109 = vector.load %arg9[%c3_109, %c0_110, %c0_111] : memref<4x9x256xf32, #tpu.memory_space<vmem>>, vector<1x8x256xf32>
    %110 = vector.shape_cast %109 : vector<1x8x256xf32> to vector<8x256xf32>
    %111 = vector.shape_cast %108 : vector<8x256xf32> to vector<1x8x256xf32>
    tpu.vector_store %arg9[%c3_109, %c0_110, %c0_111], %111 {strides = array<i32>} : memref<4x9x256xf32, #tpu.memory_space<vmem>>, vector<1x8x256xf32>,
    %c0_112 = arith.constant 0 : index
    %c0_113 = arith.constant 0 : index
    %112 = vector.load %arg3[%c0_112, %c0_113] : memref<1x256xf32, #tpu.memory_space<vmem>>, vector<1x256xf32>
    %113 = vector.broadcast %112 : vector<1x256xf32> to vector<8x256xf32>
    %114 = arith.addf %85, %113 : vector<8x256xf32>
    %cst_114 = arith.constant 0.000000e+00 : f32
    %115 = vector.broadcast %cst_114 : f32 to vector<8x256xf32>
    %116 = arith.cmpf ogt, %114, %115 : vector<8x256xf32>
    %cst_115 = arith.constant 2.000000e-01 : f32
    %117 = vector.broadcast %cst_115 : f32 to vector<8x256xf32>
    %118 = arith.mulf %117, %114 : vector<8x256xf32>
    %119 = arith.select %116, %114, %118 : vector<8x256xi1>, vector<8x256xf32>
    %c0_116 = arith.constant 0 : index
    %c1_117 = arith.constant 1 : index
    %c0_118 = arith.constant 0 : index
    %120 = vector.load %arg9[%c0_116, %c1_117, %c0_118] : memref<4x9x256xf32, #tpu.memory_space<vmem>>, vector<1x8x256xf32>
    %121 = vector.shape_cast %120 : vector<1x8x256xf32> to vector<8x256xf32>
    %122 = vector.shape_cast %119 : vector<8x256xf32> to vector<1x8x256xf32>
    tpu.vector_store %arg9[%c0_116, %c1_117, %c0_118], %122 {strides = array<i32>} : memref<4x9x256xf32, #tpu.memory_space<vmem>>, vector<1x8x256xf32>,
    %c0_119 = arith.constant 0 : index
    %c0_120 = arith.constant 0 : index
    %123 = vector.load %arg3[%c0_119, %c0_120] : memref<1x256xf32, #tpu.memory_space<vmem>>, vector<1x256xf32>
    %124 = vector.broadcast %123 : vector<1x256xf32> to vector<8x256xf32>
    %125 = arith.addf %89, %124 : vector<8x256xf32>
    %cst_121 = arith.constant 0.000000e+00 : f32
    %126 = vector.broadcast %cst_121 : f32 to vector<8x256xf32>
    %127 = arith.cmpf ogt, %125, %126 : vector<8x256xf32>
    %cst_122 = arith.constant 2.000000e-01 : f32
    %128 = vector.broadcast %cst_122 : f32 to vector<8x256xf32>
    %129 = arith.mulf %128, %125 : vector<8x256xf32>
    %130 = arith.select %127, %125, %129 : vector<8x256xi1>, vector<8x256xf32>
    %c1_123 = arith.constant 1 : index
    %c1_124 = arith.constant 1 : index
    %c0_125 = arith.constant 0 : index
    %131 = vector.load %arg9[%c1_123, %c1_124, %c0_125] : memref<4x9x256xf32, #tpu.memory_space<vmem>>, vector<1x8x256xf32>
    %132 = vector.shape_cast %131 : vector<1x8x256xf32> to vector<8x256xf32>
    %133 = vector.shape_cast %130 : vector<8x256xf32> to vector<1x8x256xf32>
    tpu.vector_store %arg9[%c1_123, %c1_124, %c0_125], %133 {strides = array<i32>} : memref<4x9x256xf32, #tpu.memory_space<vmem>>, vector<1x8x256xf32>,
    %cst_126 = arith.constant 0.000000e+00 : f32
    %134 = vector.broadcast %cst_126 : f32 to vector<8x128xf32>
    %cst_127 = arith.constant 0.000000e+00 : f32
    %135 = vector.broadcast %cst_127 : f32 to vector<8x128xf32>
    %c0_128 = arith.constant 0 : index
    %c0_129 = arith.constant 0 : index
    %c0_130 = arith.constant 0 : index
    %136 = vector.load %arg4[%c0_128, %c0_129, %c0_130] : memref<5x256x128xbf16, #tpu.memory_space<vmem>>, vector<1x256x128xbf16>
    %137 = vector.shape_cast %136 : vector<1x256x128xbf16> to vector<256x128xbf16>
    %c0_131 = arith.constant 0 : index
    %c0_132 = arith.constant 0 : index
    %c0_133 = arith.constant 0 : index
    %138 = vector.load %arg9[%c0_131, %c0_132, %c0_133] : memref<4x9x256xf32, #tpu.memory_space<vmem>>, vector<1x8x256xf32>
    %139 = vector.shape_cast %138 : vector<1x8x256xf32> to vector<8x256xf32>
    %140 = arith.truncf %139 : vector<8x256xf32> to vector<8x256xbf16>
    %cst_134 = arith.constant dense<0.000000e+00> : vector<8x128xf32>
    %141 = tpu.matmul %140, %137, %cst_134 {dimension_numbers = #tpu.dot_dimension_numbers<[1], [0], [0], [1], [0, 0, 1, 1], [], []>} : vector<8x256xbf16>, vector<256x128xbf16>, vector<8x128xf32> -> vector<8x128xf32>
    %142 = arith.addf %134, %141 : vector<8x128xf32>
    %c2_135 = arith.constant 2 : index
    %c0_136 = arith.constant 0 : index
    %c0_137 = arith.constant 0 : index
    %143 = vector.load %arg9[%c2_135, %c0_136, %c0_137] : memref<4x9x256xf32, #tpu.memory_space<vmem>>, vector<1x8x256xf32>
    %144 = vector.shape_cast %143 : vector<1x8x256xf32> to vector<8x256xf32>
    %145 = arith.truncf %144 : vector<8x256xf32> to vector<8x256xbf16>
    %cst_138 = arith.constant dense<0.000000e+00> : vector<8x128xf32>
    %146 = tpu.matmul %145, %137, %cst_138 {dimension_numbers = #tpu.dot_dimension_numbers<[1], [0], [0], [1], [0, 0, 1, 1], [], []>} : vector<8x256xbf16>, vector<256x128xbf16>, vector<8x128xf32> -> vector<8x128xf32>
    %147 = arith.addf %135, %146 : vector<8x128xf32>
    %c1_139 = arith.constant 1 : index
    %c0_140 = arith.constant 0 : index
    %c0_141 = arith.constant 0 : index
    %148 = vector.load %arg4[%c1_139, %c0_140, %c0_141] : memref<5x256x128xbf16, #tpu.memory_space<vmem>>, vector<1x256x128xbf16>
    %149 = vector.shape_cast %148 : vector<1x256x128xbf16> to vector<256x128xbf16>
    %c1_142 = arith.constant 1 : index
    %c0_143 = arith.constant 0 : index
    %c0_144 = arith.constant 0 : index
    %150 = vector.load %arg9[%c1_142, %c0_143, %c0_144] : memref<4x9x256xf32, #tpu.memory_space<vmem>>, vector<1x8x256xf32>
    %151 = vector.shape_cast %150 : vector<1x8x256xf32> to vector<8x256xf32>
    %152 = arith.truncf %151 : vector<8x256xf32> to vector<8x256xbf16>
    %cst_145 = arith.constant dense<0.000000e+00> : vector<8x128xf32>
    %153 = tpu.matmul %152, %149, %cst_145 {dimension_numbers = #tpu.dot_dimension_numbers<[1], [0], [0], [1], [0, 0, 1, 1], [], []>} : vector<8x256xbf16>, vector<256x128xbf16>, vector<8x128xf32> -> vector<8x128xf32>
    %154 = arith.addf %142, %153 : vector<8x128xf32>
    %c3_146 = arith.constant 3 : index
    %c0_147 = arith.constant 0 : index
    %c0_148 = arith.constant 0 : index
    %155 = vector.load %arg9[%c3_146, %c0_147, %c0_148] : memref<4x9x256xf32, #tpu.memory_space<vmem>>, vector<1x8x256xf32>
    %156 = vector.shape_cast %155 : vector<1x8x256xf32> to vector<8x256xf32>
    %157 = arith.truncf %156 : vector<8x256xf32> to vector<8x256xbf16>
    %cst_149 = arith.constant dense<0.000000e+00> : vector<8x128xf32>
    %158 = tpu.matmul %157, %149, %cst_149 {dimension_numbers = #tpu.dot_dimension_numbers<[1], [0], [0], [1], [0, 0, 1, 1], [], []>} : vector<8x256xbf16>, vector<256x128xbf16>, vector<8x128xf32> -> vector<8x128xf32>
    %159 = arith.addf %147, %158 : vector<8x128xf32>
    %c2_150 = arith.constant 2 : index
    %c0_151 = arith.constant 0 : index
    %c0_152 = arith.constant 0 : index
    %160 = vector.load %arg4[%c2_150, %c0_151, %c0_152] : memref<5x256x128xbf16, #tpu.memory_space<vmem>>, vector<1x256x128xbf16>
    %161 = vector.shape_cast %160 : vector<1x256x128xbf16> to vector<256x128xbf16>
    %c2_153 = arith.constant 2 : index
    %c0_154 = arith.constant 0 : index
    %c0_155 = arith.constant 0 : index
    %162 = vector.load %arg9[%c2_153, %c0_154, %c0_155] : memref<4x9x256xf32, #tpu.memory_space<vmem>>, vector<1x8x256xf32>
    %163 = vector.shape_cast %162 : vector<1x8x256xf32> to vector<8x256xf32>
    %164 = arith.truncf %163 : vector<8x256xf32> to vector<8x256xbf16>
    %cst_156 = arith.constant dense<0.000000e+00> : vector<8x128xf32>
    %165 = tpu.matmul %164, %161, %cst_156 {dimension_numbers = #tpu.dot_dimension_numbers<[1], [0], [0], [1], [0, 0, 1, 1], [], []>} : vector<8x256xbf16>, vector<256x128xbf16>, vector<8x128xf32> -> vector<8x128xf32>
    %166 = arith.addf %154, %165 : vector<8x128xf32>
    %c0_157 = arith.constant 0 : index
    %c1_158 = arith.constant 1 : index
    %c0_159 = arith.constant 0 : index
    %167 = vector.load %arg9[%c0_157, %c1_158, %c0_159] : memref<4x9x256xf32, #tpu.memory_space<vmem>>, vector<1x8x256xf32>
    %168 = vector.shape_cast %167 : vector<1x8x256xf32> to vector<8x256xf32>
    %169 = arith.truncf %168 : vector<8x256xf32> to vector<8x256xbf16>
    %cst_160 = arith.constant dense<0.000000e+00> : vector<8x128xf32>
    %170 = tpu.matmul %169, %161, %cst_160 {dimension_numbers = #tpu.dot_dimension_numbers<[1], [0], [0], [1], [0, 0, 1, 1], [], []>} : vector<8x256xbf16>, vector<256x128xbf16>, vector<8x128xf32> -> vector<8x128xf32>
    %171 = arith.addf %159, %170 : vector<8x128xf32>
    %c3_161 = arith.constant 3 : index
    %c0_162 = arith.constant 0 : index
    %c0_163 = arith.constant 0 : index
    %172 = vector.load %arg4[%c3_161, %c0_162, %c0_163] : memref<5x256x128xbf16, #tpu.memory_space<vmem>>, vector<1x256x128xbf16>
    %173 = vector.shape_cast %172 : vector<1x256x128xbf16> to vector<256x128xbf16>
    %c3_164 = arith.constant 3 : index
    %c0_165 = arith.constant 0 : index
    %c0_166 = arith.constant 0 : index
    %174 = vector.load %arg9[%c3_164, %c0_165, %c0_166] : memref<4x9x256xf32, #tpu.memory_space<vmem>>, vector<1x8x256xf32>
    %175 = vector.shape_cast %174 : vector<1x8x256xf32> to vector<8x256xf32>
    %176 = arith.truncf %175 : vector<8x256xf32> to vector<8x256xbf16>
    %cst_167 = arith.constant dense<0.000000e+00> : vector<8x128xf32>
    %177 = tpu.matmul %176, %173, %cst_167 {dimension_numbers = #tpu.dot_dimension_numbers<[1], [0], [0], [1], [0, 0, 1, 1], [], []>} : vector<8x256xbf16>, vector<256x128xbf16>, vector<8x128xf32> -> vector<8x128xf32>
    %178 = arith.addf %166, %177 : vector<8x128xf32>
    %c1_168 = arith.constant 1 : index
    %c1_169 = arith.constant 1 : index
    %c0_170 = arith.constant 0 : index
    %179 = vector.load %arg9[%c1_168, %c1_169, %c0_170] : memref<4x9x256xf32, #tpu.memory_space<vmem>>, vector<1x8x256xf32>
    %180 = vector.shape_cast %179 : vector<1x8x256xf32> to vector<8x256xf32>
    %181 = arith.truncf %180 : vector<8x256xf32> to vector<8x256xbf16>
    %cst_171 = arith.constant dense<0.000000e+00> : vector<8x128xf32>
    %182 = tpu.matmul %181, %173, %cst_171 {dimension_numbers = #tpu.dot_dimension_numbers<[1], [0], [0], [1], [0, 0, 1, 1], [], []>} : vector<8x256xbf16>, vector<256x128xbf16>, vector<8x128xf32> -> vector<8x128xf32>
    %183 = arith.addf %171, %182 : vector<8x128xf32>
    %c4 = arith.constant 4 : index
    %c0_172 = arith.constant 0 : index
    %c0_173 = arith.constant 0 : index
    %184 = vector.load %arg4[%c4, %c0_172, %c0_173] : memref<5x256x128xbf16, #tpu.memory_space<vmem>>, vector<1x256x128xbf16>
    %185 = vector.shape_cast %184 : vector<1x256x128xbf16> to vector<256x128xbf16>
    %c0_174 = arith.constant 0 : index
    %c1_175 = arith.constant 1 : index
    %c0_176 = arith.constant 0 : index
    %186 = vector.load %arg9[%c0_174, %c1_175, %c0_176] : memref<4x9x256xf32, #tpu.memory_space<vmem>>, vector<1x8x256xf32>
    %187 = vector.shape_cast %186 : vector<1x8x256xf32> to vector<8x256xf32>
    %188 = arith.truncf %187 : vector<8x256xf32> to vector<8x256xbf16>
    %cst_177 = arith.constant dense<0.000000e+00> : vector<8x128xf32>
    %189 = tpu.matmul %188, %185, %cst_177 {dimension_numbers = #tpu.dot_dimension_numbers<[1], [0], [0], [1], [0, 0, 1, 1], [], []>} : vector<8x256xbf16>, vector<256x128xbf16>, vector<8x128xf32> -> vector<8x128xf32>
    %190 = arith.addf %178, %189 : vector<8x128xf32>
    %c2_178 = arith.constant 2 : index
    %c1_179 = arith.constant 1 : index
    %c0_180 = arith.constant 0 : index
    %191 = vector.load %arg9[%c2_178, %c1_179, %c0_180] : memref<4x9x256xf32, #tpu.memory_space<vmem>>, vector<1x8x256xf32>
    %192 = vector.shape_cast %191 : vector<1x8x256xf32> to vector<8x256xf32>
    %193 = arith.truncf %192 : vector<8x256xf32> to vector<8x256xbf16>
    %cst_181 = arith.constant dense<0.000000e+00> : vector<8x128xf32>
    %194 = tpu.matmul %193, %185, %cst_181 {dimension_numbers = #tpu.dot_dimension_numbers<[1], [0], [0], [1], [0, 0, 1, 1], [], []>} : vector<8x256xbf16>, vector<256x128xbf16>, vector<8x128xf32> -> vector<8x128xf32>
    %195 = arith.addf %183, %194 : vector<8x128xf32>
    %c0_182 = arith.constant 0 : index
    %c0_183 = arith.constant 0 : index
    %196 = vector.load %arg5[%c0_182, %c0_183] : memref<1x128xf32, #tpu.memory_space<vmem>>, vector<1x128xf32>
    %197 = vector.broadcast %196 : vector<1x128xf32> to vector<8x128xf32>
    %198 = arith.addf %190, %197 : vector<8x128xf32>
    %cst_184 = arith.constant 0.000000e+00 : f32
    %199 = vector.broadcast %cst_184 : f32 to vector<8x128xf32>
    %200 = arith.cmpf ogt, %198, %199 : vector<8x128xf32>
    %cst_185 = arith.constant 2.000000e-01 : f32
    %201 = vector.broadcast %cst_185 : f32 to vector<8x128xf32>
    %202 = arith.mulf %201, %198 : vector<8x128xf32>
    %203 = arith.select %200, %198, %202 : vector<8x128xi1>, vector<8x128xf32>
    %c0_186 = arith.constant 0 : index
    %c1_187 = arith.constant 1 : index
    %c0_188 = arith.constant 0 : index
    %204 = vector.load %arg10[%c0_186, %c1_187, %c0_188] : memref<2x10x128xf32, #tpu.memory_space<vmem>>, vector<1x8x128xf32>
    %205 = vector.shape_cast %204 : vector<1x8x128xf32> to vector<8x128xf32>
    %206 = vector.shape_cast %203 : vector<8x128xf32> to vector<1x8x128xf32>
    tpu.vector_store %arg10[%c0_186, %c1_187, %c0_188], %206 {strides = array<i32>} : memref<2x10x128xf32, #tpu.memory_space<vmem>>, vector<1x8x128xf32>,
    %c0_189 = arith.constant 0 : index
    %c0_190 = arith.constant 0 : index
    %207 = vector.load %arg5[%c0_189, %c0_190] : memref<1x128xf32, #tpu.memory_space<vmem>>, vector<1x128xf32>
    %208 = vector.broadcast %207 : vector<1x128xf32> to vector<8x128xf32>
    %209 = arith.addf %195, %208 : vector<8x128xf32>
    %cst_191 = arith.constant 0.000000e+00 : f32
    %210 = vector.broadcast %cst_191 : f32 to vector<8x128xf32>
    %211 = arith.cmpf ogt, %209, %210 : vector<8x128xf32>
    %cst_192 = arith.constant 2.000000e-01 : f32
    %212 = vector.broadcast %cst_192 : f32 to vector<8x128xf32>
    %213 = arith.mulf %212, %209 : vector<8x128xf32>
    %214 = arith.select %211, %209, %213 : vector<8x128xi1>, vector<8x128xf32>
    %c1_193 = arith.constant 1 : index
    %c1_194 = arith.constant 1 : index
    %c0_195 = arith.constant 0 : index
    %215 = vector.load %arg10[%c1_193, %c1_194, %c0_195] : memref<2x10x128xf32, #tpu.memory_space<vmem>>, vector<1x8x128xf32>
    %216 = vector.shape_cast %215 : vector<1x8x128xf32> to vector<8x128xf32>
    %217 = vector.shape_cast %214 : vector<8x128xf32> to vector<1x8x128xf32>
    tpu.vector_store %arg10[%c1_193, %c1_194, %c0_195], %217 {strides = array<i32>} : memref<2x10x128xf32, #tpu.memory_space<vmem>>, vector<1x8x128xf32>,
    %cst_196 = arith.constant 0.000000e+00 : f32
    %218 = vector.broadcast %cst_196 : f32 to vector<8x64xf32>
    %c0_197 = arith.constant 0 : index
    %c0_198 = arith.constant 0 : index
    %c0_199 = arith.constant 0 : index
    %219 = vector.load %arg10[%c0_197, %c0_198, %c0_199] : memref<2x10x128xf32, #tpu.memory_space<vmem>>, vector<1x8x128xf32>
    %220 = vector.shape_cast %219 : vector<1x8x128xf32> to vector<8x128xf32>
    %221 = arith.truncf %220 : vector<8x128xf32> to vector<8x128xbf16>
    %c0_200 = arith.constant 0 : index
    %c0_201 = arith.constant 0 : index
    %c0_202 = arith.constant 0 : index
    %222 = vector.load %arg6[%c0_200, %c0_201, %c0_202] : memref<5x128x64xbf16, #tpu.memory_space<vmem>>, vector<1x128x64xbf16>
    %223 = vector.shape_cast %222 : vector<1x128x64xbf16> to vector<128x64xbf16>
    %cst_203 = arith.constant dense<0.000000e+00> : vector<8x64xf32>
    %224 = tpu.matmul %221, %223, %cst_203 {dimension_numbers = #tpu.dot_dimension_numbers<[1], [0], [0], [1], [0, 0, 1, 1], [], []>} : vector<8x128xbf16>, vector<128x64xbf16>, vector<8x64xf32> -> vector<8x64xf32>
    %225 = arith.addf %218, %224 : vector<8x64xf32>
    %c1_204 = arith.constant 1 : index
    %c0_205 = arith.constant 0 : index
    %c0_206 = arith.constant 0 : index
    %226 = vector.load %arg10[%c1_204, %c0_205, %c0_206] : memref<2x10x128xf32, #tpu.memory_space<vmem>>, vector<1x8x128xf32>
    %227 = vector.shape_cast %226 : vector<1x8x128xf32> to vector<8x128xf32>
    %228 = arith.truncf %227 : vector<8x128xf32> to vector<8x128xbf16>
    %c1_207 = arith.constant 1 : index
    %c0_208 = arith.constant 0 : index
    %c0_209 = arith.constant 0 : index
    %229 = vector.load %arg6[%c1_207, %c0_208, %c0_209] : memref<5x128x64xbf16, #tpu.memory_space<vmem>>, vector<1x128x64xbf16>
    %230 = vector.shape_cast %229 : vector<1x128x64xbf16> to vector<128x64xbf16>
    %cst_210 = arith.constant dense<0.000000e+00> : vector<8x64xf32>
    %231 = tpu.matmul %228, %230, %cst_210 {dimension_numbers = #tpu.dot_dimension_numbers<[1], [0], [0], [1], [0, 0, 1, 1], [], []>} : vector<8x128xbf16>, vector<128x64xbf16>, vector<8x64xf32> -> vector<8x64xf32>
    %232 = arith.addf %225, %231 : vector<8x64xf32>
    %c0_211 = arith.constant 0 : index
    %c1_212 = arith.constant 1 : index
    %c0_213 = arith.constant 0 : index
    %233 = vector.load %arg10[%c0_211, %c1_212, %c0_213] : memref<2x10x128xf32, #tpu.memory_space<vmem>>, vector<1x8x128xf32>
    %234 = vector.shape_cast %233 : vector<1x8x128xf32> to vector<8x128xf32>
    %235 = arith.truncf %234 : vector<8x128xf32> to vector<8x128xbf16>
    %c2_214 = arith.constant 2 : index
    %c0_215 = arith.constant 0 : index
    %c0_216 = arith.constant 0 : index
    %236 = vector.load %arg6[%c2_214, %c0_215, %c0_216] : memref<5x128x64xbf16, #tpu.memory_space<vmem>>, vector<1x128x64xbf16>
    %237 = vector.shape_cast %236 : vector<1x128x64xbf16> to vector<128x64xbf16>
    %cst_217 = arith.constant dense<0.000000e+00> : vector<8x64xf32>
    %238 = tpu.matmul %235, %237, %cst_217 {dimension_numbers = #tpu.dot_dimension_numbers<[1], [0], [0], [1], [0, 0, 1, 1], [], []>} : vector<8x128xbf16>, vector<128x64xbf16>, vector<8x64xf32> -> vector<8x64xf32>
    %239 = arith.addf %232, %238 : vector<8x64xf32>
    %c1_218 = arith.constant 1 : index
    %c1_219 = arith.constant 1 : index
    %c0_220 = arith.constant 0 : index
    %240 = vector.load %arg10[%c1_218, %c1_219, %c0_220] : memref<2x10x128xf32, #tpu.memory_space<vmem>>, vector<1x8x128xf32>
    %241 = vector.shape_cast %240 : vector<1x8x128xf32> to vector<8x128xf32>
    %242 = arith.truncf %241 : vector<8x128xf32> to vector<8x128xbf16>
    %c3_221 = arith.constant 3 : index
    %c0_222 = arith.constant 0 : index
    %c0_223 = arith.constant 0 : index
    %243 = vector.load %arg6[%c3_221, %c0_222, %c0_223] : memref<5x128x64xbf16, #tpu.memory_space<vmem>>, vector<1x128x64xbf16>
    %244 = vector.shape_cast %243 : vector<1x128x64xbf16> to vector<128x64xbf16>
    %cst_224 = arith.constant dense<0.000000e+00> : vector<8x64xf32>
    %245 = tpu.matmul %242, %244, %cst_224 {dimension_numbers = #tpu.dot_dimension_numbers<[1], [0], [0], [1], [0, 0, 1, 1], [], []>} : vector<8x128xbf16>, vector<128x64xbf16>, vector<8x64xf32> -> vector<8x64xf32>
    %246 = arith.addf %239, %245 : vector<8x64xf32>
    %c0_225 = arith.constant 0 : index
    %c2_226 = arith.constant 2 : index
    %c0_227 = arith.constant 0 : index
    %247 = vector.load %arg10[%c0_225, %c2_226, %c0_227] : memref<2x10x128xf32, #tpu.memory_space<vmem>>, vector<1x8x128xf32>
    %248 = vector.shape_cast %247 : vector<1x8x128xf32> to vector<8x128xf32>
    %249 = arith.truncf %248 : vector<8x128xf32> to vector<8x128xbf16>
    %c4_228 = arith.constant 4 : index
    %c0_229 = arith.constant 0 : index
    %c0_230 = arith.constant 0 : index
    %250 = vector.load %arg6[%c4_228, %c0_229, %c0_230] : memref<5x128x64xbf16, #tpu.memory_space<vmem>>, vector<1x128x64xbf16>
    %251 = vector.shape_cast %250 : vector<1x128x64xbf16> to vector<128x64xbf16>
    %cst_231 = arith.constant dense<0.000000e+00> : vector<8x64xf32>
    %252 = tpu.matmul %249, %251, %cst_231 {dimension_numbers = #tpu.dot_dimension_numbers<[1], [0], [0], [1], [0, 0, 1, 1], [], []>} : vector<8x128xbf16>, vector<128x64xbf16>, vector<8x64xf32> -> vector<8x64xf32>
    %253 = arith.addf %246, %252 : vector<8x64xf32>
    %c0_232 = arith.constant 0 : index
    %c0_233 = arith.constant 0 : index
    %254 = vector.load %arg7[%c0_232, %c0_233] : memref<1x64xf32, #tpu.memory_space<vmem>>, vector<1x64xf32>
    %255 = vector.broadcast %254 : vector<1x64xf32> to vector<8x64xf32>
    %256 = arith.addf %253, %255 : vector<8x64xf32>
    %c0_234 = arith.constant 0 : index
    %c0_235 = arith.constant 0 : index
    %c0_236 = arith.constant 0 : index
    %257 = vector.load %arg8[%c0_234, %c0_235, %c0_236] : memref<1x8x64xf32, #tpu.memory_space<vmem>>, vector<1x8x64xf32>
    %258 = vector.shape_cast %257 : vector<1x8x64xf32> to vector<8x64xf32>
    %259 = vector.shape_cast %256 : vector<8x64xf32> to vector<1x8x64xf32>
    tpu.vector_store %arg8[%c0_234, %c0_235, %c0_236], %259 {strides = array<i32>} : memref<1x8x64xf32, #tpu.memory_space<vmem>>, vector<1x8x64xf32>,
    return
  }
  func.func @transform_0(%arg0: i32) -> (i32, i32, i32, i32) {
    %c0_i32 = arith.constant 0 : i32
    %c0_i32_0 = arith.constant 0 : i32
    %c0_i32_1 = arith.constant 0 : i32
    %c0_i32_2 = arith.constant 0 : i32
    return %arg0, %c0_i32, %c0_i32_0, %c0_i32_1 : i32, i32, i32, i32
  }
  func.func @transform_1(%arg0: i32) -> (i32, i32, i32) {
    %c0_i32 = arith.constant 0 : i32
    %c0_i32_0 = arith.constant 0 : i32
    %c0_i32_1 = arith.constant 0 : i32
    %c0_i32_2 = arith.constant 0 : i32
    return %c0_i32, %c0_i32_0, %c0_i32_1 : i32, i32, i32
  }
  func.func @transform_2(%arg0: i32) -> (i32, i32) {
    %c0_i32 = arith.constant 0 : i32
    %c0_i32_0 = arith.constant 0 : i32
    %c0_i32_1 = arith.constant 0 : i32
    return %c0_i32, %c0_i32_0 : i32, i32
  }
  func.func @transform_3(%arg0: i32) -> (i32, i32, i32) {
    %c0_i32 = arith.constant 0 : i32
    %c0_i32_0 = arith.constant 0 : i32
    %c0_i32_1 = arith.constant 0 : i32
    %c0_i32_2 = arith.constant 0 : i32
    return %c0_i32, %c0_i32_0, %c0_i32_1 : i32, i32, i32
  }
  func.func @transform_4(%arg0: i32) -> (i32, i32) {
    %c0_i32 = arith.constant 0 : i32
    %c0_i32_0 = arith.constant 0 : i32
    %c0_i32_1 = arith.constant 0 : i32
    return %c0_i32, %c0_i32_0 : i32, i32
  }
  func.func @transform_5(%arg0: i32) -> (i32, i32, i32) {
    %c0_i32 = arith.constant 0 : i32
    %c0_i32_0 = arith.constant 0 : i32
    %c0_i32_1 = arith.constant 0 : i32
    %c0_i32_2 = arith.constant 0 : i32
    return %c0_i32, %c0_i32_0, %c0_i32_1 : i32, i32, i32
  }
  func.func @transform_6(%arg0: i32) -> (i32, i32) {
    %c0_i32 = arith.constant 0 : i32
    %c0_i32_0 = arith.constant 0 : i32
    %c0_i32_1 = arith.constant 0 : i32
    return %c0_i32, %c0_i32_0 : i32, i32
  }
  func.func @transform_7(%arg0: i32) -> (i32, i32, i32) {
    %c0_i32 = arith.constant 0 : i32
    %c0_i32_0 = arith.constant 0 : i32
    %c0_i32_1 = arith.constant 0 : i32
    return %arg0, %c0_i32, %c0_i32_0 : i32, i32, i32
  }
}

</mosaic_0001>

<llo_original>
// kernel: res_prior_encode_net.1
$region0: #{res_prior_encode_net.1}
  #allocation0 [shape = 'u32[]', space=smem, size = 0x4, offset = 0x4, fixed_abs, tag = 'smem constant byte address 0x4 - core index']
  #allocation1 [shape = 'u32[144,128]{1,0:T(1,128)}', space=vmem, size = 0x12000, scoped, tag = 'internal scratch']
  #allocation2 [shape = 'f32[4,9,256]{2,1,0:T(8,128)}', space=vmem, size = 0x10000, scoped, tag = 'scratch operand']
  #allocation3 [shape = 'f32[2,10,128]{2,1,0:T(8,128)}', space=vmem, size = 0x4000, scoped, tag = 'scratch operand']
  %s0 = inlined_call_operand.vmem [shape: bf16[2,4,9,256], index: 0, kind: input, shape index: {}]
  %s1 = inlined_call_operand.vmem [shape: bf16[3,256,256], index: 1, kind: input, shape index: {}]
  %s2 = inlined_call_operand.vmem [shape: f32[1,256], index: 2, kind: input, shape index: {}]
  %s3 = inlined_call_operand.vmem [shape: bf16[5,256,128], index: 3, kind: input, shape index: {}]
  %s4 = inlined_call_operand.vmem [shape: f32[1,128], index: 4, kind: input, shape index: {}]
  %s5 = inlined_call_operand.vmem [shape: bf16[5,128,64], index: 5, kind: input, shape index: {}]
  %s6 = inlined_call_operand.vmem [shape: f32[1,64], index: 6, kind: input, shape index: {}]
  %s7 = inlined_call_operand.vmem [shape: f32[2,8,64], index: 7, kind: output, shape index: {}]
  %s8 = sld [smem:[#allocation0]]
  $region61: #{res_prior_encode_net.1} parent=0
    _
  %s10 = ssub.s32 1, %s8
  %s11 = scalar_select 0, %s10, %s8
  loop: start=0, step=1, limit=4
  $region2: #{res_prior_encode_net.1} parent=0 // loop_pre_header
    _
  $region3: #{res_prior_encode_net.1} parent=0 // loop_header
    %s13 = sphi 0, %s17
    %p14 = scmp.ge.s32.totalorder %s13, 4
    %s23 = sphi 0, %s25
    %s26 = sphi 0, %s23
    %s27 = sphi 0, %s26
    %s43 = sphi 0, %s27
    %s47 = sphi 0, %s47
    %s49 = sphi 0, %s47
    %s50 = sphi 0, %s49
    %s64 = sphi 0, %s50
    %s68 = sphi 0, %s68
    %s70 = sphi 0, %s68
    %s71 = sphi 0, %s70
    %s85 = sphi 0, %s71
    %s89 = sphi 0, %s89
    %s91 = sphi 0, %s89
    %s92 = sphi 0, %s91
    %s106 = sphi 0, %s92
    %s110 = sphi 0, %s110
    %s112 = sphi 0, %s110
    %s113 = sphi 0, %s112
    %s127 = sphi 0, %s113
    %s131 = sphi 0, %s131
    %s133 = sphi 0, %s131
    %s134 = sphi 0, %s133
    %s148 = sphi 0, %s134
    %s152 = sphi 0, %s152
    %s154 = sphi 0, %s152
    %s155 = sphi 0, %s154
    %s169 = sphi 0, %s155
    %s175 = sphi 0, %s177
    %s178 = sphi 0, %s175
    %s179 = sphi 0, %s178
    %s195 = sphi 0, %s179
  $region4: #{res_prior_encode_net.1} parent=0 // loop_header_branch
    %16 = sbr.rel (%p14) target = $region8
  $region5: #{res_prior_encode_net.1} parent=0 // loop_body
    %s18 = ssub.s32 %s13, 1
    %s19 = ssub.s32 %s13, 2
    %s20 = sadd.s32 %s13, 1
    %s21 = ssub.s32 %s13, %s20
    %p22 = scmp.eq.s32.totalorder %s21, 0
    %s24 = sadd.s32 %s23, 1
    %s25 = scalar_select %p22, %s23, %s24
    %p28 = pneg %p22
    %p29 = scmp.eq.s32.totalorder %s13, 1
    %p30 = por %p28, %p29
    %p31 = scmp.ne.s32.totalorder %s23, %s26
    %p32 = scmp.eq.s32.totalorder %s13, 0
    %p33 = por %p31, %p32
    %p34 = scmp.ne.s32.totalorder %s23, %s26
    %p35 = scmp.eq.s32.totalorder %s18, 1
    %p36 = por %p34, %p35
    %p37 = scmp.ne.s32.totalorder %s26, %s27
    %p38 = scmp.eq.s32.totalorder %s18, 0
    %p39 = por %p37, %p38
    %p40 = scmp.ne.s32.totalorder %s26, %s27
    %p41 = scmp.eq.s32.totalorder %s19, 1
    %p42 = por %p40, %p41
    %p44 = scmp.ne.s32.totalorder %s27, %s43
    %p45 = scmp.eq.s32.totalorder %s19, 0
    %p46 = por %p44, %p45
    %s48 = sadd.s32 %s47, 1
    %p51 = scmp.eq.s32.totalorder %s13, 1
    %p52 = scmp.ne.s32.totalorder %s47, %s49
    %p53 = scmp.eq.s32.totalorder %s13, 0
    %p54 = por %p52, %p53
    %p55 = scmp.ne.s32.totalorder %s47, %s49
    %p56 = scmp.eq.s32.totalorder %s18, 1
    %p57 = por %p55, %p56
    %p58 = scmp.ne.s32.totalorder %s49, %s50
    %p59 = scmp.eq.s32.totalorder %s18, 0
    %p60 = por %p58, %p59
    %p61 = scmp.ne.s32.totalorder %s49, %s50
    %p62 = scmp.eq.s32.totalorder %s19, 1
    %p63 = por %p61, %p62
    %p65 = scmp.ne.s32.totalorder %s50, %s64
    %p66 = scmp.eq.s32.totalorder %s19, 0
    %p67 = por %p65, %p66
    %s69 = sadd.s32 %s68, 1
    %p72 = scmp.eq.s32.totalorder %s13, 1
    %p73 = scmp.ne.s32.totalorder %s68, %s70
    %p74 = scmp.eq.s32.totalorder %s13, 0
    %p75 = por %p73, %p74
    %p76 = scmp.ne.s32.totalorder %s68, %s70
    %p77 = scmp.eq.s32.totalorder %s18, 1
    %p78 = por %p76, %p77
    %p79 = scmp.ne.s32.totalorder %s70, %s71
    %p80 = scmp.eq.s32.totalorder %s18, 0
    %p81 = por %p79, %p80
    %p82 = scmp.ne.s32.totalorder %s70, %s71
    %p83 = scmp.eq.s32.totalorder %s19, 1
    %p84 = por %p82, %p83
    %p86 = scmp.ne.s32.totalorder %s71, %s85
    %p87 = scmp.eq.s32.totalorder %s19, 0
    %p88 = por %p86, %p87
    %s90 = sadd.s32 %s89, 1
    %p93 = scmp.eq.s32.totalorder %s13, 1
    %p94 = scmp.ne.s32.totalorder %s89, %s91
    %p95 = scmp.eq.s32.totalorder %s13, 0
    %p96 = por %p94, %p95
    %p97 = scmp.ne.s32.totalorder %s89, %s91
    %p98 = scmp.eq.s32.totalorder %s18, 1
    %p99 = por %p97, %p98
    %p100 = scmp.ne.s32.totalorder %s91, %s92
    %p101 = scmp.eq.s32.totalorder %s18, 0
    %p102 = por %p100, %p101
    %p103 = scmp.ne.s32.totalorder %s91, %s92
    %p104 = scmp.eq.s32.totalorder %s19, 1
    %p105 = por %p103, %p104
    %p107 = scmp.ne.s32.totalorder %s92, %s106
    %p108 = scmp.eq.s32.totalorder %s19, 0
    %p109 = por %p107, %p108
    %s111 = sadd.s32 %s110, 1
    %p114 = scmp.eq.s32.totalorder %s13, 1
    %p115 = scmp.ne.s32.totalorder %s110, %s112
    %p116 = scmp.eq.s32.totalorder %s13, 0
    %p117 = por %p115, %p116
    %p118 = scmp.ne.s32.totalorder %s110, %s112
    %p119 = scmp.eq.s32.totalorder %s18, 1
    %p120 = por %p118, %p119
    %p121 = scmp.ne.s32.totalorder %s112, %s113
    %p122 = scmp.eq.s32.totalorder %s18, 0
    %p123 = por %p121, %p122
    %p124 = scmp.ne.s32.totalorder %s112, %s113
    %p125 = scmp.eq.s32.totalorder %s19, 1
    %p126 = por %p124, %p125
    %p128 = scmp.ne.s32.totalorder %s113, %s127
    %p129 = scmp.eq.s32.totalorder %s19, 0
    %p130 = por %p128, %p129
    %s132 = sadd.s32 %s131, 1
    %p135 = scmp.eq.s32.totalorder %s13, 1
    %p136 = scmp.ne.s32.totalorder %s131, %s133
    %p137 = scmp.eq.s32.totalorder %s13, 0
    %p138 = por %p136, %p137
    %p139 = scmp.ne.s32.totalorder %s131, %s133
    %p140 = scmp.eq.s32.totalorder %s18, 1
    %p141 = por %p139, %p140
    %p142 = scmp.ne.s32.totalorder %s133, %s134
    %p143 = scmp.eq.s32.totalorder %s18, 0
    %p144 = por %p142, %p143
    %p145 = scmp.ne.s32.totalorder %s133, %s134
    %p146 = scmp.eq.s32.totalorder %s19, 1
    %p147 = por %p145, %p146
    %p149 = scmp.ne.s32.totalorder %s134, %s148
    %p150 = scmp.eq.s32.totalorder %s19, 0
    %p151 = por %p149, %p150
    %s153 = sadd.s32 %s152, 1
    %p156 = scmp.eq.s32.totalorder %s13, 1
    %p157 = scmp.ne.s32.totalorder %s152, %s154
    %p158 = scmp.eq.s32.totalorder %s13, 0
    %p159 = por %p157, %p158
    %p160 = scmp.ne.s32.totalorder %s152, %s154
    %p161 = scmp.eq.s32.totalorder %s18, 1
    %p162 = por %p160, %p161
    %p163 = scmp.ne.s32.totalorder %s154, %s155
    %p164 = scmp.eq.s32.totalorder %s18, 0
    %p165 = por %p163, %p164
    %p166 = scmp.ne.s32.totalorder %s154, %s155
    %p167 = scmp.eq.s32.totalorder %s19, 1
    %p168 = por %p166, %p167
    %p170 = scmp.ne.s32.totalorder %s155, %s169
    %p171 = scmp.eq.s32.totalorder %s19, 0
    %p172 = por %p170, %p171
    %s173 = ssub.s32 %s13, %s20
    %p174 = scmp.eq.s32.totalorder %s173, 0
    %s176 = sadd.s32 %s175, 1
    %s177 = scalar_select %p174, %s175, %s176
    %p180 = pneg %p174
    %p181 = scmp.eq.s32.totalorder %s13, 1
    %p182 = por %p180, %p181
    %p183 = scmp.ne.s32.totalorder %s175, %s178
    %p184 = scmp.eq.s32.totalorder %s13, 0
    %p185 = por %p183, %p184
    %p186 = scmp.ne.s32.totalorder %s175, %s178
    %p187 = scmp.eq.s32.totalorder %s18, 1
    %p188 = por %p186, %p187
    %p189 = scmp.ne.s32.totalorder %s178, %s179
    %p190 = scmp.eq.s32.totalorder %s18, 0
    %p191 = por %p189, %p190
    %p192 = scmp.ne.s32.totalorder %s178, %s179
    %p193 = scmp.eq.s32.totalorder %s19, 1
    %p194 = por %p192, %p193
    %p196 = scmp.ne.s32.totalorder %s179, %s195
    %p197 = scmp.eq.s32.totalorder %s19, 0
    %p198 = por %p196, %p197
    %p199 = scmp.le.s32.totalorder 1, %s13
    %p200 = scmp.lt.s32.totalorder %s13, 3
    %p201 = pnand %p199, %p200
    %p202 = pneg %p201
    // Predicated region
    $region9: #{res_prior_encode_net.1} parent=5 // pred_check
      _
    $region10: #{res_prior_encode_net.1} parent=5 // pred_check_branch
      %204 = sbr.rel (%p201) target = $region12
    $region11: #{res_prior_encode_net.1} parent=5 // pred_region
      %s205 = ssub.s32 %s13, 1
      // Predicated region
      $region13: #{res_prior_encode_net.1} parent=11 // pred_check
        %p206 = pneg %p60
      $region14: #{res_prior_encode_net.1} parent=11 // pred_check_branch
        %208 = sbr.rel (%p206) target = $region16
      $region15: #{res_prior_encode_net.1} parent=11 // pred_region
        _
      $region16: #{res_prior_encode_net.1} parent=11 // pred_fallthru
        _
      // Predicated region
      $region17: #{res_prior_encode_net.1} parent=11 // pred_check
        %p209 = pneg %p81
      $region18: #{res_prior_encode_net.1} parent=11 // pred_check_branch
        %211 = sbr.rel (%p209) target = $region20
      $region19: #{res_prior_encode_net.1} parent=11 // pred_region
        _
      $region20: #{res_prior_encode_net.1} parent=11 // pred_fallthru
        _
      // Predicated region
      $region21: #{res_prior_encode_net.1} parent=11 // pred_check
        %p212 = pneg %p102
      $region22: #{res_prior_encode_net.1} parent=11 // pred_check_branch
        %214 = sbr.rel (%p212) target = $region24
      $region23: #{res_prior_encode_net.1} parent=11 // pred_region
        _
      $region24: #{res_prior_encode_net.1} parent=11 // pred_fallthru
        _
      // Predicated region
      $region25: #{res_prior_encode_net.1} parent=11 // pred_check
        %p215 = pneg %p123
      $region26: #{res_prior_encode_net.1} parent=11 // pred_check_branch
        %217 = sbr.rel (%p215) target = $region28
      $region27: #{res_prior_encode_net.1} parent=11 // pred_region
        _
      $region28: #{res_prior_encode_net.1} parent=11 // pred_fallthru
        _
      // Predicated region
      $region29: #{res_prior_encode_net.1} parent=11 // pred_check
        %p218 = pneg %p144
      $region30: #{res_prior_encode_net.1} parent=11 // pred_check_branch
        %220 = sbr.rel (%p218) target = $region32
      $region31: #{res_prior_encode_net.1} parent=11 // pred_region
        _
      $region32: #{res_prior_encode_net.1} parent=11 // pred_fallthru
        _
      // Predicated region
      $region33: #{res_prior_encode_net.1} parent=11 // pred_check
        %p221 = pneg %p165
      $region34: #{res_prior_encode_net.1} parent=11 // pred_check_branch
        %223 = sbr.rel (%p221) target = $region36
      $region35: #{res_prior_encode_net.1} parent=11 // pred_region
        _
      $region36: #{res_prior_encode_net.1} parent=11 // pred_fallthru
        _
    $region12: #{res_prior_encode_net.1} parent=5 // pred_fallthru
      _
    %p224 = scmp.lt.s32.totalorder %s13, 2
    // Predicated region
    $region37: #{res_prior_encode_net.1} parent=5 // pred_check
      %p225 = pneg %p224
    $region38: #{res_prior_encode_net.1} parent=5 // pred_check_branch
      %227 = sbr.rel (%p225) target = $region40
    $region39: #{res_prior_encode_net.1} parent=5 // pred_region
      // Predicated region
      $region41: #{res_prior_encode_net.1} parent=39 // pred_check
        %p228 = pneg %p33
      $region42: #{res_prior_encode_net.1} parent=39 // pred_check_branch
        %230 = sbr.rel (%p228) target = $region44
      $region43: #{res_prior_encode_net.1} parent=39 // pred_region
        %p231 = scmp.lt.s32.totalorder %s13, 1
        %s232 = scalar_select %p231, %s13, 1
        %s233 = smul.addr %s232, 16
        %s234 = smul.addr %s233, 4
        %s235 = scalar_lea.vmem %s0, %s234
      $region44: #{res_prior_encode_net.1} parent=39 // pred_fallthru
        _
    $region40: #{res_prior_encode_net.1} parent=5 // pred_fallthru
      _
    %p236 = scmp.le.s32.totalorder 1, %s13
    %p237 = scmp.lt.s32.totalorder %s13, 3
    %p238 = pnand %p236, %p237
    %p239 = pneg %p238
    // Predicated region
    $region45: #{res_prior_encode_net.1} parent=5 // pred_check
      _
    $region46: #{res_prior_encode_net.1} parent=5 // pred_check_branch
      %241 = sbr.rel (%p238) target = $region48
    $region47: #{res_prior_encode_net.1} parent=5 // pred_region
      %s242 = ssub.s32 %s13, 1
      %p243 = scmp.lt.s32.totalorder %s18, 1
      %s244 = scalar_select %p243, %s18, 1
      %s245 = smul.addr %s244, 16
      %s246 = smul.addr %s245, 4
      %s247 = scalar_lea.vmem %s0, %s246
      %p248 = pneg %p39
      %p249 = pneg %p36
      %p250 = pneg %p60
      %p251 = pneg %p57
      %p252 = pneg %p81
      %p253 = pneg %p78
      %p254 = pneg %p102
      %p255 = pneg %p99
      %p256 = pneg %p123
      %p257 = pneg %p120
      %p258 = pneg %p144
      %p259 = pneg %p141
      %p260 = pneg %p165
      %p261 = pneg %p162
      %p262 = pneg %p191
      %p263 = pneg %p188
      %p264 = scmp.lt.s32.totalorder %s18, 1
      %s265 = scalar_select %p264, %s18, 1
      %s266 = smul.addr %s265, 8
      %s267 = scalar_lea.vmem %s7, %s266
      %p268 = scmp.lt.s32.totalorder %s18, 1
      %s269 = scalar_select %p268, %s18, 1
      %s270 = smul.addr %s269, 16
      %s271 = smul.addr %s270, 4
      %s272 = scalar_lea.vmem %s0, %s271
      %p273 = scmp.lt.s32.totalorder %s18, 1
      %s274 = scalar_select %p273, %s18, 1
      %s275 = smul.addr %s274, 8
      %s276 = scalar_lea.vmem %s7, %s275
      %v278 = vlaneseq
      %vm279 = vcmp.ge.s32.totalorder %v278, 0
      %vm280 = vcmp.lt.s32.totalorder %v278, 256
      %vm281 = vmand %vm279, %vm280
      %282 = vst.msk [vmem:[#allocation2] ss:$8 sm:$0x3] %vm281, 0.0
      %283 = vst.msk [vmem:[#allocation2] ss:$8 sm:$0x0] %vm281, 0.0
      %s284 = scalar_lea.vmem [#allocation2], 32
      %285 = vst.msk [vmem:[%s284] ss:$8 sm:$0x3] %vm281, 0.0
      %286 = vst.msk [vmem:[%s284] ss:$8 sm:$0x0] %vm281, 0.0
      %s287 = scalar_lea.vmem [#allocation2], 64
      %s288 = scalar_lea.vmem %s287, 16 [#allocation2]
      %289 = vst.msk [vmem:[%s288] ss:$8 sm:$0x3] %vm281, 0.0
      %290 = vst.msk [vmem:[%s288] ss:$8 sm:$0x0] %vm281, 0.0
      %s291 = scalar_lea.vmem [#allocation2], 96
      %s292 = scalar_lea.vmem %s291, 16 [#allocation2]
      %293 = vst.msk [vmem:[%s292] ss:$8 sm:$0x3] %vm281, 0.0
      %294 = vst.msk [vmem:[%s292] ss:$8 sm:$0x0] %vm281, 0.0
      %295 = vst [vmem:[#allocation3] sm:$0x1] 0.0
      %s296 = scalar_lea.vmem [#allocation3], 16
      %297 = vst [vmem:[%s296] sm:$0x1] 0.0
      %298 = vst [vmem:[#allocation3 + $0x9] sm:$0x1] 0.0
      %299 = vst [vmem:[%s296 + $0x9] sm:$0x1] 0.0
      %v300 = vld [vmem:[%s1] sm:$0xff]
      %v301 = vld [vmem:[%s1 + $0x8] sm:$0xff]
      %v302 = vld [vmem:[%s1 + $0x10] sm:$0xff]
      %v303 = vld [vmem:[%s1 + $0x18] sm:$0xff]
      %v304 = vld [vmem:[%s1 + $0x20] sm:$0xff]
      %v305 = vld [vmem:[%s1 + $0x28] sm:$0xff]
      %v306 = vld [vmem:[%s1 + $0x30] sm:$0xff]
      %v307 = vld [vmem:[%s1 + $0x38] sm:$0xff]
      %v308 = vld [vmem:[%s1 + $0x40] sm:$0xff]
      %v309 = vld [vmem:[%s1 + $0x48] sm:$0xff]
      %v310 = vld [vmem:[%s1 + $0x50] sm:$0xff]
      %v311 = vld [vmem:[%s1 + $0x58] sm:$0xff]
      %v312 = vld [vmem:[%s1 + $0x60] sm:$0xff]
      %v313 = vld [vmem:[%s1 + $0x68] sm:$0xff]
      %v314 = vld [vmem:[%s1 + $0x70] sm:$0xff]
      %v315 = vld [vmem:[%s1 + $0x78] sm:$0xff]
      %v316 = vld [vmem:[%s1 + $0x80] sm:$0xff]
      %v317 = vld [vmem:[%s1 + $0x88] sm:$0xff]
      %v318 = vld [vmem:[%s1 + $0x90] sm:$0xff]
      %v319 = vld [vmem:[%s1 + $0x98] sm:$0xff]
      %v320 = vld [vmem:[%s1 + $0xa0] sm:$0xff]
      %v321 = vld [vmem:[%s1 + $0xa8] sm:$0xff]
      %v322 = vld [vmem:[%s1 + $0xb0] sm:$0xff]
      %v323 = vld [vmem:[%s1 + $0xb8] sm:$0xff]
      %v324 = vld [vmem:[%s1 + $0xc0] sm:$0xff]
      %v325 = vld [vmem:[%s1 + $0xc8] sm:$0xff]
      %v326 = vld [vmem:[%s1 + $0xd0] sm:$0xff]
      %v327 = vld [vmem:[%s1 + $0xd8] sm:$0xff]
      %v328 = vld [vmem:[%s1 + $0xe0] sm:$0xff]
      %v329 = vld [vmem:[%s1 + $0xe8] sm:$0xff]
      %v330 = vld [vmem:[%s1 + $0xf0] sm:$0xff]
      %v331 = vld [vmem:[%s1 + $0xf8] sm:$0xff]
      %v332 = vld [vmem:[%s272] sm:$0xff]
      %s333 = scalar_lea.vmem %s272, 16
      %v334 = vld [vmem:[%s333] sm:$0xff]
      %s335 = scalar_lea.vmem %s272, 32
      %v336 = vld [vmem:[%s335] sm:$0xff]
      %s337 = scalar_lea.vmem %s272, 48
      %v338 = vld [vmem:[%s337] sm:$0xff]
      %s339 = scalar_lea.vmem %s1, 256
      %v340 = vld [vmem:[%s339] sm:$0xff]
      %v341 = vld [vmem:[%s339 + $0x8] sm:$0xff]
      %v342 = vld [vmem:[%s339 + $0x10] sm:$0xff]
      %v343 = vld [vmem:[%s339 + $0x18] sm:$0xff]
      %v344 = vld [vmem:[%s339 + $0x20] sm:$0xff]
      %v345 = vld [vmem:[%s339 + $0x28] sm:$0xff]
      %v346 = vld [vmem:[%s339 + $0x30] sm:$0xff]
      %v347 = vld [vmem:[%s339 + $0x38] sm:$0xff]
      %v348 = vld [vmem:[%s339 + $0x40] sm:$0xff]
      %v349 = vld [vmem:[%s339 + $0x48] sm:$0xff]
      %v350 = vld [vmem:[%s339 + $0x50] sm:$0xff]
      %v351 = vld [vmem:[%s339 + $0x58] sm:$0xff]
      %v352 = vld [vmem:[%s339 + $0x60] sm:$0xff]
      %v353 = vld [vmem:[%s339 + $0x68] sm:$0xff]
      %v354 = vld [vmem:[%s339 + $0x70] sm:$0xff]
      %v355 = vld [vmem:[%s339 + $0x78] sm:$0xff]
      %v356 = vld [vmem:[%s339 + $0x80] sm:$0xff]
      %v357 = vld [vmem:[%s339 + $0x88] sm:$0xff]
      %v358 = vld [vmem:[%s339 + $0x90] sm:$0xff]
      %v359 = vld [vmem:[%s339 + $0x98] sm:$0xff]
      %v360 = vld [vmem:[%s339 + $0xa0] sm:$0xff]
      %v361 = vld [vmem:[%s339 + $0xa8] sm:$0xff]
      %v362 = vld [vmem:[%s339 + $0xb0] sm:$0xff]
      %v363 = vld [vmem:[%s339 + $0xb8] sm:$0xff]
      %v364 = vld [vmem:[%s339 + $0xc0] sm:$0xff]
      %v365 = vld [vmem:[%s339 + $0xc8] sm:$0xff]
      %v366 = vld [vmem:[%s339 + $0xd0] sm:$0xff]
      %v367 = vld [vmem:[%s339 + $0xd8] sm:$0xff]
      %v368 = vld [vmem:[%s339 + $0xe0] sm:$0xff]
      %v369 = vld [vmem:[%s339 + $0xe8] sm:$0xff]
      %v370 = vld [vmem:[%s339 + $0xf0] sm:$0xff]
      %v371 = vld [vmem:[%s339 + $0xf8] sm:$0xff]
      %v373 = vunpack.c.l.b16 %v334
      %v374 = vunpack.c.h.b16 %v334
      %v375 = vpack.c.b16 %v373, %v373
      %v376 = vpack.c.b16 %v374, %v374
      %v411 = vunpack.c.l.b16 %v340
      %v412 = vunpack.c.h.b16 %v340
      %v413 = vunpack.c.l.b16 %v341
      %v414 = vunpack.c.h.b16 %v341
      %v415 = vunpack.c.l.b16 %v342
      %v416 = vunpack.c.h.b16 %v342
      %v417 = vunpack.c.l.b16 %v343
      %v418 = vunpack.c.h.b16 %v343
      %v419 = vunpack.c.l.b16 %v344
      %v420 = vunpack.c.h.b16 %v344
      %v421 = vunpack.c.l.b16 %v345
      %v422 = vunpack.c.h.b16 %v345
      %v423 = vunpack.c.l.b16 %v346
      %v424 = vunpack.c.h.b16 %v346
      %v425 = vunpack.c.l.b16 %v347
      %v426 = vunpack.c.h.b16 %v347
      %v427 = vunpack.c.l.b16 %v348
      %v428 = vunpack.c.h.b16 %v348
      %v429 = vunpack.c.l.b16 %v349
      %v430 = vunpack.c.h.b16 %v349
      %v431 = vunpack.c.l.b16 %v350
      %v432 = vunpack.c.h.b16 %v350
      %v433 = vunpack.c.l.b16 %v351
      %v434 = vunpack.c.h.b16 %v351
      %v435 = vunpack.c.l.b16 %v352
      %v436 = vunpack.c.h.b16 %v352
      %v437 = vunpack.c.l.b16 %v353
      %v438 = vunpack.c.h.b16 %v353
      %v439 = vunpack.c.l.b16 %v354
      %v440 = vunpack.c.h.b16 %v354
      %v441 = vunpack.c.l.b16 %v355
      %v442 = vunpack.c.h.b16 %v355
      %v443 = vunpack.c.l.b16 %v356
      %v444 = vunpack.c.h.b16 %v356
      %v445 = vunpack.c.l.b16 %v357
      %v446 = vunpack.c.h.b16 %v357
      %v447 = vunpack.c.l.b16 %v358
      %v448 = vunpack.c.h.b16 %v358
      %v449 = vunpack.c.l.b16 %v359
      %v450 = vunpack.c.h.b16 %v359
      %v451 = vunpack.c.l.b16 %v360
      %v452 = vunpack.c.h.b16 %v360
      %v453 = vunpack.c.l.b16 %v361
      %v454 = vunpack.c.h.b16 %v361
      %v455 = vunpack.c.l.b16 %v362
      %v456 = vunpack.c.h.b16 %v362
      %v457 = vunpack.c.l.b16 %v363
      %v458 = vunpack.c.h.b16 %v363
      %v459 = vunpack.c.l.b16 %v364
      %v460 = vunpack.c.h.b16 %v364
      %v461 = vunpack.c.l.b16 %v365
      %v462 = vunpack.c.h.b16 %v365
      %v463 = vunpack.c.l.b16 %v366
      %v464 = vunpack.c.h.b16 %v366
      %v465 = vunpack.c.l.b16 %v367
      %v466 = vunpack.c.h.b16 %v367
      %v467 = vunpack.c.l.b16 %v368
      %v468 = vunpack.c.h.b16 %v368
      %v469 = vunpack.c.l.b16 %v369
      %v470 = vunpack.c.h.b16 %v369
      %v471 = vunpack.c.l.b16 %v370
      %v472 = vunpack.c.h.b16 %v370
      %v473 = vunpack.c.l.b16 %v371
      %v474 = vunpack.c.h.b16 %v371
      %v475 = vpack.c.b16 %v413, %v411
      %v476 = vpack.c.b16 %v414, %v412
      %v477 = vpack.c.b16 %v417, %v415
      %v478 = vpack.c.b16 %v418, %v416
      %v479 = vpack.c.b16 %v421, %v419
      %v480 = vpack.c.b16 %v422, %v420
      %v481 = vpack.c.b16 %v425, %v423
      %v482 = vpack.c.b16 %v426, %v424
      %v483 = vpack.c.b16 %v429, %v427
      %v484 = vpack.c.b16 %v430, %v428
      %v485 = vpack.c.b16 %v433, %v431
      %v486 = vpack.c.b16 %v434, %v432
      %v487 = vpack.c.b16 %v437, %v435
      %v488 = vpack.c.b16 %v438, %v436
      %v489 = vpack.c.b16 %v441, %v439
      %v490 = vpack.c.b16 %v442, %v440
      %v491 = vpack.c.b16 %v445, %v443
      %v492 = vpack.c.b16 %v446, %v444
      %v493 = vpack.c.b16 %v449, %v447
      %v494 = vpack.c.b16 %v450, %v448
      %v495 = vpack.c.b16 %v453, %v451
      %v496 = vpack.c.b16 %v454, %v452
      %v497 = vpack.c.b16 %v457, %v455
      %v498 = vpack.c.b16 %v458, %v456
      %v499 = vpack.c.b16 %v461, %v459
      %v500 = vpack.c.b16 %v462, %v460
      %v501 = vpack.c.b16 %v465, %v463
      %v502 = vpack.c.b16 %v466, %v464
      %v503 = vpack.c.b16 %v469, %v467
      %v504 = vpack.c.b16 %v470, %v468
      %v505 = vpack.c.b16 %v473, %v471
      %v506 = vpack.c.b16 %v474, %v472
      %539 = vmatprep.subr.bf16.mxu0 %v476
      %540 = vmatpush1.bf16.msra.mxu0 %v475
      %541 = vmatprep.subr.bf16.mxu0 %v478
      %542 = vmatpush1.bf16.msra.mxu0 %v477
      %543 = vmatprep.subr.bf16.mxu0 %v480
      %544 = vmatpush1.bf16.msra.mxu0 %v479
      %545 = vmatprep.subr.bf16.mxu0 %v482
      %546 = vmatpush1.bf16.msra.mxu0 %v481
      %547 = vmatprep.subr.bf16.mxu0 %v484
      %548 = vmatpush1.bf16.msra.mxu0 %v483
      %549 = vmatprep.subr.bf16.mxu0 %v486
      %550 = vmatpush1.bf16.msra.mxu0 %v485
      %551 = vmatprep.subr.bf16.mxu0 %v488
      %552 = vmatpush1.bf16.msra.mxu0 %v487
      %553 = vmatprep.subr.bf16.mxu0 %v490
      %554 = vmatpush1.bf16.msra.mxu0 %v489
      %555 = vmatprep.subr.bf16.mxu0 %v492
      %556 = vmatpush1.bf16.msra.mxu0 %v491
      %557 = vmatprep.subr.bf16.mxu0 %v494
      %558 = vmatpush1.bf16.msra.mxu0 %v493
      %559 = vmatprep.subr.bf16.mxu0 %v496
      %560 = vmatpush1.bf16.msra.mxu0 %v495
      %561 = vmatprep.subr.bf16.mxu0 %v498
      %562 = vmatpush1.bf16.msra.mxu0 %v497
      %563 = vmatprep.subr.bf16.mxu0 %v500
      %564 = vmatpush1.bf16.msra.mxu0 %v499
      %565 = vmatprep.subr.bf16.mxu0 %v502
      %566 = vmatpush1.bf16.msra.mxu0 %v501
      %567 = vmatprep.subr.bf16.mxu0 %v504
      %568 = vmatpush1.bf16.msra.mxu0 %v503
      %569 = vmatprep.subr.bf16.mxu0 %v506
      %570 = vmatpush1.bf16.msra.mxu0 %v505
      %571 = vmatprep.mubr.bf16.mxu0 %v376
      %572 = vmatmul.mubr.bf16.gmra.mrb[0].mxu0 %v375
      %v573 = vpop.f32.mrb[0].mxu0
      %v574 = vadd.f32 0.0, %v573
      %v575 = vpop.f32.mrb[0].mxu0
      %v576 = vadd.f32 0.0, %v575
      %v577 = vpop.f32.mrb[0].mxu0
      %v578 = vpop.f32.mrb[0].mxu0
      %579 = vdwg.mxu0
      %v581 = vunpack.c.l.b16 %v332
      %v582 = vunpack.c.h.b16 %v332
      %v583 = vpack.c.b16 %v581, %v581
      %v584 = vpack.c.b16 %v582, %v582
      %v619 = vunpack.c.l.b16 %v300
      %v620 = vunpack.c.h.b16 %v300
      %v621 = vunpack.c.l.b16 %v301
      %v622 = vunpack.c.h.b16 %v301
      %v623 = vunpack.c.l.b16 %v302
      %v624 = vunpack.c.h.b16 %v302
      %v625 = vunpack.c.l.b16 %v303
      %v626 = vunpack.c.h.b16 %v303
      %v627 = vunpack.c.l.b16 %v304
      %v628 = vunpack.c.h.b16 %v304
      %v629 = vunpack.c.l.b16 %v305
      %v630 = vunpack.c.h.b16 %v305
      %v631 = vunpack.c.l.b16 %v306
      %v632 = vunpack.c.h.b16 %v306
      %v633 = vunpack.c.l.b16 %v307
      %v634 = vunpack.c.h.b16 %v307
      %v635 = vunpack.c.l.b16 %v308
      %v636 = vunpack.c.h.b16 %v308
      %v637 = vunpack.c.l.b16 %v309
      %v638 = vunpack.c.h.b16 %v309
      %v639 = vunpack.c.l.b16 %v310
      %v640 = vunpack.c.h.b16 %v310
      %v641 = vunpack.c.l.b16 %v311
      %v642 = vunpack.c.h.b16 %v311
      %v643 = vunpack.c.l.b16 %v312
      %v644 = vunpack.c.h.b16 %v312
      %v645 = vunpack.c.l.b16 %v313
      %v646 = vunpack.c.h.b16 %v313
      %v647 = vunpack.c.l.b16 %v314
      %v648 = vunpack.c.h.b16 %v314
      %v649 = vunpack.c.l.b16 %v315
      %v650 = vunpack.c.h.b16 %v315
      %v651 = vunpack.c.l.b16 %v316
      %v652 = vunpack.c.h.b16 %v316
      %v653 = vunpack.c.l.b16 %v317
      %v654 = vunpack.c.h.b16 %v317
      %v655 = vunpack.c.l.b16 %v318
      %v656 = vunpack.c.h.b16 %v318
      %v657 = vunpack.c.l.b16 %v319
      %v658 = vunpack.c.h.b16 %v319
      %v659 = vunpack.c.l.b16 %v320
      %v660 = vunpack.c.h.b16 %v320
      %v661 = vunpack.c.l.b16 %v321
      %v662 = vunpack.c.h.b16 %v321
      %v663 = vunpack.c.l.b16 %v322
      %v664 = vunpack.c.h.b16 %v322
      %v665 = vunpack.c.l.b16 %v323
      %v666 = vunpack.c.h.b16 %v323
      %v667 = vunpack.c.l.b16 %v324
      %v668 = vunpack.c.h.b16 %v324
      %v669 = vunpack.c.l.b16 %v325
      %v670 = vunpack.c.h.b16 %v325
      %v671 = vunpack.c.l.b16 %v326
      %v672 = vunpack.c.h.b16 %v326
      %v673 = vunpack.c.l.b16 %v327
      %v674 = vunpack.c.h.b16 %v327
      %v675 = vunpack.c.l.b16 %v328
      %v676 = vunpack.c.h.b16 %v328
      %v677 = vunpack.c.l.b16 %v329
      %v678 = vunpack.c.h.b16 %v329
      %v679 = vunpack.c.l.b16 %v330
      %v680 = vunpack.c.h.b16 %v330
      %v681 = vunpack.c.l.b16 %v331
      %v682 = vunpack.c.h.b16 %v331
      %v683 = vpack.c.b16 %v621, %v619
      %v684 = vpack.c.b16 %v622, %v620
      %v685 = vpack.c.b16 %v625, %v623
      %v686 = vpack.c.b16 %v626, %v624
      %v687 = vpack.c.b16 %v629, %v627
      %v688 = vpack.c.b16 %v630, %v628
      %v689 = vpack.c.b16 %v633, %v631
      %v690 = vpack.c.b16 %v634, %v632
      %v691 = vpack.c.b16 %v637, %v635
      %v692 = vpack.c.b16 %v638, %v636
      %v693 = vpack.c.b16 %v641, %v639
      %v694 = vpack.c.b16 %v642, %v640
      %v695 = vpack.c.b16 %v645, %v643
      %v696 = vpack.c.b16 %v646, %v644
      %v697 = vpack.c.b16 %v649, %v647
      %v698 = vpack.c.b16 %v650, %v648
      %v699 = vpack.c.b16 %v653, %v651
      %v700 = vpack.c.b16 %v654, %v652
      %v701 = vpack.c.b16 %v657, %v655
      %v702 = vpack.c.b16 %v658, %v656
      %v703 = vpack.c.b16 %v661, %v659
      %v704 = vpack.c.b16 %v662, %v660
      %v705 = vpack.c.b16 %v665, %v663
      %v706 = vpack.c.b16 %v666, %v664
      %v707 = vpack.c.b16 %v669, %v667
      %v708 = vpack.c.b16 %v670, %v668
      %v709 = vpack.c.b16 %v673, %v671
      %v710 = vpack.c.b16 %v674, %v672
      %v711 = vpack.c.b16 %v677, %v675
      %v712 = vpack.c.b16 %v678, %v676
      %v713 = vpack.c.b16 %v681, %v679
      %v714 = vpack.c.b16 %v682, %v680
      %747 = vmatprep.subr.bf16.mxu0 %v684
      %748 = vmatpush1.bf16.msra.mxu0 %v683
      %749 = vmatprep.subr.bf16.mxu0 %v686
      %750 = vmatpush1.bf16.msra.mxu0 %v685
      %751 = vmatprep.subr.bf16.mxu0 %v688
      %752 = vmatpush1.bf16.msra.mxu0 %v687
      %753 = vmatprep.subr.bf16.mxu0 %v690
      %754 = vmatpush1.bf16.msra.mxu0 %v689
      %755 = vmatprep.subr.bf16.mxu0 %v692
      %756 = vmatpush1.bf16.msra.mxu0 %v691
      %757 = vmatprep.subr.bf16.mxu0 %v694
      %758 = vmatpush1.bf16.msra.mxu0 %v693
      %759 = vmatprep.subr.bf16.mxu0 %v696
      %760 = vmatpush1.bf16.msra.mxu0 %v695
      %761 = vmatprep.subr.bf16.mxu0 %v698
      %762 = vmatpush1.bf16.msra.mxu0 %v697
      %763 = vmatprep.subr.bf16.mxu0 %v700
      %764 = vmatpush1.bf16.msra.mxu0 %v699
      %765 = vmatprep.subr.bf16.mxu0 %v702
      %766 = vmatpush1.bf16.msra.mxu0 %v701
      %767 = vmatprep.subr.bf16.mxu0 %v704
      %768 = vmatpush1.bf16.msra.mxu0 %v703
      %769 = vmatprep.subr.bf16.mxu0 %v706
      %770 = vmatpush1.bf16.msra.mxu0 %v705
      %771 = vmatprep.subr.bf16.mxu0 %v708
      %772 = vmatpush1.bf16.msra.mxu0 %v707
      %773 = vmatprep.subr.bf16.mxu0 %v710
      %774 = vmatpush1.bf16.msra.mxu0 %v709
      %775 = vmatprep.subr.bf16.mxu0 %v712
      %776 = vmatpush1.bf16.msra.mxu0 %v711
      %777 = vmatprep.subr.bf16.mxu0 %v714
      %778 = vmatpush1.bf16.msra.mxu0 %v713
      %779 = vmatprep.mubr.bf16.mxu0 %v584
      %780 = vmatmul.mubr.bf16.gmra.mrb[0].mxu0 %v583
      %v781 = vpop.f32.mrb[0].mxu0
      %v782 = vadd.f32 %v574, %v781
      %v783 = vpop.f32.mrb[0].mxu0
      %v784 = vadd.f32 %v576, %v783
      %v785 = vpop.f32.mrb[0].mxu0
      %v786 = vpop.f32.mrb[0].mxu0
      %787 = vdwg.mxu0
      %v789 = vunpack.c.l.b16 %v336
      %v790 = vunpack.c.h.b16 %v336
      %v791 = vpack.c.b16 %v789, %v789
      %v792 = vpack.c.b16 %v790, %v790
      %795 = vmatprep.subr.bf16.mxu0 %v476
      %796 = vmatpush1.bf16.msra.mxu0 %v475
      %797 = vmatprep.subr.bf16.mxu0 %v478
      %798 = vmatpush1.bf16.msra.mxu0 %v477
      %799 = vmatprep.subr.bf16.mxu0 %v480
      %800 = vmatpush1.bf16.msra.mxu0 %v479
      %801 = vmatprep.subr.bf16.mxu0 %v482
      %802 = vmatpush1.bf16.msra.mxu0 %v481
      %803 = vmatprep.subr.bf16.mxu0 %v484
      %804 = vmatpush1.bf16.msra.mxu0 %v483
      %805 = vmatprep.subr.bf16.mxu0 %v486
      %806 = vmatpush1.bf16.msra.mxu0 %v485
      %807 = vmatprep.subr.bf16.mxu0 %v488
      %808 = vmatpush1.bf16.msra.mxu0 %v487
      %809 = vmatprep.subr.bf16.mxu0 %v490
      %810 = vmatpush1.bf16.msra.mxu0 %v489
      %811 = vmatprep.subr.bf16.mxu0 %v492
      %812 = vmatpush1.bf16.msra.mxu0 %v491
      %813 = vmatprep.subr.bf16.mxu0 %v494
      %814 = vmatpush1.bf16.msra.mxu0 %v493
      %815 = vmatprep.subr.bf16.mxu0 %v496
      %816 = vmatpush1.bf16.msra.mxu0 %v495
      %817 = vmatprep.subr.bf16.mxu0 %v498
      %818 = vmatpush1.bf16.msra.mxu0 %v497
      %819 = vmatprep.subr.bf16.mxu0 %v500
      %820 = vmatpush1.bf16.msra.mxu0 %v499
      %821 = vmatprep.subr.bf16.mxu0 %v502
      %822 = vmatpush1.bf16.msra.mxu0 %v501
      %823 = vmatprep.subr.bf16.mxu0 %v504
      %824 = vmatpush1.bf16.msra.mxu0 %v503
      %825 = vmatprep.subr.bf16.mxu0 %v506
      %826 = vmatpush1.bf16.msra.mxu0 %v505
      %827 = vmatprep.mubr.bf16.mxu0 %v792
      %828 = vmatmul.mubr.bf16.gmra.mrb[0].mxu0 %v791
      %v829 = vpop.f32.mrb[0].mxu0
      %v830 = vadd.f32 0.0, %v829
      %v831 = vpop.f32.mrb[0].mxu0
      %v832 = vadd.f32 0.0, %v831
      %v833 = vpop.f32.mrb[0].mxu0
      %v834 = vpop.f32.mrb[0].mxu0
      %835 = vdwg.mxu0
      %836 = vmatprep.subr.bf16.mxu0 %v684
      %837 = vmatpush1.bf16.msra.mxu0 %v683
      %838 = vmatprep.subr.bf16.mxu0 %v686
      %839 = vmatpush1.bf16.msra.mxu0 %v685
      %840 = vmatprep.subr.bf16.mxu0 %v688
      %841 = vmatpush1.bf16.msra.mxu0 %v687
      %842 = vmatprep.subr.bf16.mxu0 %v690
      %843 = vmatpush1.bf16.msra.mxu0 %v689
      %844 = vmatprep.subr.bf16.mxu0 %v692
      %845 = vmatpush1.bf16.msra.mxu0 %v691
      %846 = vmatprep.subr.bf16.mxu0 %v694
      %847 = vmatpush1.bf16.msra.mxu0 %v693
      %848 = vmatprep.subr.bf16.mxu0 %v696
      %849 = vmatpush1.bf16.msra.mxu0 %v695
      %850 = vmatprep.subr.bf16.mxu0 %v698
      %851 = vmatpush1.bf16.msra.mxu0 %v697
      %852 = vmatprep.subr.bf16.mxu0 %v700
      %853 = vmatpush1.bf16.msra.mxu0 %v699
      %854 = vmatprep.subr.bf16.mxu0 %v702
      %855 = vmatpush1.bf16.msra.mxu0 %v701
      %856 = vmatprep.subr.bf16.mxu0 %v704
      %857 = vmatpush1.bf16.msra.mxu0 %v703
      %858 = vmatprep.subr.bf16.mxu0 %v706
      %859 = vmatpush1.bf16.msra.mxu0 %v705
      %860 = vmatprep.subr.bf16.mxu0 %v708
      %861 = vmatpush1.bf16.msra.mxu0 %v707
      %862 = vmatprep.subr.bf16.mxu0 %v710
      %863 = vmatpush1.bf16.msra.mxu0 %v709
      %864 = vmatprep.subr.bf16.mxu0 %v712
      %865 = vmatpush1.bf16.msra.mxu0 %v711
      %866 = vmatprep.subr.bf16.mxu0 %v714
      %867 = vmatpush1.bf16.msra.mxu0 %v713
      %868 = vmatprep.mubr.bf16.mxu0 %v376
      %869 = vmatmul.mubr.bf16.gmra.mrb[0].mxu0 %v375
      %v870 = vpop.f32.mrb[0].mxu0
      %v871 = vadd.f32 %v830, %v870
      %v872 = vpop.f32.mrb[0].mxu0
      %v873 = vadd.f32 %v832, %v872
      %v874 = vpop.f32.mrb[0].mxu0
      %v875 = vpop.f32.mrb[0].mxu0
      %876 = vdwg.mxu0
      %v878 = vunpack.c.l.b16 %v338
      %v879 = vunpack.c.h.b16 %v338
      %v880 = vpack.c.b16 %v878, %v878
      %v881 = vpack.c.b16 %v879, %v879
      %884 = vmatprep.subr.bf16.mxu0 %v476
      %885 = vmatpush1.bf16.msra.mxu0 %v475
      %886 = vmatprep.subr.bf16.mxu0 %v478
      %887 = vmatpush1.bf16.msra.mxu0 %v477
      %888 = vmatprep.subr.bf16.mxu0 %v480
      %889 = vmatpush1.bf16.msra.mxu0 %v479
      %890 = vmatprep.subr.bf16.mxu0 %v482
      %891 = vmatpush1.bf16.msra.mxu0 %v481
      %892 = vmatprep.subr.bf16.mxu0 %v484
      %893 = vmatpush1.bf16.msra.mxu0 %v483
      %894 = vmatprep.subr.bf16.mxu0 %v486
      %895 = vmatpush1.bf16.msra.mxu0 %v485
      %896 = vmatprep.subr.bf16.mxu0 %v488
      %897 = vmatpush1.bf16.msra.mxu0 %v487
      %898 = vmatprep.subr.bf16.mxu0 %v490
      %899 = vmatpush1.bf16.msra.mxu0 %v489
      %900 = vmatprep.subr.bf16.mxu0 %v492
      %901 = vmatpush1.bf16.msra.mxu0 %v491
      %902 = vmatprep.subr.bf16.mxu0 %v494
      %903 = vmatpush1.bf16.msra.mxu0 %v493
      %904 = vmatprep.subr.bf16.mxu0 %v496
      %905 = vmatpush1.bf16.msra.mxu0 %v495
      %906 = vmatprep.subr.bf16.mxu0 %v498
      %907 = vmatpush1.bf16.msra.mxu0 %v497
      %908 = vmatprep.subr.bf16.mxu0 %v500
      %909 = vmatpush1.bf16.msra.mxu0 %v499
      %910 = vmatprep.subr.bf16.mxu0 %v502
      %911 = vmatpush1.bf16.msra.mxu0 %v501
      %912 = vmatprep.subr.bf16.mxu0 %v504
      %913 = vmatpush1.bf16.msra.mxu0 %v503
      %914 = vmatprep.subr.bf16.mxu0 %v506
      %915 = vmatpush1.bf16.msra.mxu0 %v505
      %916 = vmatprep.mubr.bf16.mxu0 %v881
      %917 = vmatmul.mubr.bf16.gmra.mrb[0].mxu0 %v880
      %v918 = vpop.f32.mrb[0].mxu0
      %v919 = vadd.f32 0.0, %v918
      %v920 = vpop.f32.mrb[0].mxu0
      %v921 = vadd.f32 0.0, %v920
      %v922 = vpop.f32.mrb[0].mxu0
      %v923 = vpop.f32.mrb[0].mxu0
      %924 = vdwg.mxu0
      %925 = vmatprep.subr.bf16.mxu0 %v684
      %926 = vmatpush1.bf16.msra.mxu0 %v683
      %927 = vmatprep.subr.bf16.mxu0 %v686
      %928 = vmatpush1.bf16.msra.mxu0 %v685
      %929 = vmatprep.subr.bf16.mxu0 %v688
      %930 = vmatpush1.bf16.msra.mxu0 %v687
      %931 = vmatprep.subr.bf16.mxu0 %v690
      %932 = vmatpush1.bf16.msra.mxu0 %v689
      %933 = vmatprep.subr.bf16.mxu0 %v692
      %934 = vmatpush1.bf16.msra.mxu0 %v691
      %935 = vmatprep.subr.bf16.mxu0 %v694
      %936 = vmatpush1.bf16.msra.mxu0 %v693
      %937 = vmatprep.subr.bf16.mxu0 %v696
      %938 = vmatpush1.bf16.msra.mxu0 %v695
      %939 = vmatprep.subr.bf16.mxu0 %v698
      %940 = vmatpush1.bf16.msra.mxu0 %v697
      %941 = vmatprep.subr.bf16.mxu0 %v700
      %942 = vmatpush1.bf16.msra.mxu0 %v699
      %943 = vmatprep.subr.bf16.mxu0 %v702
      %944 = vmatpush1.bf16.msra.mxu0 %v701
      %945 = vmatprep.subr.bf16.mxu0 %v704
      %946 = vmatpush1.bf16.msra.mxu0 %v703
      %947 = vmatprep.subr.bf16.mxu0 %v706
      %948 = vmatpush1.bf16.msra.mxu0 %v705
      %949 = vmatprep.subr.bf16.mxu0 %v708
      %950 = vmatpush1.bf16.msra.mxu0 %v707
      %951 = vmatprep.subr.bf16.mxu0 %v710
      %952 = vmatpush1.bf16.msra.mxu0 %v709
      %953 = vmatprep.subr.bf16.mxu0 %v712
      %954 = vmatpush1.bf16.msra.mxu0 %v711
      %955 = vmatprep.subr.bf16.mxu0 %v714
      %956 = vmatpush1.bf16.msra.mxu0 %v713
      %957 = vmatprep.mubr.bf16.mxu0 %v792
      %958 = vmatmul.mubr.bf16.gmra.mrb[0].mxu0 %v791
      %v959 = vpop.f32.mrb[0].mxu0
      %v960 = vadd.f32 %v919, %v959
      %v961 = vpop.f32.mrb[0].mxu0
      %v962 = vadd.f32 %v921, %v961
      %v963 = vpop.f32.mrb[0].mxu0
      %v964 = vpop.f32.mrb[0].mxu0
      %965 = vdwg.mxu0
      %v966 = vld [vmem:[%s272] sm:$0xff]
      %v967 = vld [vmem:[%s272 + $0x8] sm:$0x11]
      %v970 = vunpack.c.l.b16 %v966
      %v971 = vunpack.c.h.b16 %v966
      %v972 = vunpack.c.l.b16 %v967
      %v973 = vunpack.c.h.b16 %v967
      %v974 = vpack.c.b16 %v972, %v970
      %v975 = vpack.c.b16 %v973, %v971
      %v977 = vshrl.u32 %v974, 16
      %v979 = vshll.u32 %v974, 16
      %v981 = vrot.slane %v979, 1
      %v982 = vor.u32 %v977, %v981
      %v984 = vshrl.u32 %v975, 16
      %v986 = vshll.u32 %v975, 16
      %v988 = vrot.slane %v986, 1
      %v989 = vor.u32 %v984, %v988
      %992 = vmatprep.subr.bf16.mxu0 %v476
      %993 = vmatpush1.bf16.msra.mxu0 %v475
      %994 = vmatprep.subr.bf16.mxu0 %v478
      %995 = vmatpush1.bf16.msra.mxu0 %v477
      %996 = vmatprep.subr.bf16.mxu0 %v480
      %997 = vmatpush1.bf16.msra.mxu0 %v479
      %998 = vmatprep.subr.bf16.mxu0 %v482
      %999 = vmatpush1.bf16.msra.mxu0 %v481
      %1000 = vmatprep.subr.bf16.mxu0 %v484
      %1001 = vmatpush1.bf16.msra.mxu0 %v483
      %1002 = vmatprep.subr.bf16.mxu0 %v486
      %1003 = vmatpush1.bf16.msra.mxu0 %v485
      %1004 = vmatprep.subr.bf16.mxu0 %v488
      %1005 = vmatpush1.bf16.msra.mxu0 %v487
      %1006 = vmatprep.subr.bf16.mxu0 %v490
      %1007 = vmatpush1.bf16.msra.mxu0 %v489
      %1008 = vmatprep.subr.bf16.mxu0 %v492
      %1009 = vmatpush1.bf16.msra.mxu0 %v491
      %1010 = vmatprep.subr.bf16.mxu0 %v494
      %1011 = vmatpush1.bf16.msra.mxu0 %v493
      %1012 = vmatprep.subr.bf16.mxu0 %v496
      %1013 = vmatpush1.bf16.msra.mxu0 %v495
      %1014 = vmatprep.subr.bf16.mxu0 %v498
      %1015 = vmatpush1.bf16.msra.mxu0 %v497
      %1016 = vmatprep.subr.bf16.mxu0 %v500
      %1017 = vmatpush1.bf16.msra.mxu0 %v499
      %1018 = vmatprep.subr.bf16.mxu0 %v502
      %1019 = vmatpush1.bf16.msra.mxu0 %v501
      %1020 = vmatprep.subr.bf16.mxu0 %v504
      %1021 = vmatpush1.bf16.msra.mxu0 %v503
      %1022 = vmatprep.subr.bf16.mxu0 %v506
      %1023 = vmatpush1.bf16.msra.mxu0 %v505
      %1024 = vmatprep.mubr.bf16.mxu0 %v989
      %1025 = vmatmul.mubr.bf16.gmra.mrb[0].mxu0 %v982
      %v1026 = vpop.f32.mrb[0].mxu0
      %v1027 = vadd.f32 0.0, %v1026
      %v1028 = vpop.f32.mrb[0].mxu0
      %v1029 = vadd.f32 0.0, %v1028
      %v1030 = vpop.f32.mrb[0].mxu0
      %v1031 = vpop.f32.mrb[0].mxu0
      %1032 = vdwg.mxu0
      %1033 = vmatprep.subr.bf16.mxu0 %v684
      %1034 = vmatpush1.bf16.msra.mxu0 %v683
      %1035 = vmatprep.subr.bf16.mxu0 %v686
      %1036 = vmatpush1.bf16.msra.mxu0 %v685
      %1037 = vmatprep.subr.bf16.mxu0 %v688
      %1038 = vmatpush1.bf16.msra.mxu0 %v687
      %1039 = vmatprep.subr.bf16.mxu0 %v690
      %1040 = vmatpush1.bf16.msra.mxu0 %v689
      %1041 = vmatprep.subr.bf16.mxu0 %v692
      %1042 = vmatpush1.bf16.msra.mxu0 %v691
      %1043 = vmatprep.subr.bf16.mxu0 %v694
      %1044 = vmatpush1.bf16.msra.mxu0 %v693
      %1045 = vmatprep.subr.bf16.mxu0 %v696
      %1046 = vmatpush1.bf16.msra.mxu0 %v695
      %1047 = vmatprep.subr.bf16.mxu0 %v698
      %1048 = vmatpush1.bf16.msra.mxu0 %v697
      %1049 = vmatprep.subr.bf16.mxu0 %v700
      %1050 = vmatpush1.bf16.msra.mxu0 %v699
      %1051 = vmatprep.subr.bf16.mxu0 %v702
      %1052 = vmatpush1.bf16.msra.mxu0 %v701
      %1053 = vmatprep.subr.bf16.mxu0 %v704
      %1054 = vmatpush1.bf16.msra.mxu0 %v703
      %1055 = vmatprep.subr.bf16.mxu0 %v706
      %1056 = vmatpush1.bf16.msra.mxu0 %v705
      %1057 = vmatprep.subr.bf16.mxu0 %v708
      %1058 = vmatpush1.bf16.msra.mxu0 %v707
      %1059 = vmatprep.subr.bf16.mxu0 %v710
      %1060 = vmatpush1.bf16.msra.mxu0 %v709
      %1061 = vmatprep.subr.bf16.mxu0 %v712
      %1062 = vmatpush1.bf16.msra.mxu0 %v711
      %1063 = vmatprep.subr.bf16.mxu0 %v714
      %1064 = vmatpush1.bf16.msra.mxu0 %v713
      %1065 = vmatprep.mubr.bf16.mxu0 %v881
      %1066 = vmatmul.mubr.bf16.gmra.mrb[0].mxu0 %v880
      %v1067 = vpop.f32.mrb[0].mxu0
      %v1068 = vadd.f32 %v1027, %v1067
      %v1069 = vpop.f32.mrb[0].mxu0
      %v1070 = vadd.f32 %v1029, %v1069
      %v1071 = vpop.f32.mrb[0].mxu0
      %v1072 = vpop.f32.mrb[0].mxu0
      %1073 = vdwg.mxu0
      %s1074 = scalar_lea.vmem %s1, 512
      %v1075 = vld [vmem:[%s1074] sm:$0xff]
      %v1076 = vld [vmem:[%s1074 + $0x8] sm:$0xff]
      %v1077 = vld [vmem:[%s1074 + $0x10] sm:$0xff]
      %v1078 = vld [vmem:[%s1074 + $0x18] sm:$0xff]
      %v1079 = vld [vmem:[%s1074 + $0x20] sm:$0xff]
      %v1080 = vld [vmem:[%s1074 + $0x28] sm:$0xff]
      %v1081 = vld [vmem:[%s1074 + $0x30] sm:$0xff]
      %v1082 = vld [vmem:[%s1074 + $0x38] sm:$0xff]
      %v1083 = vld [vmem:[%s1074 + $0x40] sm:$0xff]
      %v1084 = vld [vmem:[%s1074 + $0x48] sm:$0xff]
      %v1085 = vld [vmem:[%s1074 + $0x50] sm:$0xff]
      %v1086 = vld [vmem:[%s1074 + $0x58] sm:$0xff]
      %v1087 = vld [vmem:[%s1074 + $0x60] sm:$0xff]
      %v1088 = vld [vmem:[%s1074 + $0x68] sm:$0xff]
      %v1089 = vld [vmem:[%s1074 + $0x70] sm:$0xff]
      %v1090 = vld [vmem:[%s1074 + $0x78] sm:$0xff]
      %v1091 = vld [vmem:[%s1074 + $0x80] sm:$0xff]
      %v1092 = vld [vmem:[%s1074 + $0x88] sm:$0xff]
      %v1093 = vld [vmem:[%s1074 + $0x90] sm:$0xff]
      %v1094 = vld [vmem:[%s1074 + $0x98] sm:$0xff]
      %v1095 = vld [vmem:[%s1074 + $0xa0] sm:$0xff]
      %v1096 = vld [vmem:[%s1074 + $0xa8] sm:$0xff]
      %v1097 = vld [vmem:[%s1074 + $0xb0] sm:$0xff]
      %v1098 = vld [vmem:[%s1074 + $0xb8] sm:$0xff]
      %v1099 = vld [vmem:[%s1074 + $0xc0] sm:$0xff]
      %v1100 = vld [vmem:[%s1074 + $0xc8] sm:$0xff]
      %v1101 = vld [vmem:[%s1074 + $0xd0] sm:$0xff]
      %v1102 = vld [vmem:[%s1074 + $0xd8] sm:$0xff]
      %v1103 = vld [vmem:[%s1074 + $0xe0] sm:$0xff]
      %v1104 = vld [vmem:[%s1074 + $0xe8] sm:$0xff]
      %v1105 = vld [vmem:[%s1074 + $0xf0] sm:$0xff]
      %v1106 = vld [vmem:[%s1074 + $0xf8] sm:$0xff]
      %v1139 = vunpack.c.l.b16 %v1075
      %v1140 = vunpack.c.h.b16 %v1075
      %v1141 = vunpack.c.l.b16 %v1076
      %v1142 = vunpack.c.h.b16 %v1076
      %v1143 = vunpack.c.l.b16 %v1077
      %v1144 = vunpack.c.h.b16 %v1077
      %v1145 = vunpack.c.l.b16 %v1078
      %v1146 = vunpack.c.h.b16 %v1078
      %v1147 = vunpack.c.l.b16 %v1079
      %v1148 = vunpack.c.h.b16 %v1079
      %v1149 = vunpack.c.l.b16 %v1080
      %v1150 = vunpack.c.h.b16 %v1080
      %v1151 = vunpack.c.l.b16 %v1081
      %v1152 = vunpack.c.h.b16 %v1081
      %v1153 = vunpack.c.l.b16 %v1082
      %v1154 = vunpack.c.h.b16 %v1082
      %v1155 = vunpack.c.l.b16 %v1083
      %v1156 = vunpack.c.h.b16 %v1083
      %v1157 = vunpack.c.l.b16 %v1084
      %v1158 = vunpack.c.h.b16 %v1084
      %v1159 = vunpack.c.l.b16 %v1085
      %v1160 = vunpack.c.h.b16 %v1085
      %v1161 = vunpack.c.l.b16 %v1086
      %v1162 = vunpack.c.h.b16 %v1086
      %v1163 = vunpack.c.l.b16 %v1087
      %v1164 = vunpack.c.h.b16 %v1087
      %v1165 = vunpack.c.l.b16 %v1088
      %v1166 = vunpack.c.h.b16 %v1088
      %v1167 = vunpack.c.l.b16 %v1089
      %v1168 = vunpack.c.h.b16 %v1089
      %v1169 = vunpack.c.l.b16 %v1090
      %v1170 = vunpack.c.h.b16 %v1090
      %v1171 = vunpack.c.l.b16 %v1091
      %v1172 = vunpack.c.h.b16 %v1091
      %v1173 = vunpack.c.l.b16 %v1092
      %v1174 = vunpack.c.h.b16 %v1092
      %v1175 = vunpack.c.l.b16 %v1093
      %v1176 = vunpack.c.h.b16 %v1093
      %v1177 = vunpack.c.l.b16 %v1094
      %v1178 = vunpack.c.h.b16 %v1094
      %v1179 = vunpack.c.l.b16 %v1095
      %v1180 = vunpack.c.h.b16 %v1095
      %v1181 = vunpack.c.l.b16 %v1096
      %v1182 = vunpack.c.h.b16 %v1096
      %v1183 = vunpack.c.l.b16 %v1097
      %v1184 = vunpack.c.h.b16 %v1097
      %v1185 = vunpack.c.l.b16 %v1098
      %v1186 = vunpack.c.h.b16 %v1098
      %v1187 = vunpack.c.l.b16 %v1099
      %v1188 = vunpack.c.h.b16 %v1099
      %v1189 = vunpack.c.l.b16 %v1100
      %v1190 = vunpack.c.h.b16 %v1100
      %v1191 = vunpack.c.l.b16 %v1101
      %v1192 = vunpack.c.h.b16 %v1101
      %v1193 = vunpack.c.l.b16 %v1102
      %v1194 = vunpack.c.h.b16 %v1102
      %v1195 = vunpack.c.l.b16 %v1103
      %v1196 = vunpack.c.h.b16 %v1103
      %v1197 = vunpack.c.l.b16 %v1104
      %v1198 = vunpack.c.h.b16 %v1104
      %v1199 = vunpack.c.l.b16 %v1105
      %v1200 = vunpack.c.h.b16 %v1105
      %v1201 = vunpack.c.l.b16 %v1106
      %v1202 = vunpack.c.h.b16 %v1106
      %v1203 = vpack.c.b16 %v1141, %v1139
      %v1204 = vpack.c.b16 %v1142, %v1140
      %v1205 = vpack.c.b16 %v1145, %v1143
      %v1206 = vpack.c.b16 %v1146, %v1144
      %v1207 = vpack.c.b16 %v1149, %v1147
      %v1208 = vpack.c.b16 %v1150, %v1148
      %v1209 = vpack.c.b16 %v1153, %v1151
      %v1210 = vpack.c.b16 %v1154, %v1152
      %v1211 = vpack.c.b16 %v1157, %v1155
      %v1212 = vpack.c.b16 %v1158, %v1156
      %v1213 = vpack.c.b16 %v1161, %v1159
      %v1214 = vpack.c.b16 %v1162, %v1160
      %v1215 = vpack.c.b16 %v1165, %v1163
      %v1216 = vpack.c.b16 %v1166, %v1164
      %v1217 = vpack.c.b16 %v1169, %v1167
      %v1218 = vpack.c.b16 %v1170, %v1168
      %v1219 = vpack.c.b16 %v1173, %v1171
      %v1220 = vpack.c.b16 %v1174, %v1172
      %v1221 = vpack.c.b16 %v1177, %v1175
      %v1222 = vpack.c.b16 %v1178, %v1176
      %v1223 = vpack.c.b16 %v1181, %v1179
      %v1224 = vpack.c.b16 %v1182, %v1180
      %v1225 = vpack.c.b16 %v1185, %v1183
      %v1226 = vpack.c.b16 %v1186, %v1184
      %v1227 = vpack.c.b16 %v1189, %v1187
      %v1228 = vpack.c.b16 %v1190, %v1188
      %v1229 = vpack.c.b16 %v1193, %v1191
      %v1230 = vpack.c.b16 %v1194, %v1192
      %v1231 = vpack.c.b16 %v1197, %v1195
      %v1232 = vpack.c.b16 %v1198, %v1196
      %v1233 = vpack.c.b16 %v1201, %v1199
      %v1234 = vpack.c.b16 %v1202, %v1200
      %1267 = vmatprep.subr.bf16.mxu0 %v1204
      %1268 = vmatpush1.bf16.msra.mxu0 %v1203
      %1269 = vmatprep.subr.bf16.mxu0 %v1206
      %1270 = vmatpush1.bf16.msra.mxu0 %v1205
      %1271 = vmatprep.subr.bf16.mxu0 %v1208
      %1272 = vmatpush1.bf16.msra.mxu0 %v1207
      %1273 = vmatprep.subr.bf16.mxu0 %v1210
      %1274 = vmatpush1.bf16.msra.mxu0 %v1209
      %1275 = vmatprep.subr.bf16.mxu0 %v1212
      %1276 = vmatpush1.bf16.msra.mxu0 %v1211
      %1277 = vmatprep.subr.bf16.mxu0 %v1214
      %1278 = vmatpush1.bf16.msra.mxu0 %v1213
      %1279 = vmatprep.subr.bf16.mxu0 %v1216
      %1280 = vmatpush1.bf16.msra.mxu0 %v1215
      %1281 = vmatprep.subr.bf16.mxu0 %v1218
      %1282 = vmatpush1.bf16.msra.mxu0 %v1217
      %1283 = vmatprep.subr.bf16.mxu0 %v1220
      %1284 = vmatpush1.bf16.msra.mxu0 %v1219
      %1285 = vmatprep.subr.bf16.mxu0 %v1222
      %1286 = vmatpush1.bf16.msra.mxu0 %v1221
      %1287 = vmatprep.subr.bf16.mxu0 %v1224
      %1288 = vmatpush1.bf16.msra.mxu0 %v1223
      %1289 = vmatprep.subr.bf16.mxu0 %v1226
      %1290 = vmatpush1.bf16.msra.mxu0 %v1225
      %1291 = vmatprep.subr.bf16.mxu0 %v1228
      %1292 = vmatpush1.bf16.msra.mxu0 %v1227
      %1293 = vmatprep.subr.bf16.mxu0 %v1230
      %1294 = vmatpush1.bf16.msra.mxu0 %v1229
      %1295 = vmatprep.subr.bf16.mxu0 %v1232
      %1296 = vmatpush1.bf16.msra.mxu0 %v1231
      %1297 = vmatprep.subr.bf16.mxu0 %v1234
      %1298 = vmatpush1.bf16.msra.mxu0 %v1233
      %1299 = vmatprep.mubr.bf16.mxu0 %v792
      %1300 = vmatmul.mubr.bf16.gmra.mrb[0].mxu0 %v791
      %v1301 = vpop.f32.mrb[0].mxu0
      %v1302 = vadd.f32 0.0, %v1301
      %v1303 = vpop.f32.mrb[0].mxu0
      %v1304 = vadd.f32 0.0, %v1303
      %v1305 = vpop.f32.mrb[0].mxu0
      %v1306 = vpop.f32.mrb[0].mxu0
      %1307 = vdwg.mxu0
      %v1308 = vadd.f32 %v782, %v1302
      %v1309 = vadd.f32 %v784, %v1304
      %1310 = vmatprep.subr.bf16.mxu0 %v1204
      %1311 = vmatpush1.bf16.msra.mxu0 %v1203
      %1312 = vmatprep.subr.bf16.mxu0 %v1206
      %1313 = vmatpush1.bf16.msra.mxu0 %v1205
      %1314 = vmatprep.subr.bf16.mxu0 %v1208
      %1315 = vmatpush1.bf16.msra.mxu0 %v1207
      %1316 = vmatprep.subr.bf16.mxu0 %v1210
      %1317 = vmatpush1.bf16.msra.mxu0 %v1209
      %1318 = vmatprep.subr.bf16.mxu0 %v1212
      %1319 = vmatpush1.bf16.msra.mxu0 %v1211
      %1320 = vmatprep.subr.bf16.mxu0 %v1214
      %1321 = vmatpush1.bf16.msra.mxu0 %v1213
      %1322 = vmatprep.subr.bf16.mxu0 %v1216
      %1323 = vmatpush1.bf16.msra.mxu0 %v1215
      %1324 = vmatprep.subr.bf16.mxu0 %v1218
      %1325 = vmatpush1.bf16.msra.mxu0 %v1217
      %1326 = vmatprep.subr.bf16.mxu0 %v1220
      %1327 = vmatpush1.bf16.msra.mxu0 %v1219
      %1328 = vmatprep.subr.bf16.mxu0 %v1222
      %1329 = vmatpush1.bf16.msra.mxu0 %v1221
      %1330 = vmatprep.subr.bf16.mxu0 %v1224
      %1331 = vmatpush1.bf16.msra.mxu0 %v1223
      %1332 = vmatprep.subr.bf16.mxu0 %v1226
      %1333 = vmatpush1.bf16.msra.mxu0 %v1225
      %1334 = vmatprep.subr.bf16.mxu0 %v1228
      %1335 = vmatpush1.bf16.msra.mxu0 %v1227
      %1336 = vmatprep.subr.bf16.mxu0 %v1230
      %1337 = vmatpush1.bf16.msra.mxu0 %v1229
      %1338 = vmatprep.subr.bf16.mxu0 %v1232
      %1339 = vmatpush1.bf16.msra.mxu0 %v1231
      %1340 = vmatprep.subr.bf16.mxu0 %v1234
      %1341 = vmatpush1.bf16.msra.mxu0 %v1233
      %1342 = vmatprep.mubr.bf16.mxu0 %v881
      %1343 = vmatmul.mubr.bf16.gmra.mrb[0].mxu0 %v880
      %v1344 = vpop.f32.mrb[0].mxu0
      %v1345 = vadd.f32 0.0, %v1344
      %v1346 = vpop.f32.mrb[0].mxu0
      %v1347 = vadd.f32 0.0, %v1346
      %v1348 = vpop.f32.mrb[0].mxu0
      %v1349 = vpop.f32.mrb[0].mxu0
      %1350 = vdwg.mxu0
      %v1351 = vadd.f32 %v871, %v1345
      %v1352 = vadd.f32 %v873, %v1347
      %1353 = vmatprep.subr.bf16.mxu0 %v1204
      %1354 = vmatpush1.bf16.msra.mxu0 %v1203
      %1355 = vmatprep.subr.bf16.mxu0 %v1206
      %1356 = vmatpush1.bf16.msra.mxu0 %v1205
      %1357 = vmatprep.subr.bf16.mxu0 %v1208
      %1358 = vmatpush1.bf16.msra.mxu0 %v1207
      %1359 = vmatprep.subr.bf16.mxu0 %v1210
      %1360 = vmatpush1.bf16.msra.mxu0 %v1209
      %1361 = vmatprep.subr.bf16.mxu0 %v1212
      %1362 = vmatpush1.bf16.msra.mxu0 %v1211
      %1363 = vmatprep.subr.bf16.mxu0 %v1214
      %1364 = vmatpush1.bf16.msra.mxu0 %v1213
      %1365 = vmatprep.subr.bf16.mxu0 %v1216
      %1366 = vmatpush1.bf16.msra.mxu0 %v1215
      %1367 = vmatprep.subr.bf16.mxu0 %v1218
      %1368 = vmatpush1.bf16.msra.mxu0 %v1217
      %1369 = vmatprep.subr.bf16.mxu0 %v1220
      %1370 = vmatpush1.bf16.msra.mxu0 %v1219
      %1371 = vmatprep.subr.bf16.mxu0 %v1222
      %1372 = vmatpush1.bf16.msra.mxu0 %v1221
      %1373 = vmatprep.subr.bf16.mxu0 %v1224
      %1374 = vmatpush1.bf16.msra.mxu0 %v1223
      %1375 = vmatprep.subr.bf16.mxu0 %v1226
      %1376 = vmatpush1.bf16.msra.mxu0 %v1225
      %1377 = vmatprep.subr.bf16.mxu0 %v1228
      %1378 = vmatpush1.bf16.msra.mxu0 %v1227
      %1379 = vmatprep.subr.bf16.mxu0 %v1230
      %1380 = vmatpush1.bf16.msra.mxu0 %v1229
      %1381 = vmatprep.subr.bf16.mxu0 %v1232
      %1382 = vmatpush1.bf16.msra.mxu0 %v1231
      %1383 = vmatprep.subr.bf16.mxu0 %v1234
      %1384 = vmatpush1.bf16.msra.mxu0 %v1233
      %1385 = vmatprep.mubr.bf16.mxu0 %v989
      %1386 = vmatmul.mubr.bf16.gmra.mrb[0].mxu0 %v982
      %v1387 = vpop.f32.mrb[0].mxu0
      %v1388 = vadd.f32 0.0, %v1387
      %v1389 = vpop.f32.mrb[0].mxu0
      %v1390 = vadd.f32 0.0, %v1389
      %v1391 = vpop.f32.mrb[0].mxu0
      %v1392 = vpop.f32.mrb[0].mxu0
      %1393 = vdwg.mxu0
      %v1394 = vadd.f32 %v960, %v1388
      %v1395 = vadd.f32 %v962, %v1390
      %v1396 = vld [vmem:[%s333] sm:$0xff]
      %v1397 = vld [vmem:[%s333 + $0x8] sm:$0x11]
      %v1400 = vunpack.c.l.b16 %v1396
      %v1401 = vunpack.c.h.b16 %v1396
      %v1402 = vunpack.c.l.b16 %v1397
      %v1403 = vunpack.c.h.b16 %v1397
      %v1404 = vpack.c.b16 %v1402, %v1400
      %v1405 = vpack.c.b16 %v1403, %v1401
      %v1407 = vshrl.u32 %v1404, 16
      %v1409 = vshll.u32 %v1404, 16
      %v1411 = vrot.slane %v1409, 1
      %v1412 = vor.u32 %v1407, %v1411
      %v1414 = vshrl.u32 %v1405, 16
      %v1416 = vshll.u32 %v1405, 16
      %v1418 = vrot.slane %v1416, 1
      %v1419 = vor.u32 %v1414, %v1418
      %1422 = vmatprep.subr.bf16.mxu0 %v1204
      %1423 = vmatpush1.bf16.msra.mxu0 %v1203
      %1424 = vmatprep.subr.bf16.mxu0 %v1206
      %1425 = vmatpush1.bf16.msra.mxu0 %v1205
      %1426 = vmatprep.subr.bf16.mxu0 %v1208
      %1427 = vmatpush1.bf16.msra.mxu0 %v1207
      %1428 = vmatprep.subr.bf16.mxu0 %v1210
      %1429 = vmatpush1.bf16.msra.mxu0 %v1209
      %1430 = vmatprep.subr.bf16.mxu0 %v1212
      %1431 = vmatpush1.bf16.msra.mxu0 %v1211
      %1432 = vmatprep.subr.bf16.mxu0 %v1214
      %1433 = vmatpush1.bf16.msra.mxu0 %v1213
      %1434 = vmatprep.subr.bf16.mxu0 %v1216
      %1435 = vmatpush1.bf16.msra.mxu0 %v1215
      %1436 = vmatprep.subr.bf16.mxu0 %v1218
      %1437 = vmatpush1.bf16.msra.mxu0 %v1217
      %1438 = vmatprep.subr.bf16.mxu0 %v1220
      %1439 = vmatpush1.bf16.msra.mxu0 %v1219
      %1440 = vmatprep.subr.bf16.mxu0 %v1222
      %1441 = vmatpush1.bf16.msra.mxu0 %v1221
      %1442 = vmatprep.subr.bf16.mxu0 %v1224
      %1443 = vmatpush1.bf16.msra.mxu0 %v1223
      %1444 = vmatprep.subr.bf16.mxu0 %v1226
      %1445 = vmatpush1.bf16.msra.mxu0 %v1225
      %1446 = vmatprep.subr.bf16.mxu0 %v1228
      %1447 = vmatpush1.bf16.msra.mxu0 %v1227
      %1448 = vmatprep.subr.bf16.mxu0 %v1230
      %1449 = vmatpush1.bf16.msra.mxu0 %v1229
      %1450 = vmatprep.subr.bf16.mxu0 %v1232
      %1451 = vmatpush1.bf16.msra.mxu0 %v1231
      %1452 = vmatprep.subr.bf16.mxu0 %v1234
      %1453 = vmatpush1.bf16.msra.mxu0 %v1233
      %1454 = vmatprep.mubr.bf16.mxu0 %v1419
      %1455 = vmatmul.mubr.bf16.gmra.mrb[0].mxu0 %v1412
      %v1456 = vpop.f32.mrb[0].mxu0
      %v1457 = vadd.f32 0.0, %v1456
      %v1458 = vpop.f32.mrb[0].mxu0
      %v1459 = vadd.f32 0.0, %v1458
      %v1460 = vpop.f32.mrb[0].mxu0
      %v1461 = vpop.f32.mrb[0].mxu0
      %1462 = vdwg.mxu0
      %v1463 = vadd.f32 %v1068, %v1457
      %v1464 = vadd.f32 %v1070, %v1459
      %v1465 = vld [vmem:[%s2] sm:$0x3]
      %v1467 = vlaneseq
      %v1468 = vshrl.u32 %v1467, 7
      %v1469 = vsub.s32 0, %v1468
      %v1470 = vrot.slane %v1465, %v1469
      %v1471 = vlaneseq
      %v1472 = vshrl.u32 %v1471, 7
      %v1473 = vsub.s32 1, %v1472
      %v1474 = vrot.slane %v1465, %v1473
      %v1477 = vadd.f32 %v1308, %v1470
      %v1478 = vadd.f32 %v1309, %v1474
      %vm1479 = vcmp.gt.f32.partialorder %v1477, 0.0
      %vm1480 = vcmp.gt.f32.partialorder %v1478, 0.0
      %v1481 = vmul.f32 %v1477, 0.2
      %v1482 = vmul.f32 %v1478, 0.2
      %v1483 = vsel %vm1479, %v1477, %v1481
      %v1484 = vsel %vm1480, %v1478, %v1482
      %1485 = vst [vmem:[%s287] sm:$0xff] %v1483
      %1486 = vst [vmem:[%s287 + $0x8] sm:$0xff] %v1484
      %v1487 = vld [vmem:[%s2] sm:$0x3]
      %v1489 = vlaneseq
      %v1490 = vshrl.u32 %v1489, 7
      %v1491 = vsub.s32 0, %v1490
      %v1492 = vrot.slane %v1487, %v1491
      %v1493 = vlaneseq
      %v1494 = vshrl.u32 %v1493, 7
      %v1495 = vsub.s32 1, %v1494
      %v1496 = vrot.slane %v1487, %v1495
      %v1499 = vadd.f32 %v1351, %v1492
      %v1500 = vadd.f32 %v1352, %v1496
      %vm1501 = vcmp.gt.f32.partialorder %v1499, 0.0
      %vm1502 = vcmp.gt.f32.partialorder %v1500, 0.0
      %v1503 = vmul.f32 %v1499, 0.2
      %v1504 = vmul.f32 %v1500, 0.2
      %v1505 = vsel %vm1501, %v1499, %v1503
      %v1506 = vsel %vm1502, %v1500, %v1504
      %1507 = vst [vmem:[%s291] sm:$0xff] %v1505
      %1508 = vst [vmem:[%s291 + $0x8] sm:$0xff] %v1506
      %v1509 = vld [vmem:[%s2] sm:$0x3]
      %v1511 = vlaneseq
      %v1512 = vshrl.u32 %v1511, 7
      %v1513 = vsub.s32 0, %v1512
      %v1514 = vrot.slane %v1509, %v1513
      %v1515 = vlaneseq
      %v1516 = vshrl.u32 %v1515, 7
      %v1517 = vsub.s32 1, %v1516
      %v1518 = vrot.slane %v1509, %v1517
      %v1521 = vadd.f32 %v1394, %v1514
      %v1522 = vadd.f32 %v1395, %v1518
      %vm1523 = vcmp.gt.f32.partialorder %v1521, 0.0
      %vm1524 = vcmp.gt.f32.partialorder %v1522, 0.0
      %v1525 = vmul.f32 %v1521, 0.2
      %v1526 = vmul.f32 %v1522, 0.2
      %v1527 = vsel %vm1523, %v1521, %v1525
      %v1528 = vsel %vm1524, %v1522, %v1526
      %v1531 = vrot.slane %v1527, 7
      %v1532 = vrot.slane %v1528, 7
      %1535 = vst [vmem:[#allocation2] sm:$0xfe] %v1531
      %1536 = vst [vmem:[#allocation2 + $0x8] sm:$0xfe] %v1532
      %1537 = vst [vmem:[#allocation2 + $0x10] sm:$0x1] %v1531
      %1538 = vst [vmem:[#allocation2 + $0x18] sm:$0x1] %v1532
      %v1539 = vld [vmem:[%s2] sm:$0x3]
      %v1541 = vlaneseq
      %v1542 = vshrl.u32 %v1541, 7
      %v1543 = vsub.s32 0, %v1542
      %v1544 = vrot.slane %v1539, %v1543
      %v1545 = vlaneseq
      %v1546 = vshrl.u32 %v1545, 7
      %v1547 = vsub.s32 1, %v1546
      %v1548 = vrot.slane %v1539, %v1547
      %v1551 = vadd.f32 %v1463, %v1544
      %v1552 = vadd.f32 %v1464, %v1548
      %vm1553 = vcmp.gt.f32.partialorder %v1551, 0.0
      %vm1554 = vcmp.gt.f32.partialorder %v1552, 0.0
      %v1555 = vmul.f32 %v1551, 0.2
      %v1556 = vmul.f32 %v1552, 0.2
      %v1557 = vsel %vm1553, %v1551, %v1555
      %v1558 = vsel %vm1554, %v1552, %v1556
      %v1561 = vrot.slane %v1557, 7
      %v1562 = vrot.slane %v1558, 7
      %1565 = vst [vmem:[%s284] sm:$0xfe] %v1561
      %1566 = vst [vmem:[%s284 + $0x8] sm:$0xfe] %v1562
      %1567 = vst [vmem:[%s284 + $0x10] sm:$0x1] %v1561
      %1568 = vst [vmem:[%s284 + $0x18] sm:$0x1] %v1562
      %v1569 = vld [vmem:[%s3] sm:$0xf]
      %v1570 = vld [vmem:[%s3 + $0x4] sm:$0xf]
      %v1571 = vld [vmem:[%s3 + $0x8] sm:$0xf]
      %v1572 = vld [vmem:[%s3 + $0xc] sm:$0xf]
      %v1573 = vld [vmem:[%s3 + $0x10] sm:$0xf]
      %v1574 = vld [vmem:[%s3 + $0x14] sm:$0xf]
      %v1575 = vld [vmem:[%s3 + $0x18] sm:$0xf]
      %v1576 = vld [vmem:[%s3 + $0x1c] sm:$0xf]
      %v1577 = vld [vmem:[%s3 + $0x20] sm:$0xf]
      %v1578 = vld [vmem:[%s3 + $0x24] sm:$0xf]
      %v1579 = vld [vmem:[%s3 + $0x28] sm:$0xf]
      %v1580 = vld [vmem:[%s3 + $0x2c] sm:$0xf]
      %v1581 = vld [vmem:[%s3 + $0x30] sm:$0xf]
      %v1582 = vld [vmem:[%s3 + $0x34] sm:$0xf]
      %v1583 = vld [vmem:[%s3 + $0x38] sm:$0xf]
      %v1584 = vld [vmem:[%s3 + $0x3c] sm:$0xf]
      %v1585 = vld [vmem:[%s3 + $0x40] sm:$0xf]
      %v1586 = vld [vmem:[%s3 + $0x44] sm:$0xf]
      %v1587 = vld [vmem:[%s3 + $0x48] sm:$0xf]
      %v1588 = vld [vmem:[%s3 + $0x4c] sm:$0xf]
      %v1589 = vld [vmem:[%s3 + $0x50] sm:$0xf]
      %v1590 = vld [vmem:[%s3 + $0x54] sm:$0xf]
      %v1591 = vld [vmem:[%s3 + $0x58] sm:$0xf]
      %v1592 = vld [vmem:[%s3 + $0x5c] sm:$0xf]
      %v1593 = vld [vmem:[%s3 + $0x60] sm:$0xf]
      %v1594 = vld [vmem:[%s3 + $0x64] sm:$0xf]
      %v1595 = vld [vmem:[%s3 + $0x68] sm:$0xf]
      %v1596 = vld [vmem:[%s3 + $0x6c] sm:$0xf]
      %v1597 = vld [vmem:[%s3 + $0x70] sm:$0xf]
      %v1598 = vld [vmem:[%s3 + $0x74] sm:$0xf]
      %v1599 = vld [vmem:[%s3 + $0x78] sm:$0xf]
      %v1600 = vld [vmem:[%s3 + $0x7c] sm:$0xf]
      %v1601 = vld [vmem:[#allocation2] sm:$0xff]
      %v1602 = vld [vmem:[#allocation2 + $0x8] sm:$0xff]
      %v1603 = vpack.c.bf16 %v1601, %v1601
      %v1604 = vpack.c.bf16 %v1602, %v1602
      %v1605 = vld [vmem:[%s287] sm:$0xff]
      %v1606 = vld [vmem:[%s287 + $0x8] sm:$0xff]
      %v1607 = vpack.c.bf16 %v1605, %v1605
      %v1608 = vpack.c.bf16 %v1606, %v1606
      %s1609 = scalar_lea.vmem %s3, 128
      %v1610 = vld [vmem:[%s1609] sm:$0xf]
      %v1611 = vld [vmem:[%s1609 + $0x4] sm:$0xf]
      %v1612 = vld [vmem:[%s1609 + $0x8] sm:$0xf]
      %v1613 = vld [vmem:[%s1609 + $0xc] sm:$0xf]
      %v1614 = vld [vmem:[%s1609 + $0x10] sm:$0xf]
      %v1615 = vld [vmem:[%s1609 + $0x14] sm:$0xf]
      %v1616 = vld [vmem:[%s1609 + $0x18] sm:$0xf]
      %v1617 = vld [vmem:[%s1609 + $0x1c] sm:$0xf]
      %v1618 = vld [vmem:[%s1609 + $0x20] sm:$0xf]
      %v1619 = vld [vmem:[%s1609 + $0x24] sm:$0xf]
      %v1620 = vld [vmem:[%s1609 + $0x28] sm:$0xf]
      %v1621 = vld [vmem:[%s1609 + $0x2c] sm:$0xf]
      %v1622 = vld [vmem:[%s1609 + $0x30] sm:$0xf]
      %v1623 = vld [vmem:[%s1609 + $0x34] sm:$0xf]
      %v1624 = vld [vmem:[%s1609 + $0x38] sm:$0xf]
      %v1625 = vld [vmem:[%s1609 + $0x3c] sm:$0xf]
      %v1626 = vld [vmem:[%s1609 + $0x40] sm:$0xf]
      %v1627 = vld [vmem:[%s1609 + $0x44] sm:$0xf]
      %v1628 = vld [vmem:[%s1609 + $0x48] sm:$0xf]
      %v1629 = vld [vmem:[%s1609 + $0x4c] sm:$0xf]
      %v1630 = vld [vmem:[%s1609 + $0x50] sm:$0xf]
      %v1631 = vld [vmem:[%s1609 + $0x54] sm:$0xf]
      %v1632 = vld [vmem:[%s1609 + $0x58] sm:$0xf]
      %v1633 = vld [vmem:[%s1609 + $0x5c] sm:$0xf]
      %v1634 = vld [vmem:[%s1609 + $0x60] sm:$0xf]
      %v1635 = vld [vmem:[%s1609 + $0x64] sm:$0xf]
      %v1636 = vld [vmem:[%s1609 + $0x68] sm:$0xf]
      %v1637 = vld [vmem:[%s1609 + $0x6c] sm:$0xf]
      %v1638 = vld [vmem:[%s1609 + $0x70] sm:$0xf]
      %v1639 = vld [vmem:[%s1609 + $0x74] sm:$0xf]
      %v1640 = vld [vmem:[%s1609 + $0x78] sm:$0xf]
      %v1641 = vld [vmem:[%s1609 + $0x7c] sm:$0xf]
      %v1642 = vld [vmem:[%s284] sm:$0xff]
      %v1643 = vld [vmem:[%s284 + $0x8] sm:$0xff]
      %v1644 = vpack.c.bf16 %v1642, %v1642
      %v1645 = vpack.c.bf16 %v1643, %v1643
      %v1678 = vunpack.c.l.b16 %v1610
      %v1679 = vunpack.c.l.b16 %v1611
      %v1680 = vunpack.c.l.b16 %v1612
      %v1681 = vunpack.c.l.b16 %v1613
      %v1682 = vunpack.c.l.b16 %v1614
      %v1683 = vunpack.c.l.b16 %v1615
      %v1684 = vunpack.c.l.b16 %v1616
      %v1685 = vunpack.c.l.b16 %v1617
      %v1686 = vunpack.c.l.b16 %v1618
      %v1687 = vunpack.c.l.b16 %v1619
      %v1688 = vunpack.c.l.b16 %v1620
      %v1689 = vunpack.c.l.b16 %v1621
      %v1690 = vunpack.c.l.b16 %v1622
      %v1691 = vunpack.c.l.b16 %v1623
      %v1692 = vunpack.c.l.b16 %v1624
      %v1693 = vunpack.c.l.b16 %v1625
      %v1694 = vunpack.c.l.b16 %v1626
      %v1695 = vunpack.c.l.b16 %v1627
      %v1696 = vunpack.c.l.b16 %v1628
      %v1697 = vunpack.c.l.b16 %v1629
      %v1698 = vunpack.c.l.b16 %v1630
      %v1699 = vunpack.c.l.b16 %v1631
      %v1700 = vunpack.c.l.b16 %v1632
      %v1701 = vunpack.c.l.b16 %v1633
      %v1702 = vunpack.c.l.b16 %v1634
      %v1703 = vunpack.c.l.b16 %v1635
      %v1704 = vunpack.c.l.b16 %v1636
      %v1705 = vunpack.c.l.b16 %v1637
      %v1706 = vunpack.c.l.b16 %v1638
      %v1707 = vunpack.c.l.b16 %v1639
      %v1708 = vunpack.c.l.b16 %v1640
      %v1709 = vunpack.c.l.b16 %v1641
      %v1710 = vpack.c.b16 %v1679, %v1678
      %v1711 = vpack.c.b16 %v1681, %v1680
      %v1712 = vpack.c.b16 %v1683, %v1682
      %v1713 = vpack.c.b16 %v1685, %v1684
      %v1714 = vpack.c.b16 %v1687, %v1686
      %v1715 = vpack.c.b16 %v1689, %v1688
      %v1716 = vpack.c.b16 %v1691, %v1690
      %v1717 = vpack.c.b16 %v1693, %v1692
      %v1718 = vpack.c.b16 %v1695, %v1694
      %v1719 = vpack.c.b16 %v1697, %v1696
      %v1720 = vpack.c.b16 %v1699, %v1698
      %v1721 = vpack.c.b16 %v1701, %v1700
      %v1722 = vpack.c.b16 %v1703, %v1702
      %v1723 = vpack.c.b16 %v1705, %v1704
      %v1724 = vpack.c.b16 %v1707, %v1706
      %v1725 = vpack.c.b16 %v1709, %v1708
      %1742 = vmatprep.subr.bf16.mxu0 0
      %1743 = vmatpush1.bf16.msra.mxu0 %v1710
      %1744 = vmatprep.subr.bf16.mxu0 0
      %1745 = vmatpush1.bf16.msra.mxu0 %v1711
      %1746 = vmatprep.subr.bf16.mxu0 0
      %1747 = vmatpush1.bf16.msra.mxu0 %v1712
      %1748 = vmatprep.subr.bf16.mxu0 0
      %1749 = vmatpush1.bf16.msra.mxu0 %v1713
      %1750 = vmatprep.subr.bf16.mxu0 0
      %1751 = vmatpush1.bf16.msra.mxu0 %v1714
      %1752 = vmatprep.subr.bf16.mxu0 0
      %1753 = vmatpush1.bf16.msra.mxu0 %v1715
      %1754 = vmatprep.subr.bf16.mxu0 0
      %1755 = vmatpush1.bf16.msra.mxu0 %v1716
      %1756 = vmatprep.subr.bf16.mxu0 0
      %1757 = vmatpush1.bf16.msra.mxu0 %v1717
      %1758 = vmatprep.subr.bf16.mxu0 0
      %1759 = vmatpush1.bf16.msra.mxu0 %v1718
      %1760 = vmatprep.subr.bf16.mxu0 0
      %1761 = vmatpush1.bf16.msra.mxu0 %v1719
      %1762 = vmatprep.subr.bf16.mxu0 0
      %1763 = vmatpush1.bf16.msra.mxu0 %v1720
      %1764 = vmatprep.subr.bf16.mxu0 0
      %1765 = vmatpush1.bf16.msra.mxu0 %v1721
      %1766 = vmatprep.subr.bf16.mxu0 0
      %1767 = vmatpush1.bf16.msra.mxu0 %v1722
      %1768 = vmatprep.subr.bf16.mxu0 0
      %1769 = vmatpush1.bf16.msra.mxu0 %v1723
      %1770 = vmatprep.subr.bf16.mxu0 0
      %1771 = vmatpush1.bf16.msra.mxu0 %v1724
      %1772 = vmatprep.subr.bf16.mxu0 0
      %1773 = vmatpush1.bf16.msra.mxu0 %v1725
      %1774 = vmatprep.mubr.bf16.mxu0 %v1645
      %1775 = vmatmul.mubr.bf16.gmra.mrb[0].mxu0 %v1644
      %v1776 = vpop.f32.mrb[0].mxu0
      %v1777 = vadd.f32 0.0, %v1776
      %v1778 = vpop.f32.mrb[0].mxu0
      %v1779 = vpop.f32.mrb[0].mxu0
      %v1780 = vpop.f32.mrb[0].mxu0
      %1781 = vdwg.mxu0
      %v1814 = vunpack.c.l.b16 %v1569
      %v1815 = vunpack.c.l.b16 %v1570
      %v1816 = vunpack.c.l.b16 %v1571
      %v1817 = vunpack.c.l.b16 %v1572
      %v1818 = vunpack.c.l.b16 %v1573
      %v1819 = vunpack.c.l.b16 %v1574
      %v1820 = vunpack.c.l.b16 %v1575
      %v1821 = vunpack.c.l.b16 %v1576
      %v1822 = vunpack.c.l.b16 %v1577
      %v1823 = vunpack.c.l.b16 %v1578
      %v1824 = vunpack.c.l.b16 %v1579
      %v1825 = vunpack.c.l.b16 %v1580
      %v1826 = vunpack.c.l.b16 %v1581
      %v1827 = vunpack.c.l.b16 %v1582
      %v1828 = vunpack.c.l.b16 %v1583
      %v1829 = vunpack.c.l.b16 %v1584
      %v1830 = vunpack.c.l.b16 %v1585
      %v1831 = vunpack.c.l.b16 %v1586
      %v1832 = vunpack.c.l.b16 %v1587
      %v1833 = vunpack.c.l.b16 %v1588
      %v1834 = vunpack.c.l.b16 %v1589
      %v1835 = vunpack.c.l.b16 %v1590
      %v1836 = vunpack.c.l.b16 %v1591
      %v1837 = vunpack.c.l.b16 %v1592
      %v1838 = vunpack.c.l.b16 %v1593
      %v1839 = vunpack.c.l.b16 %v1594
      %v1840 = vunpack.c.l.b16 %v1595
      %v1841 = vunpack.c.l.b16 %v1596
      %v1842 = vunpack.c.l.b16 %v1597
      %v1843 = vunpack.c.l.b16 %v1598
      %v1844 = vunpack.c.l.b16 %v1599
      %v1845 = vunpack.c.l.b16 %v1600
      %v1846 = vpack.c.b16 %v1815, %v1814
      %v1847 = vpack.c.b16 %v1817, %v1816
      %v1848 = vpack.c.b16 %v1819, %v1818
      %v1849 = vpack.c.b16 %v1821, %v1820
      %v1850 = vpack.c.b16 %v1823, %v1822
      %v1851 = vpack.c.b16 %v1825, %v1824
      %v1852 = vpack.c.b16 %v1827, %v1826
      %v1853 = vpack.c.b16 %v1829, %v1828
      %v1854 = vpack.c.b16 %v1831, %v1830
      %v1855 = vpack.c.b16 %v1833, %v1832
      %v1856 = vpack.c.b16 %v1835, %v1834
      %v1857 = vpack.c.b16 %v1837, %v1836
      %v1858 = vpack.c.b16 %v1839, %v1838
      %v1859 = vpack.c.b16 %v1841, %v1840
      %v1860 = vpack.c.b16 %v1843, %v1842
      %v1861 = vpack.c.b16 %v1845, %v1844
      %1878 = vmatprep.subr.bf16.mxu0 0
      %1879 = vmatpush1.bf16.msra.mxu0 %v1846
      %1880 = vmatprep.subr.bf16.mxu0 0
      %1881 = vmatpush1.bf16.msra.mxu0 %v1847
      %1882 = vmatprep.subr.bf16.mxu0 0
      %1883 = vmatpush1.bf16.msra.mxu0 %v1848
      %1884 = vmatprep.subr.bf16.mxu0 0
      %1885 = vmatpush1.bf16.msra.mxu0 %v1849
      %1886 = vmatprep.subr.bf16.mxu0 0
      %1887 = vmatpush1.bf16.msra.mxu0 %v1850
      %1888 = vmatprep.subr.bf16.mxu0 0
      %1889 = vmatpush1.bf16.msra.mxu0 %v1851
      %1890 = vmatprep.subr.bf16.mxu0 0
      %1891 = vmatpush1.bf16.msra.mxu0 %v1852
      %1892 = vmatprep.subr.bf16.mxu0 0
      %1893 = vmatpush1.bf16.msra.mxu0 %v1853
      %1894 = vmatprep.subr.bf16.mxu0 0
      %1895 = vmatpush1.bf16.msra.mxu0 %v1854
      %1896 = vmatprep.subr.bf16.mxu0 0
      %1897 = vmatpush1.bf16.msra.mxu0 %v1855
      %1898 = vmatprep.subr.bf16.mxu0 0
      %1899 = vmatpush1.bf16.msra.mxu0 %v1856
      %1900 = vmatprep.subr.bf16.mxu0 0
      %1901 = vmatpush1.bf16.msra.mxu0 %v1857
      %1902 = vmatprep.subr.bf16.mxu0 0
      %1903 = vmatpush1.bf16.msra.mxu0 %v1858
      %1904 = vmatprep.subr.bf16.mxu0 0
      %1905 = vmatpush1.bf16.msra.mxu0 %v1859
      %1906 = vmatprep.subr.bf16.mxu0 0
      %1907 = vmatpush1.bf16.msra.mxu0 %v1860
      %1908 = vmatprep.subr.bf16.mxu0 0
      %1909 = vmatpush1.bf16.msra.mxu0 %v1861
      %1910 = vmatprep.mubr.bf16.mxu0 %v1604
      %1911 = vmatmul.mubr.bf16.gmra.mrb[0].mxu0 %v1603
      %v1912 = vpop.f32.mrb[0].mxu0
      %v1913 = vadd.f32 %v1777, %v1912
      %v1914 = vpop.f32.mrb[0].mxu0
      %v1915 = vpop.f32.mrb[0].mxu0
      %v1916 = vpop.f32.mrb[0].mxu0
      %1917 = vdwg.mxu0
      %v1918 = vld [vmem:[%s291] sm:$0xff]
      %v1919 = vld [vmem:[%s291 + $0x8] sm:$0xff]
      %v1920 = vpack.c.bf16 %v1918, %v1918
      %v1921 = vpack.c.bf16 %v1919, %v1919
      %1922 = vmatprep.subr.bf16.mxu0 0
      %1923 = vmatpush1.bf16.msra.mxu0 %v1710
      %1924 = vmatprep.subr.bf16.mxu0 0
      %1925 = vmatpush1.bf16.msra.mxu0 %v1711
      %1926 = vmatprep.subr.bf16.mxu0 0
      %1927 = vmatpush1.bf16.msra.mxu0 %v1712
      %1928 = vmatprep.subr.bf16.mxu0 0
      %1929 = vmatpush1.bf16.msra.mxu0 %v1713
      %1930 = vmatprep.subr.bf16.mxu0 0
      %1931 = vmatpush1.bf16.msra.mxu0 %v1714
      %1932 = vmatprep.subr.bf16.mxu0 0
      %1933 = vmatpush1.bf16.msra.mxu0 %v1715
      %1934 = vmatprep.subr.bf16.mxu0 0
      %1935 = vmatpush1.bf16.msra.mxu0 %v1716
      %1936 = vmatprep.subr.bf16.mxu0 0
      %1937 = vmatpush1.bf16.msra.mxu0 %v1717
      %1938 = vmatprep.subr.bf16.mxu0 0
      %1939 = vmatpush1.bf16.msra.mxu0 %v1718
      %1940 = vmatprep.subr.bf16.mxu0 0
      %1941 = vmatpush1.bf16.msra.mxu0 %v1719
      %1942 = vmatprep.subr.bf16.mxu0 0
      %1943 = vmatpush1.bf16.msra.mxu0 %v1720
      %1944 = vmatprep.subr.bf16.mxu0 0
      %1945 = vmatpush1.bf16.msra.mxu0 %v1721
      %1946 = vmatprep.subr.bf16.mxu0 0
      %1947 = vmatpush1.bf16.msra.mxu0 %v1722
      %1948 = vmatprep.subr.bf16.mxu0 0
      %1949 = vmatpush1.bf16.msra.mxu0 %v1723
      %1950 = vmatprep.subr.bf16.mxu0 0
      %1951 = vmatpush1.bf16.msra.mxu0 %v1724
      %1952 = vmatprep.subr.bf16.mxu0 0
      %1953 = vmatpush1.bf16.msra.mxu0 %v1725
      %1954 = vmatprep.mubr.bf16.mxu0 %v1921
      %1955 = vmatmul.mubr.bf16.gmra.mrb[0].mxu0 %v1920
      %v1956 = vpop.f32.mrb[0].mxu0
      %v1957 = vadd.f32 0.0, %v1956
      %v1958 = vpop.f32.mrb[0].mxu0
      %v1959 = vpop.f32.mrb[0].mxu0
      %v1960 = vpop.f32.mrb[0].mxu0
      %1961 = vdwg.mxu0
      %1962 = vmatprep.subr.bf16.mxu0 0
      %1963 = vmatpush1.bf16.msra.mxu0 %v1846
      %1964 = vmatprep.subr.bf16.mxu0 0
      %1965 = vmatpush1.bf16.msra.mxu0 %v1847
      %1966 = vmatprep.subr.bf16.mxu0 0
      %1967 = vmatpush1.bf16.msra.mxu0 %v1848
      %1968 = vmatprep.subr.bf16.mxu0 0
      %1969 = vmatpush1.bf16.msra.mxu0 %v1849
      %1970 = vmatprep.subr.bf16.mxu0 0
      %1971 = vmatpush1.bf16.msra.mxu0 %v1850
      %1972 = vmatprep.subr.bf16.mxu0 0
      %1973 = vmatpush1.bf16.msra.mxu0 %v1851
      %1974 = vmatprep.subr.bf16.mxu0 0
      %1975 = vmatpush1.bf16.msra.mxu0 %v1852
      %1976 = vmatprep.subr.bf16.mxu0 0
      %1977 = vmatpush1.bf16.msra.mxu0 %v1853
      %1978 = vmatprep.subr.bf16.mxu0 0
      %1979 = vmatpush1.bf16.msra.mxu0 %v1854
      %1980 = vmatprep.subr.bf16.mxu0 0
      %1981 = vmatpush1.bf16.msra.mxu0 %v1855
      %1982 = vmatprep.subr.bf16.mxu0 0
      %1983 = vmatpush1.bf16.msra.mxu0 %v1856
      %1984 = vmatprep.subr.bf16.mxu0 0
      %1985 = vmatpush1.bf16.msra.mxu0 %v1857
      %1986 = vmatprep.subr.bf16.mxu0 0
      %1987 = vmatpush1.bf16.msra.mxu0 %v1858
      %1988 = vmatprep.subr.bf16.mxu0 0
      %1989 = vmatpush1.bf16.msra.mxu0 %v1859
      %1990 = vmatprep.subr.bf16.mxu0 0
      %1991 = vmatpush1.bf16.msra.mxu0 %v1860
      %1992 = vmatprep.subr.bf16.mxu0 0
      %1993 = vmatpush1.bf16.msra.mxu0 %v1861
      %1994 = vmatprep.mubr.bf16.mxu0 %v1608
      %1995 = vmatmul.mubr.bf16.gmra.mrb[0].mxu0 %v1607
      %v1996 = vpop.f32.mrb[0].mxu0
      %v1997 = vadd.f32 %v1957, %v1996
      %v1998 = vpop.f32.mrb[0].mxu0
      %v1999 = vpop.f32.mrb[0].mxu0
      %v2000 = vpop.f32.mrb[0].mxu0
      %2001 = vdwg.mxu0
      %s2002 = scalar_lea.vmem %s3, 256
      %v2003 = vld [vmem:[%s2002] sm:$0xf]
      %v2004 = vld [vmem:[%s2002 + $0x4] sm:$0xf]
      %v2005 = vld [vmem:[%s2002 + $0x8] sm:$0xf]
      %v2006 = vld [vmem:[%s2002 + $0xc] sm:$0xf]
      %v2007 = vld [vmem:[%s2002 + $0x10] sm:$0xf]
      %v2008 = vld [vmem:[%s2002 + $0x14] sm:$0xf]
      %v2009 = vld [vmem:[%s2002 + $0x18] sm:$0xf]
      %v2010 = vld [vmem:[%s2002 + $0x1c] sm:$0xf]
      %v2011 = vld [vmem:[%s2002 + $0x20] sm:$0xf]
      %v2012 = vld [vmem:[%s2002 + $0x24] sm:$0xf]
      %v2013 = vld [vmem:[%s2002 + $0x28] sm:$0xf]
      %v2014 = vld [vmem:[%s2002 + $0x2c] sm:$0xf]
      %v2015 = vld [vmem:[%s2002 + $0x30] sm:$0xf]
      %v2016 = vld [vmem:[%s2002 + $0x34] sm:$0xf]
      %v2017 = vld [vmem:[%s2002 + $0x38] sm:$0xf]
      %v2018 = vld [vmem:[%s2002 + $0x3c] sm:$0xf]
      %v2019 = vld [vmem:[%s2002 + $0x40] sm:$0xf]
      %v2020 = vld [vmem:[%s2002 + $0x44] sm:$0xf]
      %v2021 = vld [vmem:[%s2002 + $0x48] sm:$0xf]
      %v2022 = vld [vmem:[%s2002 + $0x4c] sm:$0xf]
      %v2023 = vld [vmem:[%s2002 + $0x50] sm:$0xf]
      %v2024 = vld [vmem:[%s2002 + $0x54] sm:$0xf]
      %v2025 = vld [vmem:[%s2002 + $0x58] sm:$0xf]
      %v2026 = vld [vmem:[%s2002 + $0x5c] sm:$0xf]
      %v2027 = vld [vmem:[%s2002 + $0x60] sm:$0xf]
      %v2028 = vld [vmem:[%s2002 + $0x64] sm:$0xf]
      %v2029 = vld [vmem:[%s2002 + $0x68] sm:$0xf]
      %v2030 = vld [vmem:[%s2002 + $0x6c] sm:$0xf]
      %v2031 = vld [vmem:[%s2002 + $0x70] sm:$0xf]
      %v2032 = vld [vmem:[%s2002 + $0x74] sm:$0xf]
      %v2033 = vld [vmem:[%s2002 + $0x78] sm:$0xf]
      %v2034 = vld [vmem:[%s2002 + $0x7c] sm:$0xf]
      %v2067 = vunpack.c.l.b16 %v2003
      %v2068 = vunpack.c.l.b16 %v2004
      %v2069 = vunpack.c.l.b16 %v2005
      %v2070 = vunpack.c.l.b16 %v2006
      %v2071 = vunpack.c.l.b16 %v2007
      %v2072 = vunpack.c.l.b16 %v2008
      %v2073 = vunpack.c.l.b16 %v2009
      %v2074 = vunpack.c.l.b16 %v2010
      %v2075 = vunpack.c.l.b16 %v2011
      %v2076 = vunpack.c.l.b16 %v2012
      %v2077 = vunpack.c.l.b16 %v2013
      %v2078 = vunpack.c.l.b16 %v2014
      %v2079 = vunpack.c.l.b16 %v2015
      %v2080 = vunpack.c.l.b16 %v2016
      %v2081 = vunpack.c.l.b16 %v2017
      %v2082 = vunpack.c.l.b16 %v2018
      %v2083 = vunpack.c.l.b16 %v2019
      %v2084 = vunpack.c.l.b16 %v2020
      %v2085 = vunpack.c.l.b16 %v2021
      %v2086 = vunpack.c.l.b16 %v2022
      %v2087 = vunpack.c.l.b16 %v2023
      %v2088 = vunpack.c.l.b16 %v2024
      %v2089 = vunpack.c.l.b16 %v2025
      %v2090 = vunpack.c.l.b16 %v2026
      %v2091 = vunpack.c.l.b16 %v2027
      %v2092 = vunpack.c.l.b16 %v2028
      %v2093 = vunpack.c.l.b16 %v2029
      %v2094 = vunpack.c.l.b16 %v2030
      %v2095 = vunpack.c.l.b16 %v2031
      %v2096 = vunpack.c.l.b16 %v2032
      %v2097 = vunpack.c.l.b16 %v2033
      %v2098 = vunpack.c.l.b16 %v2034
      %v2099 = vpack.c.b16 %v2068, %v2067
      %v2100 = vpack.c.b16 %v2070, %v2069
      %v2101 = vpack.c.b16 %v2072, %v2071
      %v2102 = vpack.c.b16 %v2074, %v2073
      %v2103 = vpack.c.b16 %v2076, %v2075
      %v2104 = vpack.c.b16 %v2078, %v2077
      %v2105 = vpack.c.b16 %v2080, %v2079
      %v2106 = vpack.c.b16 %v2082, %v2081
      %v2107 = vpack.c.b16 %v2084, %v2083
      %v2108 = vpack.c.b16 %v2086, %v2085
      %v2109 = vpack.c.b16 %v2088, %v2087
      %v2110 = vpack.c.b16 %v2090, %v2089
      %v2111 = vpack.c.b16 %v2092, %v2091
      %v2112 = vpack.c.b16 %v2094, %v2093
      %v2113 = vpack.c.b16 %v2096, %v2095
      %v2114 = vpack.c.b16 %v2098, %v2097
      %2131 = vmatprep.subr.bf16.mxu0 0
      %2132 = vmatpush1.bf16.msra.mxu0 %v2099
      %2133 = vmatprep.subr.bf16.mxu0 0
      %2134 = vmatpush1.bf16.msra.mxu0 %v2100
      %2135 = vmatprep.subr.bf16.mxu0 0
      %2136 = vmatpush1.bf16.msra.mxu0 %v2101
      %2137 = vmatprep.subr.bf16.mxu0 0
      %2138 = vmatpush1.bf16.msra.mxu0 %v2102
      %2139 = vmatprep.subr.bf16.mxu0 0
      %2140 = vmatpush1.bf16.msra.mxu0 %v2103
      %2141 = vmatprep.subr.bf16.mxu0 0
      %2142 = vmatpush1.bf16.msra.mxu0 %v2104
      %2143 = vmatprep.subr.bf16.mxu0 0
      %2144 = vmatpush1.bf16.msra.mxu0 %v2105
      %2145 = vmatprep.subr.bf16.mxu0 0
      %2146 = vmatpush1.bf16.msra.mxu0 %v2106
      %2147 = vmatprep.subr.bf16.mxu0 0
      %2148 = vmatpush1.bf16.msra.mxu0 %v2107
      %2149 = vmatprep.subr.bf16.mxu0 0
      %2150 = vmatpush1.bf16.msra.mxu0 %v2108
      %2151 = vmatprep.subr.bf16.mxu0 0
      %2152 = vmatpush1.bf16.msra.mxu0 %v2109
      %2153 = vmatprep.subr.bf16.mxu0 0
      %2154 = vmatpush1.bf16.msra.mxu0 %v2110
      %2155 = vmatprep.subr.bf16.mxu0 0
      %2156 = vmatpush1.bf16.msra.mxu0 %v2111
      %2157 = vmatprep.subr.bf16.mxu0 0
      %2158 = vmatpush1.bf16.msra.mxu0 %v2112
      %2159 = vmatprep.subr.bf16.mxu0 0
      %2160 = vmatpush1.bf16.msra.mxu0 %v2113
      %2161 = vmatprep.subr.bf16.mxu0 0
      %2162 = vmatpush1.bf16.msra.mxu0 %v2114
      %2163 = vmatprep.mubr.bf16.mxu0 %v1608
      %2164 = vmatmul.mubr.bf16.gmra.mrb[0].mxu0 %v1607
      %v2165 = vpop.f32.mrb[0].mxu0
      %v2166 = vadd.f32 0.0, %v2165
      %v2167 = vpop.f32.mrb[0].mxu0
      %v2168 = vpop.f32.mrb[0].mxu0
      %v2169 = vpop.f32.mrb[0].mxu0
      %2170 = vdwg.mxu0
      %v2171 = vadd.f32 %v1913, %v2166
      %v2172 = vld [vmem:[#allocation2] sm:$0xfe]
      %v2173 = vld [vmem:[#allocation2 + $0x8] sm:$0xfe]
      %v2174 = vld [vmem:[#allocation2 + $0x10] sm:$0x1]
      %v2175 = vld [vmem:[#allocation2 + $0x18] sm:$0x1]
      %v2176 = vpack.c.bf16 %v2174, %v2172
      %v2177 = vpack.c.bf16 %v2175, %v2173
      %v2179 = vshrl.u32 %v2176, 16
      %v2181 = vshll.u32 %v2176, 16
      %v2183 = vrot.slane %v2181, 1
      %v2184 = vor.u32 %v2179, %v2183
      %v2186 = vshrl.u32 %v2177, 16
      %v2188 = vshll.u32 %v2177, 16
      %v2190 = vrot.slane %v2188, 1
      %v2191 = vor.u32 %v2186, %v2190
      %2194 = vmatprep.subr.bf16.mxu0 0
      %2195 = vmatpush1.bf16.msra.mxu0 %v2099
      %2196 = vmatprep.subr.bf16.mxu0 0
      %2197 = vmatpush1.bf16.msra.mxu0 %v2100
      %2198 = vmatprep.subr.bf16.mxu0 0
      %2199 = vmatpush1.bf16.msra.mxu0 %v2101
      %2200 = vmatprep.subr.bf16.mxu0 0
      %2201 = vmatpush1.bf16.msra.mxu0 %v2102
      %2202 = vmatprep.subr.bf16.mxu0 0
      %2203 = vmatpush1.bf16.msra.mxu0 %v2103
      %2204 = vmatprep.subr.bf16.mxu0 0
      %2205 = vmatpush1.bf16.msra.mxu0 %v2104
      %2206 = vmatprep.subr.bf16.mxu0 0
      %2207 = vmatpush1.bf16.msra.mxu0 %v2105
      %2208 = vmatprep.subr.bf16.mxu0 0
      %2209 = vmatpush1.bf16.msra.mxu0 %v2106
      %2210 = vmatprep.subr.bf16.mxu0 0
      %2211 = vmatpush1.bf16.msra.mxu0 %v2107
      %2212 = vmatprep.subr.bf16.mxu0 0
      %2213 = vmatpush1.bf16.msra.mxu0 %v2108
      %2214 = vmatprep.subr.bf16.mxu0 0
      %2215 = vmatpush1.bf16.msra.mxu0 %v2109
      %2216 = vmatprep.subr.bf16.mxu0 0
      %2217 = vmatpush1.bf16.msra.mxu0 %v2110
      %2218 = vmatprep.subr.bf16.mxu0 0
      %2219 = vmatpush1.bf16.msra.mxu0 %v2111
      %2220 = vmatprep.subr.bf16.mxu0 0
      %2221 = vmatpush1.bf16.msra.mxu0 %v2112
      %2222 = vmatprep.subr.bf16.mxu0 0
      %2223 = vmatpush1.bf16.msra.mxu0 %v2113
      %2224 = vmatprep.subr.bf16.mxu0 0
      %2225 = vmatpush1.bf16.msra.mxu0 %v2114
      %2226 = vmatprep.mubr.bf16.mxu0 %v2191
      %2227 = vmatmul.mubr.bf16.gmra.mrb[0].mxu0 %v2184
      %v2228 = vpop.f32.mrb[0].mxu0
      %v2229 = vadd.f32 0.0, %v2228
      %v2230 = vpop.f32.mrb[0].mxu0
      %v2231 = vpop.f32.mrb[0].mxu0
      %v2232 = vpop.f32.mrb[0].mxu0
      %2233 = vdwg.mxu0
      %v2234 = vadd.f32 %v1997, %v2229
      %s2235 = scalar_lea.vmem %s3, 384
      %v2236 = vld [vmem:[%s2235] sm:$0xf]
      %v2237 = vld [vmem:[%s2235 + $0x4] sm:$0xf]
      %v2238 = vld [vmem:[%s2235 + $0x8] sm:$0xf]
      %v2239 = vld [vmem:[%s2235 + $0xc] sm:$0xf]
      %v2240 = vld [vmem:[%s2235 + $0x10] sm:$0xf]
      %v2241 = vld [vmem:[%s2235 + $0x14] sm:$0xf]
      %v2242 = vld [vmem:[%s2235 + $0x18] sm:$0xf]
      %v2243 = vld [vmem:[%s2235 + $0x1c] sm:$0xf]
      %v2244 = vld [vmem:[%s2235 + $0x20] sm:$0xf]
      %v2245 = vld [vmem:[%s2235 + $0x24] sm:$0xf]
      %v2246 = vld [vmem:[%s2235 + $0x28] sm:$0xf]
      %v2247 = vld [vmem:[%s2235 + $0x2c] sm:$0xf]
      %v2248 = vld [vmem:[%s2235 + $0x30] sm:$0xf]
      %v2249 = vld [vmem:[%s2235 + $0x34] sm:$0xf]
      %v2250 = vld [vmem:[%s2235 + $0x38] sm:$0xf]
      %v2251 = vld [vmem:[%s2235 + $0x3c] sm:$0xf]
      %v2252 = vld [vmem:[%s2235 + $0x40] sm:$0xf]
      %v2253 = vld [vmem:[%s2235 + $0x44] sm:$0xf]
      %v2254 = vld [vmem:[%s2235 + $0x48] sm:$0xf]
      %v2255 = vld [vmem:[%s2235 + $0x4c] sm:$0xf]
      %v2256 = vld [vmem:[%s2235 + $0x50] sm:$0xf]
      %v2257 = vld [vmem:[%s2235 + $0x54] sm:$0xf]
      %v2258 = vld [vmem:[%s2235 + $0x58] sm:$0xf]
      %v2259 = vld [vmem:[%s2235 + $0x5c] sm:$0xf]
      %v2260 = vld [vmem:[%s2235 + $0x60] sm:$0xf]
      %v2261 = vld [vmem:[%s2235 + $0x64] sm:$0xf]
      %v2262 = vld [vmem:[%s2235 + $0x68] sm:$0xf]
      %v2263 = vld [vmem:[%s2235 + $0x6c] sm:$0xf]
      %v2264 = vld [vmem:[%s2235 + $0x70] sm:$0xf]
      %v2265 = vld [vmem:[%s2235 + $0x74] sm:$0xf]
      %v2266 = vld [vmem:[%s2235 + $0x78] sm:$0xf]
      %v2267 = vld [vmem:[%s2235 + $0x7c] sm:$0xf]
      %v2300 = vunpack.c.l.b16 %v2236
      %v2301 = vunpack.c.l.b16 %v2237
      %v2302 = vunpack.c.l.b16 %v2238
      %v2303 = vunpack.c.l.b16 %v2239
      %v2304 = vunpack.c.l.b16 %v2240
      %v2305 = vunpack.c.l.b16 %v2241
      %v2306 = vunpack.c.l.b16 %v2242
      %v2307 = vunpack.c.l.b16 %v2243
      %v2308 = vunpack.c.l.b16 %v2244
      %v2309 = vunpack.c.l.b16 %v2245
      %v2310 = vunpack.c.l.b16 %v2246
      %v2311 = vunpack.c.l.b16 %v2247
      %v2312 = vunpack.c.l.b16 %v2248
      %v2313 = vunpack.c.l.b16 %v2249
      %v2314 = vunpack.c.l.b16 %v2250
      %v2315 = vunpack.c.l.b16 %v2251
      %v2316 = vunpack.c.l.b16 %v2252
      %v2317 = vunpack.c.l.b16 %v2253
      %v2318 = vunpack.c.l.b16 %v2254
      %v2319 = vunpack.c.l.b16 %v2255
      %v2320 = vunpack.c.l.b16 %v2256
      %v2321 = vunpack.c.l.b16 %v2257
      %v2322 = vunpack.c.l.b16 %v2258
      %v2323 = vunpack.c.l.b16 %v2259
      %v2324 = vunpack.c.l.b16 %v2260
      %v2325 = vunpack.c.l.b16 %v2261
      %v2326 = vunpack.c.l.b16 %v2262
      %v2327 = vunpack.c.l.b16 %v2263
      %v2328 = vunpack.c.l.b16 %v2264
      %v2329 = vunpack.c.l.b16 %v2265
      %v2330 = vunpack.c.l.b16 %v2266
      %v2331 = vunpack.c.l.b16 %v2267
      %v2332 = vpack.c.b16 %v2301, %v2300
      %v2333 = vpack.c.b16 %v2303, %v2302
      %v2334 = vpack.c.b16 %v2305, %v2304
      %v2335 = vpack.c.b16 %v2307, %v2306
      %v2336 = vpack.c.b16 %v2309, %v2308
      %v2337 = vpack.c.b16 %v2311, %v2310
      %v2338 = vpack.c.b16 %v2313, %v2312
      %v2339 = vpack.c.b16 %v2315, %v2314
      %v2340 = vpack.c.b16 %v2317, %v2316
      %v2341 = vpack.c.b16 %v2319, %v2318
      %v2342 = vpack.c.b16 %v2321, %v2320
      %v2343 = vpack.c.b16 %v2323, %v2322
      %v2344 = vpack.c.b16 %v2325, %v2324
      %v2345 = vpack.c.b16 %v2327, %v2326
      %v2346 = vpack.c.b16 %v2329, %v2328
      %v2347 = vpack.c.b16 %v2331, %v2330
      %2364 = vmatprep.subr.bf16.mxu0 0
      %2365 = vmatpush1.bf16.msra.mxu0 %v2332
      %2366 = vmatprep.subr.bf16.mxu0 0
      %2367 = vmatpush1.bf16.msra.mxu0 %v2333
      %2368 = vmatprep.subr.bf16.mxu0 0
      %2369 = vmatpush1.bf16.msra.mxu0 %v2334
      %2370 = vmatprep.subr.bf16.mxu0 0
      %2371 = vmatpush1.bf16.msra.mxu0 %v2335
      %2372 = vmatprep.subr.bf16.mxu0 0
      %2373 = vmatpush1.bf16.msra.mxu0 %v2336
      %2374 = vmatprep.subr.bf16.mxu0 0
      %2375 = vmatpush1.bf16.msra.mxu0 %v2337
      %2376 = vmatprep.subr.bf16.mxu0 0
      %2377 = vmatpush1.bf16.msra.mxu0 %v2338
      %2378 = vmatprep.subr.bf16.mxu0 0
      %2379 = vmatpush1.bf16.msra.mxu0 %v2339
      %2380 = vmatprep.subr.bf16.mxu0 0
      %2381 = vmatpush1.bf16.msra.mxu0 %v2340
      %2382 = vmatprep.subr.bf16.mxu0 0
      %2383 = vmatpush1.bf16.msra.mxu0 %v2341
      %2384 = vmatprep.subr.bf16.mxu0 0
      %2385 = vmatpush1.bf16.msra.mxu0 %v2342
      %2386 = vmatprep.subr.bf16.mxu0 0
      %2387 = vmatpush1.bf16.msra.mxu0 %v2343
      %2388 = vmatprep.subr.bf16.mxu0 0
      %2389 = vmatpush1.bf16.msra.mxu0 %v2344
      %2390 = vmatprep.subr.bf16.mxu0 0
      %2391 = vmatpush1.bf16.msra.mxu0 %v2345
      %2392 = vmatprep.subr.bf16.mxu0 0
      %2393 = vmatpush1.bf16.msra.mxu0 %v2346
      %2394 = vmatprep.subr.bf16.mxu0 0
      %2395 = vmatpush1.bf16.msra.mxu0 %v2347
      %2396 = vmatprep.mubr.bf16.mxu0 %v1921
      %2397 = vmatmul.mubr.bf16.gmra.mrb[0].mxu0 %v1920
      %v2398 = vpop.f32.mrb[0].mxu0
      %v2399 = vadd.f32 0.0, %v2398
      %v2400 = vpop.f32.mrb[0].mxu0
      %v2401 = vpop.f32.mrb[0].mxu0
      %v2402 = vpop.f32.mrb[0].mxu0
      %2403 = vdwg.mxu0
      %v2404 = vadd.f32 %v2171, %v2399
      %v2405 = vld [vmem:[%s284] sm:$0xfe]
      %v2406 = vld [vmem:[%s284 + $0x8] sm:$0xfe]
      %v2407 = vld [vmem:[%s284 + $0x10] sm:$0x1]
      %v2408 = vld [vmem:[%s284 + $0x18] sm:$0x1]
      %v2409 = vpack.c.bf16 %v2407, %v2405
      %v2410 = vpack.c.bf16 %v2408, %v2406
      %v2412 = vshrl.u32 %v2409, 16
      %v2414 = vshll.u32 %v2409, 16
      %v2416 = vrot.slane %v2414, 1
      %v2417 = vor.u32 %v2412, %v2416
      %v2419 = vshrl.u32 %v2410, 16
      %v2421 = vshll.u32 %v2410, 16
      %v2423 = vrot.slane %v2421, 1
      %v2424 = vor.u32 %v2419, %v2423
      %2427 = vmatprep.subr.bf16.mxu0 0
      %2428 = vmatpush1.bf16.msra.mxu0 %v2332
      %2429 = vmatprep.subr.bf16.mxu0 0
      %2430 = vmatpush1.bf16.msra.mxu0 %v2333
      %2431 = vmatprep.subr.bf16.mxu0 0
      %2432 = vmatpush1.bf16.msra.mxu0 %v2334
      %2433 = vmatprep.subr.bf16.mxu0 0
      %2434 = vmatpush1.bf16.msra.mxu0 %v2335
      %2435 = vmatprep.subr.bf16.mxu0 0
      %2436 = vmatpush1.bf16.msra.mxu0 %v2336
      %2437 = vmatprep.subr.bf16.mxu0 0
      %2438 = vmatpush1.bf16.msra.mxu0 %v2337
      %2439 = vmatprep.subr.bf16.mxu0 0
      %2440 = vmatpush1.bf16.msra.mxu0 %v2338
      %2441 = vmatprep.subr.bf16.mxu0 0
      %2442 = vmatpush1.bf16.msra.mxu0 %v2339
      %2443 = vmatprep.subr.bf16.mxu0 0
      %2444 = vmatpush1.bf16.msra.mxu0 %v2340
      %2445 = vmatprep.subr.bf16.mxu0 0
      %2446 = vmatpush1.bf16.msra.mxu0 %v2341
      %2447 = vmatprep.subr.bf16.mxu0 0
      %2448 = vmatpush1.bf16.msra.mxu0 %v2342
      %2449 = vmatprep.subr.bf16.mxu0 0
      %2450 = vmatpush1.bf16.msra.mxu0 %v2343
      %2451 = vmatprep.subr.bf16.mxu0 0
      %2452 = vmatpush1.bf16.msra.mxu0 %v2344
      %2453 = vmatprep.subr.bf16.mxu0 0
      %2454 = vmatpush1.bf16.msra.mxu0 %v2345
      %2455 = vmatprep.subr.bf16.mxu0 0
      %2456 = vmatpush1.bf16.msra.mxu0 %v2346
      %2457 = vmatprep.subr.bf16.mxu0 0
      %2458 = vmatpush1.bf16.msra.mxu0 %v2347
      %2459 = vmatprep.mubr.bf16.mxu0 %v2424
      %2460 = vmatmul.mubr.bf16.gmra.mrb[0].mxu0 %v2417
      %v2461 = vpop.f32.mrb[0].mxu0
      %v2462 = vadd.f32 0.0, %v2461
      %v2463 = vpop.f32.mrb[0].mxu0
      %v2464 = vpop.f32.mrb[0].mxu0
      %v2465 = vpop.f32.mrb[0].mxu0
      %2466 = vdwg.mxu0
      %v2467 = vadd.f32 %v2234, %v2462
      %s2468 = scalar_lea.vmem %s3, 512
      %v2469 = vld [vmem:[%s2468] sm:$0xf]
      %v2470 = vld [vmem:[%s2468 + $0x4] sm:$0xf]
      %v2471 = vld [vmem:[%s2468 + $0x8] sm:$0xf]
      %v2472 = vld [vmem:[%s2468 + $0xc] sm:$0xf]
      %v2473 = vld [vmem:[%s2468 + $0x10] sm:$0xf]
      %v2474 = vld [vmem:[%s2468 + $0x14] sm:$0xf]
      %v2475 = vld [vmem:[%s2468 + $0x18] sm:$0xf]
      %v2476 = vld [vmem:[%s2468 + $0x1c] sm:$0xf]
      %v2477 = vld [vmem:[%s2468 + $0x20] sm:$0xf]
      %v2478 = vld [vmem:[%s2468 + $0x24] sm:$0xf]
      %v2479 = vld [vmem:[%s2468 + $0x28] sm:$0xf]
      %v2480 = vld [vmem:[%s2468 + $0x2c] sm:$0xf]
      %v2481 = vld [vmem:[%s2468 + $0x30] sm:$0xf]
      %v2482 = vld [vmem:[%s2468 + $0x34] sm:$0xf]
      %v2483 = vld [vmem:[%s2468 + $0x38] sm:$0xf]
      %v2484 = vld [vmem:[%s2468 + $0x3c] sm:$0xf]
      %v2485 = vld [vmem:[%s2468 + $0x40] sm:$0xf]
      %v2486 = vld [vmem:[%s2468 + $0x44] sm:$0xf]
      %v2487 = vld [vmem:[%s2468 + $0x48] sm:$0xf]
      %v2488 = vld [vmem:[%s2468 + $0x4c] sm:$0xf]
      %v2489 = vld [vmem:[%s2468 + $0x50] sm:$0xf]
      %v2490 = vld [vmem:[%s2468 + $0x54] sm:$0xf]
      %v2491 = vld [vmem:[%s2468 + $0x58] sm:$0xf]
      %v2492 = vld [vmem:[%s2468 + $0x5c] sm:$0xf]
      %v2493 = vld [vmem:[%s2468 + $0x60] sm:$0xf]
      %v2494 = vld [vmem:[%s2468 + $0x64] sm:$0xf]
      %v2495 = vld [vmem:[%s2468 + $0x68] sm:$0xf]
      %v2496 = vld [vmem:[%s2468 + $0x6c] sm:$0xf]
      %v2497 = vld [vmem:[%s2468 + $0x70] sm:$0xf]
      %v2498 = vld [vmem:[%s2468 + $0x74] sm:$0xf]
      %v2499 = vld [vmem:[%s2468 + $0x78] sm:$0xf]
      %v2500 = vld [vmem:[%s2468 + $0x7c] sm:$0xf]
      %v2533 = vunpack.c.l.b16 %v2469
      %v2534 = vunpack.c.l.b16 %v2470
      %v2535 = vunpack.c.l.b16 %v2471
      %v2536 = vunpack.c.l.b16 %v2472
      %v2537 = vunpack.c.l.b16 %v2473
      %v2538 = vunpack.c.l.b16 %v2474
      %v2539 = vunpack.c.l.b16 %v2475
      %v2540 = vunpack.c.l.b16 %v2476
      %v2541 = vunpack.c.l.b16 %v2477
      %v2542 = vunpack.c.l.b16 %v2478
      %v2543 = vunpack.c.l.b16 %v2479
      %v2544 = vunpack.c.l.b16 %v2480
      %v2545 = vunpack.c.l.b16 %v2481
      %v2546 = vunpack.c.l.b16 %v2482
      %v2547 = vunpack.c.l.b16 %v2483
      %v2548 = vunpack.c.l.b16 %v2484
      %v2549 = vunpack.c.l.b16 %v2485
      %v2550 = vunpack.c.l.b16 %v2486
      %v2551 = vunpack.c.l.b16 %v2487
      %v2552 = vunpack.c.l.b16 %v2488
      %v2553 = vunpack.c.l.b16 %v2489
      %v2554 = vunpack.c.l.b16 %v2490
      %v2555 = vunpack.c.l.b16 %v2491
      %v2556 = vunpack.c.l.b16 %v2492
      %v2557 = vunpack.c.l.b16 %v2493
      %v2558 = vunpack.c.l.b16 %v2494
      %v2559 = vunpack.c.l.b16 %v2495
      %v2560 = vunpack.c.l.b16 %v2496
      %v2561 = vunpack.c.l.b16 %v2497
      %v2562 = vunpack.c.l.b16 %v2498
      %v2563 = vunpack.c.l.b16 %v2499
      %v2564 = vunpack.c.l.b16 %v2500
      %v2565 = vpack.c.b16 %v2534, %v2533
      %v2566 = vpack.c.b16 %v2536, %v2535
      %v2567 = vpack.c.b16 %v2538, %v2537
      %v2568 = vpack.c.b16 %v2540, %v2539
      %v2569 = vpack.c.b16 %v2542, %v2541
      %v2570 = vpack.c.b16 %v2544, %v2543
      %v2571 = vpack.c.b16 %v2546, %v2545
      %v2572 = vpack.c.b16 %v2548, %v2547
      %v2573 = vpack.c.b16 %v2550, %v2549
      %v2574 = vpack.c.b16 %v2552, %v2551
      %v2575 = vpack.c.b16 %v2554, %v2553
      %v2576 = vpack.c.b16 %v2556, %v2555
      %v2577 = vpack.c.b16 %v2558, %v2557
      %v2578 = vpack.c.b16 %v2560, %v2559
      %v2579 = vpack.c.b16 %v2562, %v2561
      %v2580 = vpack.c.b16 %v2564, %v2563
      %2597 = vmatprep.subr.bf16.mxu0 0
      %2598 = vmatpush1.bf16.msra.mxu0 %v2565
      %2599 = vmatprep.subr.bf16.mxu0 0
      %2600 = vmatpush1.bf16.msra.mxu0 %v2566
      %2601 = vmatprep.subr.bf16.mxu0 0
      %2602 = vmatpush1.bf16.msra.mxu0 %v2567
      %2603 = vmatprep.subr.bf16.mxu0 0
      %2604 = vmatpush1.bf16.msra.mxu0 %v2568
      %2605 = vmatprep.subr.bf16.mxu0 0
      %2606 = vmatpush1.bf16.msra.mxu0 %v2569
      %2607 = vmatprep.subr.bf16.mxu0 0
      %2608 = vmatpush1.bf16.msra.mxu0 %v2570
      %2609 = vmatprep.subr.bf16.mxu0 0
      %2610 = vmatpush1.bf16.msra.mxu0 %v2571
      %2611 = vmatprep.subr.bf16.mxu0 0
      %2612 = vmatpush1.bf16.msra.mxu0 %v2572
      %2613 = vmatprep.subr.bf16.mxu0 0
      %2614 = vmatpush1.bf16.msra.mxu0 %v2573
      %2615 = vmatprep.subr.bf16.mxu0 0
      %2616 = vmatpush1.bf16.msra.mxu0 %v2574
      %2617 = vmatprep.subr.bf16.mxu0 0
      %2618 = vmatpush1.bf16.msra.mxu0 %v2575
      %2619 = vmatprep.subr.bf16.mxu0 0
      %2620 = vmatpush1.bf16.msra.mxu0 %v2576
      %2621 = vmatprep.subr.bf16.mxu0 0
      %2622 = vmatpush1.bf16.msra.mxu0 %v2577
      %2623 = vmatprep.subr.bf16.mxu0 0
      %2624 = vmatpush1.bf16.msra.mxu0 %v2578
      %2625 = vmatprep.subr.bf16.mxu0 0
      %2626 = vmatpush1.bf16.msra.mxu0 %v2579
      %2627 = vmatprep.subr.bf16.mxu0 0
      %2628 = vmatpush1.bf16.msra.mxu0 %v2580
      %2629 = vmatprep.mubr.bf16.mxu0 %v2191
      %2630 = vmatmul.mubr.bf16.gmra.mrb[0].mxu0 %v2184
      %v2631 = vpop.f32.mrb[0].mxu0
      %v2632 = vadd.f32 0.0, %v2631
      %v2633 = vpop.f32.mrb[0].mxu0
      %v2634 = vpop.f32.mrb[0].mxu0
      %v2635 = vpop.f32.mrb[0].mxu0
      %2636 = vdwg.mxu0
      %v2637 = vadd.f32 %v2404, %v2632
      %v2638 = vld [vmem:[%s287] sm:$0xfe]
      %v2639 = vld [vmem:[%s287 + $0x8] sm:$0xfe]
      %v2640 = vld [vmem:[%s287 + $0x10] sm:$0x1]
      %v2641 = vld [vmem:[%s287 + $0x18] sm:$0x1]
      %v2642 = vpack.c.bf16 %v2640, %v2638
      %v2643 = vpack.c.bf16 %v2641, %v2639
      %v2645 = vshrl.u32 %v2642, 16
      %v2647 = vshll.u32 %v2642, 16
      %v2649 = vrot.slane %v2647, 1
      %v2650 = vor.u32 %v2645, %v2649
      %v2652 = vshrl.u32 %v2643, 16
      %v2654 = vshll.u32 %v2643, 16
      %v2656 = vrot.slane %v2654, 1
      %v2657 = vor.u32 %v2652, %v2656
      %2660 = vmatprep.subr.bf16.mxu0 0
      %2661 = vmatpush1.bf16.msra.mxu0 %v2565
      %2662 = vmatprep.subr.bf16.mxu0 0
      %2663 = vmatpush1.bf16.msra.mxu0 %v2566
      %2664 = vmatprep.subr.bf16.mxu0 0
      %2665 = vmatpush1.bf16.msra.mxu0 %v2567
      %2666 = vmatprep.subr.bf16.mxu0 0
      %2667 = vmatpush1.bf16.msra.mxu0 %v2568
      %2668 = vmatprep.subr.bf16.mxu0 0
      %2669 = vmatpush1.bf16.msra.mxu0 %v2569
      %2670 = vmatprep.subr.bf16.mxu0 0
      %2671 = vmatpush1.bf16.msra.mxu0 %v2570
      %2672 = vmatprep.subr.bf16.mxu0 0
      %2673 = vmatpush1.bf16.msra.mxu0 %v2571
      %2674 = vmatprep.subr.bf16.mxu0 0
      %2675 = vmatpush1.bf16.msra.mxu0 %v2572
      %2676 = vmatprep.subr.bf16.mxu0 0
      %2677 = vmatpush1.bf16.msra.mxu0 %v2573
      %2678 = vmatprep.subr.bf16.mxu0 0
      %2679 = vmatpush1.bf16.msra.mxu0 %v2574
      %2680 = vmatprep.subr.bf16.mxu0 0
      %2681 = vmatpush1.bf16.msra.mxu0 %v2575
      %2682 = vmatprep.subr.bf16.mxu0 0
      %2683 = vmatpush1.bf16.msra.mxu0 %v2576
      %2684 = vmatprep.subr.bf16.mxu0 0
      %2685 = vmatpush1.bf16.msra.mxu0 %v2577
      %2686 = vmatprep.subr.bf16.mxu0 0
      %2687 = vmatpush1.bf16.msra.mxu0 %v2578
      %2688 = vmatprep.subr.bf16.mxu0 0
      %2689 = vmatpush1.bf16.msra.mxu0 %v2579
      %2690 = vmatprep.subr.bf16.mxu0 0
      %2691 = vmatpush1.bf16.msra.mxu0 %v2580
      %2692 = vmatprep.mubr.bf16.mxu0 %v2657
      %2693 = vmatmul.mubr.bf16.gmra.mrb[0].mxu0 %v2650
      %v2694 = vpop.f32.mrb[0].mxu0
      %v2695 = vadd.f32 0.0, %v2694
      %v2696 = vpop.f32.mrb[0].mxu0
      %v2697 = vpop.f32.mrb[0].mxu0
      %v2698 = vpop.f32.mrb[0].mxu0
      %2699 = vdwg.mxu0
      %v2700 = vadd.f32 %v2467, %v2695
      %v2701 = vld [vmem:[%s4] sm:$0x1]
      %v2703 = vlaneseq
      %v2704 = vshrl.u32 %v2703, 7
      %v2705 = vsub.s32 0, %v2704
      %v2706 = vrot.slane %v2701, %v2705
      %v2708 = vadd.f32 %v2637, %v2706
      %vm2709 = vcmp.gt.f32.partialorder %v2708, 0.0
      %v2710 = vmul.f32 %v2708, 0.2
      %v2711 = vsel %vm2709, %v2708, %v2710
      %2712 = vst [vmem:[#allocation3 + $0x1] sm:$0xff] %v2711
      %v2713 = vld [vmem:[%s4] sm:$0x1]
      %v2715 = vlaneseq
      %v2716 = vshrl.u32 %v2715, 7
      %v2717 = vsub.s32 0, %v2716
      %v2718 = vrot.slane %v2713, %v2717
      %v2720 = vadd.f32 %v2700, %v2718
      %vm2721 = vcmp.gt.f32.partialorder %v2720, 0.0
      %v2722 = vmul.f32 %v2720, 0.2
      %v2723 = vsel %vm2721, %v2720, %v2722
      %2724 = vst [vmem:[%s296 + $0x1] sm:$0xff] %v2723
      %v2725 = vld [vmem:[#allocation3] sm:$0xff]
      %v2726 = vpack.c.bf16 %v2725, %v2725
      %v2727 = vld [vmem:[%s5] sm:$0xf]
      %v2728 = vld [vmem:[%s5 + $0x4] sm:$0xf]
      %v2729 = vld [vmem:[%s5 + $0x8] sm:$0xf]
      %v2730 = vld [vmem:[%s5 + $0xc] sm:$0xf]
      %v2731 = vld [vmem:[%s5 + $0x10] sm:$0xf]
      %v2732 = vld [vmem:[%s5 + $0x14] sm:$0xf]
      %v2733 = vld [vmem:[%s5 + $0x18] sm:$0xf]
      %v2734 = vld [vmem:[%s5 + $0x1c] sm:$0xf]
      %v2735 = vld [vmem:[%s5 + $0x20] sm:$0xf]
      %v2736 = vld [vmem:[%s5 + $0x24] sm:$0xf]
      %v2737 = vld [vmem:[%s5 + $0x28] sm:$0xf]
      %v2738 = vld [vmem:[%s5 + $0x2c] sm:$0xf]
      %v2739 = vld [vmem:[%s5 + $0x30] sm:$0xf]
      %v2740 = vld [vmem:[%s5 + $0x34] sm:$0xf]
      %v2741 = vld [vmem:[%s5 + $0x38] sm:$0xf]
      %v2742 = vld [vmem:[%s5 + $0x3c] sm:$0xf]
      %v2743 = vld [vmem:[%s296] sm:$0xff]
      %v2744 = vpack.c.bf16 %v2743, %v2743
      %s2745 = scalar_lea.vmem %s5, 64
      %v2746 = vld [vmem:[%s2745] sm:$0xf]
      %v2747 = vld [vmem:[%s2745 + $0x4] sm:$0xf]
      %v2748 = vld [vmem:[%s2745 + $0x8] sm:$0xf]
      %v2749 = vld [vmem:[%s2745 + $0xc] sm:$0xf]
      %v2750 = vld [vmem:[%s2745 + $0x10] sm:$0xf]
      %v2751 = vld [vmem:[%s2745 + $0x14] sm:$0xf]
      %v2752 = vld [vmem:[%s2745 + $0x18] sm:$0xf]
      %v2753 = vld [vmem:[%s2745 + $0x1c] sm:$0xf]
      %v2754 = vld [vmem:[%s2745 + $0x20] sm:$0xf]
      %v2755 = vld [vmem:[%s2745 + $0x24] sm:$0xf]
      %v2756 = vld [vmem:[%s2745 + $0x28] sm:$0xf]
      %v2757 = vld [vmem:[%s2745 + $0x2c] sm:$0xf]
      %v2758 = vld [vmem:[%s2745 + $0x30] sm:$0xf]
      %v2759 = vld [vmem:[%s2745 + $0x34] sm:$0xf]
      %v2760 = vld [vmem:[%s2745 + $0x38] sm:$0xf]
      %v2761 = vld [vmem:[%s2745 + $0x3c] sm:$0xf]
      %v2778 = vunpack.c.l.b16 %v2746
      %v2779 = vunpack.c.l.b16 %v2747
      %v2780 = vunpack.c.l.b16 %v2748
      %v2781 = vunpack.c.l.b16 %v2749
      %v2782 = vunpack.c.l.b16 %v2750
      %v2783 = vunpack.c.l.b16 %v2751
      %v2784 = vunpack.c.l.b16 %v2752
      %v2785 = vunpack.c.l.b16 %v2753
      %v2786 = vunpack.c.l.b16 %v2754
      %v2787 = vunpack.c.l.b16 %v2755
      %v2788 = vunpack.c.l.b16 %v2756
      %v2789 = vunpack.c.l.b16 %v2757
      %v2790 = vunpack.c.l.b16 %v2758
      %v2791 = vunpack.c.l.b16 %v2759
      %v2792 = vunpack.c.l.b16 %v2760
      %v2793 = vunpack.c.l.b16 %v2761
      %v2794 = vpack.c.b16 %v2779, %v2778
      %v2795 = vpack.c.b16 %v2781, %v2780
      %v2796 = vpack.c.b16 %v2783, %v2782
      %v2797 = vpack.c.b16 %v2785, %v2784
      %v2798 = vpack.c.b16 %v2787, %v2786
      %v2799 = vpack.c.b16 %v2789, %v2788
      %v2800 = vpack.c.b16 %v2791, %v2790
      %v2801 = vpack.c.b16 %v2793, %v2792
      %2810 = vmatprep.subr.bf16.mxu0 0
      %2811 = vmatpush1.bf16.msra.mxu0 %v2794
      %2812 = vmatprep.subr.bf16.mxu0 0
      %2813 = vmatpush1.bf16.msra.mxu0 %v2795
      %2814 = vmatprep.subr.bf16.mxu0 0
      %2815 = vmatpush1.bf16.msra.mxu0 %v2796
      %2816 = vmatprep.subr.bf16.mxu0 0
      %2817 = vmatpush1.bf16.msra.mxu0 %v2797
      %2818 = vmatprep.subr.bf16.mxu0 0
      %2819 = vmatpush1.bf16.msra.mxu0 %v2798
      %2820 = vmatprep.subr.bf16.mxu0 0
      %2821 = vmatpush1.bf16.msra.mxu0 %v2799
      %2822 = vmatprep.subr.bf16.mxu0 0
      %2823 = vmatpush1.bf16.msra.mxu0 %v2800
      %2824 = vmatprep.subr.bf16.mxu0 0
      %2825 = vmatpush1.bf16.msra.mxu0 %v2801
      %2826 = vmatprep.subr.bf16.mxu0 0
      %2827 = vmatpush1.bf16.msra.mxu0 0
      %2828 = vmatprep.subr.bf16.mxu0 0
      %2829 = vmatpush1.bf16.msra.mxu0 0
      %2830 = vmatprep.subr.bf16.mxu0 0
      %2831 = vmatpush1.bf16.msra.mxu0 0
      %2832 = vmatprep.subr.bf16.mxu0 0
      %2833 = vmatpush1.bf16.msra.mxu0 0
      %2834 = vmatprep.subr.bf16.mxu0 0
      %2835 = vmatpush1.bf16.msra.mxu0 0
      %2836 = vmatprep.subr.bf16.mxu0 0
      %2837 = vmatpush1.bf16.msra.mxu0 0
      %2838 = vmatprep.subr.bf16.mxu0 0
      %2839 = vmatpush1.bf16.msra.mxu0 0
      %2840 = vmatprep.subr.bf16.mxu0 0
      %2841 = vmatpush1.bf16.msra.mxu0 0
      %2842 = vmatprep.mubr.bf16.mxu0 0
      %2843 = vmatmul.mubr.bf16.gmra.mrb[0].mxu0 %v2744
      %v2844 = vpop.f32.mrb[0].mxu0
      %v2845 = vadd.f32 0.0, %v2844
      %v2846 = vpop.f32.mrb[0].mxu0
      %v2847 = vpop.f32.mrb[0].mxu0
      %v2848 = vpop.f32.mrb[0].mxu0
      %2849 = vdwg.mxu0
      %v2866 = vunpack.c.l.b16 %v2727
      %v2867 = vunpack.c.l.b16 %v2728
      %v2868 = vunpack.c.l.b16 %v2729
      %v2869 = vunpack.c.l.b16 %v2730
      %v2870 = vunpack.c.l.b16 %v2731
      %v2871 = vunpack.c.l.b16 %v2732
      %v2872 = vunpack.c.l.b16 %v2733
      %v2873 = vunpack.c.l.b16 %v2734
      %v2874 = vunpack.c.l.b16 %v2735
      %v2875 = vunpack.c.l.b16 %v2736
      %v2876 = vunpack.c.l.b16 %v2737
      %v2877 = vunpack.c.l.b16 %v2738
      %v2878 = vunpack.c.l.b16 %v2739
      %v2879 = vunpack.c.l.b16 %v2740
      %v2880 = vunpack.c.l.b16 %v2741
      %v2881 = vunpack.c.l.b16 %v2742
      %v2882 = vpack.c.b16 %v2867, %v2866
      %v2883 = vpack.c.b16 %v2869, %v2868
      %v2884 = vpack.c.b16 %v2871, %v2870
      %v2885 = vpack.c.b16 %v2873, %v2872
      %v2886 = vpack.c.b16 %v2875, %v2874
      %v2887 = vpack.c.b16 %v2877, %v2876
      %v2888 = vpack.c.b16 %v2879, %v2878
      %v2889 = vpack.c.b16 %v2881, %v2880
      %2898 = vmatprep.subr.bf16.mxu0 0
      %2899 = vmatpush1.bf16.msra.mxu0 %v2882
      %2900 = vmatprep.subr.bf16.mxu0 0
      %2901 = vmatpush1.bf16.msra.mxu0 %v2883
      %2902 = vmatprep.subr.bf16.mxu0 0
      %2903 = vmatpush1.bf16.msra.mxu0 %v2884
      %2904 = vmatprep.subr.bf16.mxu0 0
      %2905 = vmatpush1.bf16.msra.mxu0 %v2885
      %2906 = vmatprep.subr.bf16.mxu0 0
      %2907 = vmatpush1.bf16.msra.mxu0 %v2886
      %2908 = vmatprep.subr.bf16.mxu0 0
      %2909 = vmatpush1.bf16.msra.mxu0 %v2887
      %2910 = vmatprep.subr.bf16.mxu0 0
      %2911 = vmatpush1.bf16.msra.mxu0 %v2888
      %2912 = vmatprep.subr.bf16.mxu0 0
      %2913 = vmatpush1.bf16.msra.mxu0 %v2889
      %2914 = vmatprep.subr.bf16.mxu0 0
      %2915 = vmatpush1.bf16.msra.mxu0 0
      %2916 = vmatprep.subr.bf16.mxu0 0
      %2917 = vmatpush1.bf16.msra.mxu0 0
      %2918 = vmatprep.subr.bf16.mxu0 0
      %2919 = vmatpush1.bf16.msra.mxu0 0
      %2920 = vmatprep.subr.bf16.mxu0 0
      %2921 = vmatpush1.bf16.msra.mxu0 0
      %2922 = vmatprep.subr.bf16.mxu0 0
      %2923 = vmatpush1.bf16.msra.mxu0 0
      %2924 = vmatprep.subr.bf16.mxu0 0
      %2925 = vmatpush1.bf16.msra.mxu0 0
      %2926 = vmatprep.subr.bf16.mxu0 0
      %2927 = vmatpush1.bf16.msra.mxu0 0
      %2928 = vmatprep.subr.bf16.mxu0 0
      %2929 = vmatpush1.bf16.msra.mxu0 0
      %2930 = vmatprep.mubr.bf16.mxu0 0
      %2931 = vmatmul.mubr.bf16.gmra.mrb[0].mxu0 %v2726
      %v2932 = vpop.f32.mrb[0].mxu0
      %v2933 = vadd.f32 %v2845, %v2932
      %v2934 = vpop.f32.mrb[0].mxu0
      %v2935 = vpop.f32.mrb[0].mxu0
      %v2936 = vpop.f32.mrb[0].mxu0
      %2937 = vdwg.mxu0
      %v2938 = vld [vmem:[#allocation3 + $0x1] sm:$0xff]
      %v2939 = vpack.c.bf16 %v2938, %v2938
      %s2940 = scalar_lea.vmem %s5, 128
      %v2941 = vld [vmem:[%s2940] sm:$0xf]
      %v2942 = vld [vmem:[%s2940 + $0x4] sm:$0xf]
      %v2943 = vld [vmem:[%s2940 + $0x8] sm:$0xf]
      %v2944 = vld [vmem:[%s2940 + $0xc] sm:$0xf]
      %v2945 = vld [vmem:[%s2940 + $0x10] sm:$0xf]
      %v2946 = vld [vmem:[%s2940 + $0x14] sm:$0xf]
      %v2947 = vld [vmem:[%s2940 + $0x18] sm:$0xf]
      %v2948 = vld [vmem:[%s2940 + $0x1c] sm:$0xf]
      %v2949 = vld [vmem:[%s2940 + $0x20] sm:$0xf]
      %v2950 = vld [vmem:[%s2940 + $0x24] sm:$0xf]
      %v2951 = vld [vmem:[%s2940 + $0x28] sm:$0xf]
      %v2952 = vld [vmem:[%s2940 + $0x2c] sm:$0xf]
      %v2953 = vld [vmem:[%s2940 + $0x30] sm:$0xf]
      %v2954 = vld [vmem:[%s2940 + $0x34] sm:$0xf]
      %v2955 = vld [vmem:[%s2940 + $0x38] sm:$0xf]
      %v2956 = vld [vmem:[%s2940 + $0x3c] sm:$0xf]
      %v2973 = vunpack.c.l.b16 %v2941
      %v2974 = vunpack.c.l.b16 %v2942
      %v2975 = vunpack.c.l.b16 %v2943
      %v2976 = vunpack.c.l.b16 %v2944
      %v2977 = vunpack.c.l.b16 %v2945
      %v2978 = vunpack.c.l.b16 %v2946
      %v2979 = vunpack.c.l.b16 %v2947
      %v2980 = vunpack.c.l.b16 %v2948
      %v2981 = vunpack.c.l.b16 %v2949
      %v2982 = vunpack.c.l.b16 %v2950
      %v2983 = vunpack.c.l.b16 %v2951
      %v2984 = vunpack.c.l.b16 %v2952
      %v2985 = vunpack.c.l.b16 %v2953
      %v2986 = vunpack.c.l.b16 %v2954
      %v2987 = vunpack.c.l.b16 %v2955
      %v2988 = vunpack.c.l.b16 %v2956
      %v2989 = vpack.c.b16 %v2974, %v2973
      %v2990 = vpack.c.b16 %v2976, %v2975
      %v2991 = vpack.c.b16 %v2978, %v2977
      %v2992 = vpack.c.b16 %v2980, %v2979
      %v2993 = vpack.c.b16 %v2982, %v2981
      %v2994 = vpack.c.b16 %v2984, %v2983
      %v2995 = vpack.c.b16 %v2986, %v2985
      %v2996 = vpack.c.b16 %v2988, %v2987
      %3005 = vmatprep.subr.bf16.mxu0 0
      %3006 = vmatpush1.bf16.msra.mxu0 %v2989
      %3007 = vmatprep.subr.bf16.mxu0 0
      %3008 = vmatpush1.bf16.msra.mxu0 %v2990
      %3009 = vmatprep.subr.bf16.mxu0 0
      %3010 = vmatpush1.bf16.msra.mxu0 %v2991
      %3011 = vmatprep.subr.bf16.mxu0 0
      %3012 = vmatpush1.bf16.msra.mxu0 %v2992
      %3013 = vmatprep.subr.bf16.mxu0 0
      %3014 = vmatpush1.bf16.msra.mxu0 %v2993
      %3015 = vmatprep.subr.bf16.mxu0 0
      %3016 = vmatpush1.bf16.msra.mxu0 %v2994
      %3017 = vmatprep.subr.bf16.mxu0 0
      %3018 = vmatpush1.bf16.msra.mxu0 %v2995
      %3019 = vmatprep.subr.bf16.mxu0 0
      %3020 = vmatpush1.bf16.msra.mxu0 %v2996
      %3021 = vmatprep.subr.bf16.mxu0 0
      %3022 = vmatpush1.bf16.msra.mxu0 0
      %3023 = vmatprep.subr.bf16.mxu0 0
      %3024 = vmatpush1.bf16.msra.mxu0 0
      %3025 = vmatprep.subr.bf16.mxu0 0
      %3026 = vmatpush1.bf16.msra.mxu0 0
      %3027 = vmatprep.subr.bf16.mxu0 0
      %3028 = vmatpush1.bf16.msra.mxu0 0
      %3029 = vmatprep.subr.bf16.mxu0 0
      %3030 = vmatpush1.bf16.msra.mxu0 0
      %3031 = vmatprep.subr.bf16.mxu0 0
      %3032 = vmatpush1.bf16.msra.mxu0 0
      %3033 = vmatprep.subr.bf16.mxu0 0
      %3034 = vmatpush1.bf16.msra.mxu0 0
      %3035 = vmatprep.subr.bf16.mxu0 0
      %3036 = vmatpush1.bf16.msra.mxu0 0
      %3037 = vmatprep.mubr.bf16.mxu0 0
      %3038 = vmatmul.mubr.bf16.gmra.mrb[0].mxu0 %v2939
      %v3039 = vpop.f32.mrb[0].mxu0
      %v3040 = vadd.f32 0.0, %v3039
      %v3041 = vpop.f32.mrb[0].mxu0
      %v3042 = vpop.f32.mrb[0].mxu0
      %v3043 = vpop.f32.mrb[0].mxu0
      %3044 = vdwg.mxu0
      %v3045 = vadd.f32 %v2933, %v3040
      %v3046 = vld [vmem:[%s296 + $0x1] sm:$0xff]
      %v3047 = vpack.c.bf16 %v3046, %v3046
      %s3048 = scalar_lea.vmem %s5, 192
      %v3049 = vld [vmem:[%s3048] sm:$0xf]
      %v3050 = vld [vmem:[%s3048 + $0x4] sm:$0xf]
      %v3051 = vld [vmem:[%s3048 + $0x8] sm:$0xf]
      %v3052 = vld [vmem:[%s3048 + $0xc] sm:$0xf]
      %v3053 = vld [vmem:[%s3048 + $0x10] sm:$0xf]
      %v3054 = vld [vmem:[%s3048 + $0x14] sm:$0xf]
      %v3055 = vld [vmem:[%s3048 + $0x18] sm:$0xf]
      %v3056 = vld [vmem:[%s3048 + $0x1c] sm:$0xf]
      %v3057 = vld [vmem:[%s3048 + $0x20] sm:$0xf]
      %v3058 = vld [vmem:[%s3048 + $0x24] sm:$0xf]
      %v3059 = vld [vmem:[%s3048 + $0x28] sm:$0xf]
      %v3060 = vld [vmem:[%s3048 + $0x2c] sm:$0xf]
      %v3061 = vld [vmem:[%s3048 + $0x30] sm:$0xf]
      %v3062 = vld [vmem:[%s3048 + $0x34] sm:$0xf]
      %v3063 = vld [vmem:[%s3048 + $0x38] sm:$0xf]
      %v3064 = vld [vmem:[%s3048 + $0x3c] sm:$0xf]
      %v3081 = vunpack.c.l.b16 %v3049
      %v3082 = vunpack.c.l.b16 %v3050
      %v3083 = vunpack.c.l.b16 %v3051
      %v3084 = vunpack.c.l.b16 %v3052
      %v3085 = vunpack.c.l.b16 %v3053
      %v3086 = vunpack.c.l.b16 %v3054
      %v3087 = vunpack.c.l.b16 %v3055
      %v3088 = vunpack.c.l.b16 %v3056
      %v3089 = vunpack.c.l.b16 %v3057
      %v3090 = vunpack.c.l.b16 %v3058
      %v3091 = vunpack.c.l.b16 %v3059
      %v3092 = vunpack.c.l.b16 %v3060
      %v3093 = vunpack.c.l.b16 %v3061
      %v3094 = vunpack.c.l.b16 %v3062
      %v3095 = vunpack.c.l.b16 %v3063
      %v3096 = vunpack.c.l.b16 %v3064
      %v3097 = vpack.c.b16 %v3082, %v3081
      %v3098 = vpack.c.b16 %v3084, %v3083
      %v3099 = vpack.c.b16 %v3086, %v3085
      %v3100 = vpack.c.b16 %v3088, %v3087
      %v3101 = vpack.c.b16 %v3090, %v3089
      %v3102 = vpack.c.b16 %v3092, %v3091
      %v3103 = vpack.c.b16 %v3094, %v3093
      %v3104 = vpack.c.b16 %v3096, %v3095
      %3113 = vmatprep.subr.bf16.mxu0 0
      %3114 = vmatpush1.bf16.msra.mxu0 %v3097
      %3115 = vmatprep.subr.bf16.mxu0 0
      %3116 = vmatpush1.bf16.msra.mxu0 %v3098
      %3117 = vmatprep.subr.bf16.mxu0 0
      %3118 = vmatpush1.bf16.msra.mxu0 %v3099
      %3119 = vmatprep.subr.bf16.mxu0 0
      %3120 = vmatpush1.bf16.msra.mxu0 %v3100
      %3121 = vmatprep.subr.bf16.mxu0 0
      %3122 = vmatpush1.bf16.msra.mxu0 %v3101
      %3123 = vmatprep.subr.bf16.mxu0 0
      %3124 = vmatpush1.bf16.msra.mxu0 %v3102
      %3125 = vmatprep.subr.bf16.mxu0 0
      %3126 = vmatpush1.bf16.msra.mxu0 %v3103
      %3127 = vmatprep.subr.bf16.mxu0 0
      %3128 = vmatpush1.bf16.msra.mxu0 %v3104
      %3129 = vmatprep.subr.bf16.mxu0 0
      %3130 = vmatpush1.bf16.msra.mxu0 0
      %3131 = vmatprep.subr.bf16.mxu0 0
      %3132 = vmatpush1.bf16.msra.mxu0 0
      %3133 = vmatprep.subr.bf16.mxu0 0
      %3134 = vmatpush1.bf16.msra.mxu0 0
      %3135 = vmatprep.subr.bf16.mxu0 0
      %3136 = vmatpush1.bf16.msra.mxu0 0
      %3137 = vmatprep.subr.bf16.mxu0 0
      %3138 = vmatpush1.bf16.msra.mxu0 0
      %3139 = vmatprep.subr.bf16.mxu0 0
      %3140 = vmatpush1.bf16.msra.mxu0 0
      %3141 = vmatprep.subr.bf16.mxu0 0
      %3142 = vmatpush1.bf16.msra.mxu0 0
      %3143 = vmatprep.subr.bf16.mxu0 0
      %3144 = vmatpush1.bf16.msra.mxu0 0
      %3145 = vmatprep.mubr.bf16.mxu0 0
      %3146 = vmatmul.mubr.bf16.gmra.mrb[0].mxu0 %v3047
      %v3147 = vpop.f32.mrb[0].mxu0
      %v3148 = vadd.f32 0.0, %v3147
      %v3149 = vpop.f32.mrb[0].mxu0
      %v3150 = vpop.f32.mrb[0].mxu0
      %v3151 = vpop.f32.mrb[0].mxu0
      %3152 = vdwg.mxu0
      %v3153 = vadd.f32 %v3045, %v3148
      %v3154 = vld [vmem:[#allocation3 + $0x2] sm:$0xff]
      %v3155 = vpack.c.bf16 %v3154, %v3154
      %s3156 = scalar_lea.vmem %s5, 256
      %v3157 = vld [vmem:[%s3156] sm:$0xf]
      %v3158 = vld [vmem:[%s3156 + $0x4] sm:$0xf]
      %v3159 = vld [vmem:[%s3156 + $0x8] sm:$0xf]
      %v3160 = vld [vmem:[%s3156 + $0xc] sm:$0xf]
      %v3161 = vld [vmem:[%s3156 + $0x10] sm:$0xf]
      %v3162 = vld [vmem:[%s3156 + $0x14] sm:$0xf]
      %v3163 = vld [vmem:[%s3156 + $0x18] sm:$0xf]
      %v3164 = vld [vmem:[%s3156 + $0x1c] sm:$0xf]
      %v3165 = vld [vmem:[%s3156 + $0x20] sm:$0xf]
      %v3166 = vld [vmem:[%s3156 + $0x24] sm:$0xf]
      %v3167 = vld [vmem:[%s3156 + $0x28] sm:$0xf]
      %v3168 = vld [vmem:[%s3156 + $0x2c] sm:$0xf]
      %v3169 = vld [vmem:[%s3156 + $0x30] sm:$0xf]
      %v3170 = vld [vmem:[%s3156 + $0x34] sm:$0xf]
      %v3171 = vld [vmem:[%s3156 + $0x38] sm:$0xf]
      %v3172 = vld [vmem:[%s3156 + $0x3c] sm:$0xf]
      %v3189 = vunpack.c.l.b16 %v3157
      %v3190 = vunpack.c.l.b16 %v3158
      %v3191 = vunpack.c.l.b16 %v3159
      %v3192 = vunpack.c.l.b16 %v3160
      %v3193 = vunpack.c.l.b16 %v3161
      %v3194 = vunpack.c.l.b16 %v3162
      %v3195 = vunpack.c.l.b16 %v3163
      %v3196 = vunpack.c.l.b16 %v3164
      %v3197 = vunpack.c.l.b16 %v3165
      %v3198 = vunpack.c.l.b16 %v3166
      %v3199 = vunpack.c.l.b16 %v3167
      %v3200 = vunpack.c.l.b16 %v3168
      %v3201 = vunpack.c.l.b16 %v3169
      %v3202 = vunpack.c.l.b16 %v3170
      %v3203 = vunpack.c.l.b16 %v3171
      %v3204 = vunpack.c.l.b16 %v3172
      %v3205 = vpack.c.b16 %v3190, %v3189
      %v3206 = vpack.c.b16 %v3192, %v3191
      %v3207 = vpack.c.b16 %v3194, %v3193
      %v3208 = vpack.c.b16 %v3196, %v3195
      %v3209 = vpack.c.b16 %v3198, %v3197
      %v3210 = vpack.c.b16 %v3200, %v3199
      %v3211 = vpack.c.b16 %v3202, %v3201
      %v3212 = vpack.c.b16 %v3204, %v3203
      %3221 = vmatprep.subr.bf16.mxu0 0
      %3222 = vmatpush1.bf16.msra.mxu0 %v3205
      %3223 = vmatprep.subr.bf16.mxu0 0
      %3224 = vmatpush1.bf16.msra.mxu0 %v3206
      %3225 = vmatprep.subr.bf16.mxu0 0
      %3226 = vmatpush1.bf16.msra.mxu0 %v3207
      %3227 = vmatprep.subr.bf16.mxu0 0
      %3228 = vmatpush1.bf16.msra.mxu0 %v3208
      %3229 = vmatprep.subr.bf16.mxu0 0
      %3230 = vmatpush1.bf16.msra.mxu0 %v3209
      %3231 = vmatprep.subr.bf16.mxu0 0
      %3232 = vmatpush1.bf16.msra.mxu0 %v3210
      %3233 = vmatprep.subr.bf16.mxu0 0
      %3234 = vmatpush1.bf16.msra.mxu0 %v3211
      %3235 = vmatprep.subr.bf16.mxu0 0
      %3236 = vmatpush1.bf16.msra.mxu0 %v3212
      %3237 = vmatprep.subr.bf16.mxu0 0
      %3238 = vmatpush1.bf16.msra.mxu0 0
      %3239 = vmatprep.subr.bf16.mxu0 0
      %3240 = vmatpush1.bf16.msra.mxu0 0
      %3241 = vmatprep.subr.bf16.mxu0 0
      %3242 = vmatpush1.bf16.msra.mxu0 0
      %3243 = vmatprep.subr.bf16.mxu0 0
      %3244 = vmatpush1.bf16.msra.mxu0 0
      %3245 = vmatprep.subr.bf16.mxu0 0
      %3246 = vmatpush1.bf16.msra.mxu0 0
      %3247 = vmatprep.subr.bf16.mxu0 0
      %3248 = vmatpush1.bf16.msra.mxu0 0
      %3249 = vmatprep.subr.bf16.mxu0 0
      %3250 = vmatpush1.bf16.msra.mxu0 0
      %3251 = vmatprep.subr.bf16.mxu0 0
      %3252 = vmatpush1.bf16.msra.mxu0 0
      %3253 = vmatprep.mubr.bf16.mxu0 0
      %3254 = vmatmul.mubr.bf16.gmra.mrb[0].mxu0 %v3155
      %v3255 = vpop.f32.mrb[0].mxu0
      %v3256 = vadd.f32 0.0, %v3255
      %v3257 = vpop.f32.mrb[0].mxu0
      %v3258 = vpop.f32.mrb[0].mxu0
      %v3259 = vpop.f32.mrb[0].mxu0
      %3260 = vdwg.mxu0
      %v3261 = vadd.f32 %v3153, %v3256
      %v3262 = vld [vmem:[%s6] sm:$0x1]
      %v3264 = vlaneseq
      %v3265 = vshrl.u32 %v3264, 7
      %v3266 = vsub.s32 0, %v3265
      %v3267 = vrot.slane %v3262, %v3266
      %v3269 = vadd.f32 %v3261, %v3267
      %vm3270 = vcmask 523264
      %3271 = vst.msk [vmem:[%s276] sm:$0xff] %vm3270, %v3269
      %p3272 = scmp.lt.s32.totalorder %s18, 1
      %s3273 = scalar_select %p3272, %s18, 1
      %s3274 = smul.addr %s3273, 8
      %s3275 = scalar_lea.vmem %s7, %s3274
      // Predicated region
      $region49: #{res_prior_encode_net.1} parent=47 // pred_check
        %p3276 = pneg %p188
      $region50: #{res_prior_encode_net.1} parent=47 // pred_check_branch
        %3278 = sbr.rel (%p3276) target = $region52
      $region51: #{res_prior_encode_net.1} parent=47 // pred_region
        _
      $region52: #{res_prior_encode_net.1} parent=47 // pred_fallthru
        _
    $region48: #{res_prior_encode_net.1} parent=5 // pred_fallthru
      _
    %p3279 = scmp.le.s32.totalorder 2, %s13
    // Predicated region
    $region53: #{res_prior_encode_net.1} parent=5 // pred_check
      %p3280 = pneg %p3279
    $region54: #{res_prior_encode_net.1} parent=5 // pred_check_branch
      %3282 = sbr.rel (%p3280) target = $region56
    $region55: #{res_prior_encode_net.1} parent=5 // pred_region
      %s3283 = ssub.s32 %s13, 2
      // Predicated region
      $region57: #{res_prior_encode_net.1} parent=55 // pred_check
        %p3284 = pneg %p194
      $region58: #{res_prior_encode_net.1} parent=55 // pred_check_branch
        %3286 = sbr.rel (%p3284) target = $region60
      $region59: #{res_prior_encode_net.1} parent=55 // pred_region
        %p3287 = scmp.lt.s32.totalorder %s19, 1
        %s3288 = scalar_select %p3287, %s19, 1
        %s3289 = smul.addr %s3288, 8
        %s3290 = scalar_lea.vmem %s7, %s3289
      $region60: #{res_prior_encode_net.1} parent=55 // pred_fallthru
        _
    $region56: #{res_prior_encode_net.1} parent=5 // pred_fallthru
      _
  $region6: #{res_prior_encode_net.1} parent=0 // loop_footer
    %s17 = sadd.s32 1, %s13
  $region7: #{res_prior_encode_net.1} parent=0 // loop_footer_branch
    %12 = sbr.rel target = $region3
  $region8: #{res_prior_encode_net.1} parent=0 // loop_exit
    _

</llo_original>
